<compile_context>
chip_gen: v5e
topology: v5e:2x2
jax: 0.10.0
libtpu: 0.0.40
codegen_flags: <defaults>
</compile_context>

<pallas_src>
import functools

import jax
import jax.numpy as jnp
from jax import lax
from jax.experimental import pallas as pl
from jax.experimental.pallas import tpu as pltpu

_LANE = 128   # TPU lane width — channel padding target
_HALO = 8     # left halo columns (sublane-aligned, so interior stores are aligned)


def _round_up(x, m):
    return (x + m - 1) // m * m


# ----------------------------- fused block kernel ---------------------------

def _res2net_block_kernel(x_ref, w1d_ref, b1d_ref, w2_ref, b2_ref, w3_ref,
                          b3_ref, o_ref, pad_ref, slab_ref, cat_ref, *,
                          scales, width, hs, ws, cpad, has_down):
    hw = hs * ws
    x = x_ref[0]                                              # (hw, cpad)

    # conv1 (+BN) and the downsample conv (+BN) fused into ONE 1x1 matmul.
    y = jnp.dot(x, w1d_ref[...], preferred_element_type=jnp.float32)
    y = y + b1d_ref[...]
    y1 = jnp.maximum(y[:, :cpad], 0.0)                        # conv1 -> ReLU
    identity = y[:, cpad:2 * cpad] if has_down else x         # residual path

    # scale 0 passes straight through to the concat buffer.
    cat_ref[:, 0:width] = y1[:, 0:width]

    # zero the halo buffer once; only its interior is (re)written below.
    pad_ref[...] = jnp.zeros_like(pad_ref)

    prev = None
    for s in range(1, scales):
        chunk = y1[:, s * width:(s + 1) * width]              # (hw, width)
        inp = chunk if s == 1 else chunk + prev
        # SAME 3x3 conv + BN + ReLU as a single im2col matmul.
        pad_ref[1:hs + 1, _HALO:_HALO + ws, :] = inp.reshape(hs, ws, width)
        for dy in range(3):
            for dx in range(3):
                c0 = _HALO - 1 + dx
                tap = pad_ref[dy:dy + hs, c0:c0 + ws, :]
                t = 3 * dy + dx
                slab_ref[:, t * width:(t + 1) * width] = tap.reshape(hw, width)
        o = jnp.dot(slab_ref[...], w2_ref[s - 1],
                    preferred_element_type=jnp.float32)
        o = jnp.maximum(o + b2_ref[s - 1], 0.0)
        cat_ref[:, s * width:(s + 1) * width] = o
        prev = o

    # conv3 (1x1) + BN + residual add + ReLU, lane-dense (cpad-wide) output.
    out = jnp.dot(cat_ref[...], w3_ref[...],
                  preferred_element_type=jnp.float32)
    o_ref[0] = jnp.maximum(out + b3_ref[...] + identity, 0.0)


def res2net_block(x, h, w, cfg, arrs):
    """One Res2Net bottleneck block.

    x: (N, h*w, cpad) channel-padded, spatially flattened activations.
    Returns (y, h_out, w_out) with y: (N, h_out*w_out, cpad).
    """
    n, _, cpad = x.shape
    stride, scales = cfg['stride'], cfg['scales']
    width, cout, has_down = cfg['width'], cfg['cout'], cfg['has_down']

    if stride > 1:  # 1x1-conv stride == spatial subsampling of the input
        x = x.reshape(n, h, w, cpad)[:, ::stride, ::stride, :]
        h, w = x.shape[1], x.shape[2]
        x = x.reshape(n, h * w, cpad)
    hw = h * w

    kernel = functools.partial(
        _res2net_block_kernel, scales=scales, width=width, hs=h, ws=w,
        cpad=cpad, has_down=has_down)

    y = pl.pallas_call(
        kernel,
        out_shape=jax.ShapeDtypeStruct((n, hw, cpad), jnp.float32),
        grid=(n,),
        in_specs=[
            pl.BlockSpec((1, hw, cpad), lambda i: (i, 0, 0)),
            pl.BlockSpec(arrs['w1d'].shape, lambda i: (0, 0)),
            pl.BlockSpec(arrs['b1d'].shape, lambda i: (0, 0)),
            pl.BlockSpec(arrs['w2'].shape, lambda i: (0, 0, 0)),
            pl.BlockSpec(arrs['b2'].shape, lambda i: (0, 0, 0)),
            pl.BlockSpec(arrs['w3'].shape, lambda i: (0, 0)),
            pl.BlockSpec(arrs['b3'].shape, lambda i: (0, 0)),
        ],
        out_specs=pl.BlockSpec((1, hw, cpad), lambda i: (i, 0, 0)),
        scratch_shapes=[
            pltpu.VMEM((h + 2, w + 2 * _HALO, width), jnp.float32),  # 3x3 halo
            pltpu.VMEM((hw, 9 * width), jnp.float32),                # im2col slab
            pltpu.VMEM((hw, cout), jnp.float32),                     # scale concat
        ],
        compiler_params=pltpu.CompilerParams(
            dimension_semantics=("parallel",)),
    )(x, arrs['w1d'], arrs['b1d'], arrs['w2'], arrs['b2'],
      arrs['w3'], arrs['b3'])
    return y, h, w


def build_encoder_fn(cfgs, cpad, out_planes):
    """Returns fwd(x_nhwc, arrs_list) -> (N, H', W', out_planes)."""
    def fwd(x_nhwc, arrs_list):
        n, h, w, cin = x_nhwc.shape
        x = jnp.zeros((n, h * w, cpad), jnp.float32)
        x = x.at[:, :, :cin].set(x_nhwc.reshape(n, h * w, cin))
        for cfg, arrs in zip(cfgs, arrs_list):
            x, h, w = res2net_block(x, h, w, cfg, arrs)
        return x[:, :, :out_planes].reshape(n, h, w, out_planes)
    return fwd


# --------------------------- parameter construction ------------------------

def _fold_bn(w_conv, gamma, beta, mean, var, eps=1e-5):
    scale = gamma / jnp.sqrt(var + eps)          # per-output-channel
    return w_conv * scale, beta - mean * scale   # conv has no bias


def _bn_params(key, c):
    k1, k2, k3, k4 = jax.random.split(key, 4)
    gamma = 1.0 + 0.1 * jax.random.normal(k1, (c,), jnp.float32)
    beta = 0.05 * jax.random.normal(k2, (c,), jnp.float32)
    mean = 0.02 * jax.random.normal(k3, (c,), jnp.float32)
    var = 1.0 + 0.1 * jnp.abs(jax.random.normal(k4, (c,), jnp.float32))
    return gamma, beta, mean, var


def init_block(key, in_planes, out_planes, stride, scales):
    """Raw (BN-folded, unpadded) block parameters — also used by the reference."""
    assert out_planes % scales == 0
    width = out_planes // scales
    keys = iter(jax.random.split(key, 2 * scales + 8))

    def conv_w(shape, fan_in):
        return jax.random.normal(next(keys), shape, jnp.float32) / jnp.sqrt(fan_in)

    p = {'stride': stride, 'scales': scales}
    p['w1'], p['b1'] = _fold_bn(conv_w((in_planes, out_planes), in_planes),
                                *_bn_params(next(keys), out_planes))
    conv2 = []
    for _ in range(scales - 1):
        w = conv_w((3, 3, width, width), 9 * width)
        conv2.append(_fold_bn(w, *_bn_params(next(keys), width)))
    p['conv2'] = conv2
    p['w3'], p['b3'] = _fold_bn(conv_w((out_planes, out_planes), out_planes),
                                *_bn_params(next(keys), out_planes))
    if stride != 1 or in_planes != out_planes:
        p['wd'], p['bd'] = _fold_bn(conv_w((in_planes, out_planes), in_planes),
                                    *_bn_params(next(keys), out_planes))
    else:
        p['wd'], p['bd'] = None, None
    return p


def prepare_block(p, cpad):
    """Pad/fuse raw params into the lane-dense layout used by the kernel."""
    in_planes, out_planes = p['w1'].shape
    scales = p['scales']
    width = out_planes // scales
    has_down = p['wd'] is not None

    def pad2(w, rows, cols):
        out = jnp.zeros((rows, cols), jnp.float32)
        return out.at[:w.shape[0], :w.shape[1]].set(w)

    w1p = pad2(p['w1'], cpad, cpad)
    b1p = pad2(p['b1'].reshape(1, -1), 1, cpad)
    if has_down:
        wdp = pad2(p['wd'], cpad, cpad)
        bdp = pad2(p['bd'].reshape(1, -1), 1, cpad)
        w1d = jnp.concatenate([w1p, wdp], axis=1)     # conv1 | downsample fused
        b1d = jnp.concatenate([b1p, bdp], axis=1)
    else:
        w1d, b1d = w1p, b1p

    w2 = jnp.stack([w.reshape(9 * width, width) for (w, _) in p['conv2']])
    b2 = jnp.stack([b.reshape(1, width) for (_, b) in p['conv2']])
    w3 = pad2(p['w3'], out_planes, cpad)
    b3 = pad2(p['b3'].reshape(1, -1), 1, cpad)

    cfg = dict(stride=p['stride'], scales=scales, width=width,
               cout=out_planes, has_down=has_down)
    arrs = dict(w1d=w1d, b1d=b1d, w2=w2, b2=b2, w3=w3, b3=b3)
    return cfg, arrs


# ---------------------------- pure-JAX reference ---------------------------

def _block_forward_ref(x, p):
    stride, scales = p['stride'], p['scales']
    xin = x[:, ::stride, ::stride, :] if stride > 1 else x
    y = jax.nn.relu(jnp.einsum('nhwc,cd->nhwd', xin, p['w1']) + p['b1'])
    width = y.shape[-1] // scales
    chunks = [y[..., s * width:(s + 1) * width] for s in range(scales)]
    ys = [chunks[0]]
    for s in range(1, scales):
        w2, b2 = p['conv2'][s - 1]
        inp = chunks[s] if s == 1 else chunks[s] + ys[-1]
        c = lax.conv_general_dilated(inp, w2, (1, 1), 'SAME',
                                     dimension_numbers=('NHWC', 'HWIO', 'NHWC'))
        ys.append(jax.nn.relu(c + b2))
    y = jnp.concatenate(ys, axis=-1)
    y = jnp.einsum('nhwc,cd->nhwd', y, p['w3']) + p['b3']
    if p['wd'] is not None:
        identity = jnp.einsum('nhwc,cd->nhwd', xin, p['wd']) + p['bd']
    else:
        identity = x
    return jax.nn.relu(y + identity)


# ----------------------------------- main -----------------------------------

if __name__ == "__main__":
    in_planes, out_planes, stride, scales, n_blocks = 16, 32, 2, 4, 3
    N, H, W = 2, 16, 16

    key = jax.random.PRNGKey(0)
    kx, kp = jax.random.split(key)
    x_nchw = jax.random.normal(kx, (N, in_planes, H, W), jnp.float32)  # PyTorch NCHW
    x_nhwc = jnp.transpose(x_nchw, (0, 2, 3, 1))                       # -> NHWC

    pkeys = jax.random.split(kp, n_blocks)
    raw_blocks = [init_block(pkeys[0], in_planes, out_planes, stride, scales)]
    for i in range(1, n_blocks):
        raw_blocks.append(init_block(pkeys[i], out_planes, out_planes, 1, scales))

    cpad = _round_up(max(in_planes, out_planes), _LANE)
    prepared = [prepare_block(p, cpad) for p in raw_blocks]
    cfgs = [c for c, _ in prepared]
    arrs_list = [a for _, a in prepared]

    fwd = jax.jit(build_encoder_fn(cfgs, cpad, out_planes))
    y = jax.block_until_ready(fwd(x_nhwc, arrs_list))

    # correctness check against a pure-JAX reference (default precision on both)
    yr = x_nhwc
    for p in raw_blocks:
        yr = _block_forward_ref(yr, p)
    yr = jax.block_until_ready(yr)

    assert y.shape == (N, H // stride, W // stride, out_planes), y.shape
    err = float(jnp.max(jnp.abs(y - yr)))
    scale_ref = float(jnp.max(jnp.abs(yr)))
    assert err <= 5e-2 * scale_ref + 5e-2, f"max abs err {err} (ref max {scale_ref})"

    y_nchw = jnp.transpose(y, (0, 3, 1, 2))  # back to PyTorch NCHW (2, 32, 8, 8)
    jax.block_until_ready(y_nchw)
    print("KERNEL_OK")
</pallas_src>

<mosaic_0001>
module attributes {stable_mosaic.version = 11 : i64} {
  func.func @_res2net_block_kernel(%arg0: i32, %arg1: memref<1x64x128xf32, #tpu.memory_space<vmem>>, %arg2: memref<128x256xf32, #tpu.memory_space<vmem>>, %arg3: memref<1x256xf32, #tpu.memory_space<vmem>>, %arg4: memref<3x72x8xf32, #tpu.memory_space<vmem>>, %arg5: memref<3x1x8xf32, #tpu.memory_space<vmem>>, %arg6: memref<32x128xf32, #tpu.memory_space<vmem>>, %arg7: memref<1x128xf32, #tpu.memory_space<vmem>>, %arg8: memref<1x64x128xf32, #tpu.memory_space<vmem>>, %arg9: memref<10x24x8xf32, #tpu.memory_space<vmem>>, %arg10: memref<64x72xf32, #tpu.memory_space<vmem>>, %arg11: memref<64x32xf32, #tpu.memory_space<vmem>>) attributes {dimension_semantics = [#tpu.dimension_semantics<parallel>], iteration_bounds = array<i64: 2>, scalar_prefetch = 0 : i64, scratch_operands = 3 : i64, tpu.core_type = #tpu.core_type<tc>, window_params = [{transform_indices = @transform_0, window_bounds = array<i64: 1, 64, 128>}, {pipeline_mode = #tpu.pipeline_mode<synchronous>, transform_indices = @transform_1, window_bounds = array<i64: 128, 256>}, {pipeline_mode = #tpu.pipeline_mode<synchronous>, transform_indices = @transform_2, window_bounds = array<i64: 1, 256>}, {pipeline_mode = #tpu.pipeline_mode<synchronous>, transform_indices = @transform_3, window_bounds = array<i64: 3, 72, 8>}, {pipeline_mode = #tpu.pipeline_mode<synchronous>, transform_indices = @transform_4, window_bounds = array<i64: 3, 1, 8>}, {pipeline_mode = #tpu.pipeline_mode<synchronous>, transform_indices = @transform_5, window_bounds = array<i64: 32, 128>}, {pipeline_mode = #tpu.pipeline_mode<synchronous>, transform_indices = @transform_6, window_bounds = array<i64: 1, 128>}, {transform_indices = @transform_7, window_bounds = array<i64: 1, 64, 128>}]} {
    %c0 = arith.constant 0 : index
    %c0_0 = arith.constant 0 : index
    %c0_1 = arith.constant 0 : index
    %0 = vector.load %arg1[%c0, %c0_0, %c0_1] : memref<1x64x128xf32, #tpu.memory_space<vmem>>, vector<1x64x128xf32>
    %1 = vector.shape_cast %0 : vector<1x64x128xf32> to vector<64x128xf32>
    %c0_2 = arith.constant 0 : index
    %c0_3 = arith.constant 0 : index
    %2 = vector.load %arg2[%c0_2, %c0_3] : memref<128x256xf32, #tpu.memory_space<vmem>>, vector<128x256xf32>
    %cst = arith.constant dense<0.000000e+00> : vector<64x256xf32>
    %3 = tpu.matmul %1, %2, %cst {dimension_numbers = #tpu.dot_dimension_numbers<[1], [0], [0], [1], [0, 0, 1, 1], [], []>} : vector<64x128xf32>, vector<128x256xf32>, vector<64x256xf32> -> vector<64x256xf32>
    %c0_4 = arith.constant 0 : index
    %c0_5 = arith.constant 0 : index
    %4 = vector.load %arg3[%c0_4, %c0_5] : memref<1x256xf32, #tpu.memory_space<vmem>>, vector<1x256xf32>
    %5 = vector.broadcast %4 : vector<1x256xf32> to vector<64x256xf32>
    %6 = arith.addf %3, %5 : vector<64x256xf32>
    %7 = vector.extract_strided_slice %6 {offsets = [0, 0], sizes = [64, 128], strides = [1, 1]} : vector<64x256xf32> to vector<64x128xf32>
    %cst_6 = arith.constant 0.000000e+00 : f32
    %8 = vector.broadcast %cst_6 : f32 to vector<64x128xf32>
    %9 = arith.maximumf %7, %8 : vector<64x128xf32>
    %10 = vector.extract_strided_slice %6 {offsets = [0, 128], sizes = [64, 128], strides = [1, 1]} : vector<64x256xf32> to vector<64x128xf32>
    %11 = vector.extract_strided_slice %9 {offsets = [0, 0], sizes = [64, 8], strides = [1, 1]} : vector<64x128xf32> to vector<64x8xf32>
    %c0_7 = arith.constant 0 : index
    %c0_8 = arith.constant 0 : index
    %12 = vector.load %arg11[%c0_7, %c0_8] : memref<64x32xf32, #tpu.memory_space<vmem>>, vector<64x8xf32>
    tpu.vector_store %arg11[%c0_7, %c0_8], %11 {strides = array<i32>} : memref<64x32xf32, #tpu.memory_space<vmem>>, vector<64x8xf32>,
    %cst_9 = arith.constant 0.000000e+00 : f32
    %13 = vector.broadcast %cst_9 : f32 to vector<10x24x8xf32>
    %c0_10 = arith.constant 0 : index
    %c0_11 = arith.constant 0 : index
    %c0_12 = arith.constant 0 : index
    %14 = vector.load %arg9[%c0_10, %c0_11, %c0_12] : memref<10x24x8xf32, #tpu.memory_space<vmem>>, vector<10x24x8xf32>
    tpu.vector_store %arg9[%c0_10, %c0_11, %c0_12], %13 {strides = array<i32>} : memref<10x24x8xf32, #tpu.memory_space<vmem>>, vector<10x24x8xf32>,
    %15 = vector.extract_strided_slice %9 {offsets = [0, 8], sizes = [64, 8], strides = [1, 1]} : vector<64x128xf32> to vector<64x8xf32>
    %16 = vector.shape_cast %15 : vector<64x8xf32> to vector<8x8x8xf32>
    %c1 = arith.constant 1 : index
    %c8 = arith.constant 8 : index
    %c0_13 = arith.constant 0 : index
    %17 = vector.load %arg9[%c1, %c8, %c0_13] : memref<10x24x8xf32, #tpu.memory_space<vmem>>, vector<8x8x8xf32>
    tpu.vector_store %arg9[%c1, %c8, %c0_13], %16 {strides = array<i32>} : memref<10x24x8xf32, #tpu.memory_space<vmem>>, vector<8x8x8xf32>,
    %c0_14 = arith.constant 0 : index
    %c7 = arith.constant 7 : index
    %c0_15 = arith.constant 0 : index
    %18 = vector.load %arg9[%c0_14, %c7, %c0_15] : memref<10x24x8xf32, #tpu.memory_space<vmem>>, vector<8x8x8xf32>
    %19 = vector.shape_cast %18 : vector<8x8x8xf32> to vector<64x8xf32>
    %c0_16 = arith.constant 0 : index
    %c0_17 = arith.constant 0 : index
    %20 = vector.load %arg10[%c0_16, %c0_17] : memref<64x72xf32, #tpu.memory_space<vmem>>, vector<64x8xf32>
    tpu.vector_store %arg10[%c0_16, %c0_17], %19 {strides = array<i32>} : memref<64x72xf32, #tpu.memory_space<vmem>>, vector<64x8xf32>,
    %c0_18 = arith.constant 0 : index
    %c8_19 = arith.constant 8 : index
    %c0_20 = arith.constant 0 : index
    %21 = vector.load %arg9[%c0_18, %c8_19, %c0_20] : memref<10x24x8xf32, #tpu.memory_space<vmem>>, vector<8x8x8xf32>
    %22 = vector.shape_cast %21 : vector<8x8x8xf32> to vector<64x8xf32>
    %c0_21 = arith.constant 0 : index
    %c8_22 = arith.constant 8 : index
    %23 = vector.load %arg10[%c0_21, %c8_22] : memref<64x72xf32, #tpu.memory_space<vmem>>, vector<64x8xf32>
    tpu.vector_store %arg10[%c0_21, %c8_22], %22 {strides = array<i32>} : memref<64x72xf32, #tpu.memory_space<vmem>>, vector<64x8xf32>,
    %c0_23 = arith.constant 0 : index
    %c9 = arith.constant 9 : index
    %c0_24 = arith.constant 0 : index
    %24 = vector.load %arg9[%c0_23, %c9, %c0_24] : memref<10x24x8xf32, #tpu.memory_space<vmem>>, vector<8x8x8xf32>
    %25 = vector.shape_cast %24 : vector<8x8x8xf32> to vector<64x8xf32>
    %c0_25 = arith.constant 0 : index
    %c16 = arith.constant 16 : index
    %26 = vector.load %arg10[%c0_25, %c16] : memref<64x72xf32, #tpu.memory_space<vmem>>, vector<64x8xf32>
    tpu.vector_store %arg10[%c0_25, %c16], %25 {strides = array<i32>} : memref<64x72xf32, #tpu.memory_space<vmem>>, vector<64x8xf32>,
    %c1_26 = arith.constant 1 : index
    %c7_27 = arith.constant 7 : index
    %c0_28 = arith.constant 0 : index
    %27 = vector.load %arg9[%c1_26, %c7_27, %c0_28] : memref<10x24x8xf32, #tpu.memory_space<vmem>>, vector<8x8x8xf32>
    %28 = vector.shape_cast %27 : vector<8x8x8xf32> to vector<64x8xf32>
    %c0_29 = arith.constant 0 : index
    %c24 = arith.constant 24 : index
    %29 = vector.load %arg10[%c0_29, %c24] : memref<64x72xf32, #tpu.memory_space<vmem>>, vector<64x8xf32>
    tpu.vector_store %arg10[%c0_29, %c24], %28 {strides = array<i32>} : memref<64x72xf32, #tpu.memory_space<vmem>>, vector<64x8xf32>,
    %c1_30 = arith.constant 1 : index
    %c8_31 = arith.constant 8 : index
    %c0_32 = arith.constant 0 : index
    %30 = vector.load %arg9[%c1_30, %c8_31, %c0_32] : memref<10x24x8xf32, #tpu.memory_space<vmem>>, vector<8x8x8xf32>
    %31 = vector.shape_cast %30 : vector<8x8x8xf32> to vector<64x8xf32>
    %c0_33 = arith.constant 0 : index
    %c32 = arith.constant 32 : index
    %32 = vector.load %arg10[%c0_33, %c32] : memref<64x72xf32, #tpu.memory_space<vmem>>, vector<64x8xf32>
    tpu.vector_store %arg10[%c0_33, %c32], %31 {strides = array<i32>} : memref<64x72xf32, #tpu.memory_space<vmem>>, vector<64x8xf32>,
    %c1_34 = arith.constant 1 : index
    %c9_35 = arith.constant 9 : index
    %c0_36 = arith.constant 0 : index
    %33 = vector.load %arg9[%c1_34, %c9_35, %c0_36] : memref<10x24x8xf32, #tpu.memory_space<vmem>>, vector<8x8x8xf32>
    %34 = vector.shape_cast %33 : vector<8x8x8xf32> to vector<64x8xf32>
    %c0_37 = arith.constant 0 : index
    %c40 = arith.constant 40 : index
    %35 = vector.load %arg10[%c0_37, %c40] : memref<64x72xf32, #tpu.memory_space<vmem>>, vector<64x8xf32>
    tpu.vector_store %arg10[%c0_37, %c40], %34 {strides = array<i32>} : memref<64x72xf32, #tpu.memory_space<vmem>>, vector<64x8xf32>,
    %c2 = arith.constant 2 : index
    %c7_38 = arith.constant 7 : index
    %c0_39 = arith.constant 0 : index
    %36 = vector.load %arg9[%c2, %c7_38, %c0_39] : memref<10x24x8xf32, #tpu.memory_space<vmem>>, vector<8x8x8xf32>
    %37 = vector.shape_cast %36 : vector<8x8x8xf32> to vector<64x8xf32>
    %c0_40 = arith.constant 0 : index
    %c48 = arith.constant 48 : index
    %38 = vector.load %arg10[%c0_40, %c48] : memref<64x72xf32, #tpu.memory_space<vmem>>, vector<64x8xf32>
    tpu.vector_store %arg10[%c0_40, %c48], %37 {strides = array<i32>} : memref<64x72xf32, #tpu.memory_space<vmem>>, vector<64x8xf32>,
    %c2_41 = arith.constant 2 : index
    %c8_42 = arith.constant 8 : index
    %c0_43 = arith.constant 0 : index
    %39 = vector.load %arg9[%c2_41, %c8_42, %c0_43] : memref<10x24x8xf32, #tpu.memory_space<vmem>>, vector<8x8x8xf32>
    %40 = vector.shape_cast %39 : vector<8x8x8xf32> to vector<64x8xf32>
    %c0_44 = arith.constant 0 : index
    %c56 = arith.constant 56 : index
    %41 = vector.load %arg10[%c0_44, %c56] : memref<64x72xf32, #tpu.memory_space<vmem>>, vector<64x8xf32>
    tpu.vector_store %arg10[%c0_44, %c56], %40 {strides = array<i32>} : memref<64x72xf32, #tpu.memory_space<vmem>>, vector<64x8xf32>,
    %c2_45 = arith.constant 2 : index
    %c9_46 = arith.constant 9 : index
    %c0_47 = arith.constant 0 : index
    %42 = vector.load %arg9[%c2_45, %c9_46, %c0_47] : memref<10x24x8xf32, #tpu.memory_space<vmem>>, vector<8x8x8xf32>
    %43 = vector.shape_cast %42 : vector<8x8x8xf32> to vector<64x8xf32>
    %c0_48 = arith.constant 0 : index
    %c64 = arith.constant 64 : index
    %44 = vector.load %arg10[%c0_48, %c64] : memref<64x72xf32, #tpu.memory_space<vmem>>, vector<64x8xf32>
    tpu.vector_store %arg10[%c0_48, %c64], %43 {strides = array<i32>} : memref<64x72xf32, #tpu.memory_space<vmem>>, vector<64x8xf32>,
    %c0_49 = arith.constant 0 : index
    %c0_50 = arith.constant 0 : index
    %45 = vector.load %arg10[%c0_49, %c0_50] : memref<64x72xf32, #tpu.memory_space<vmem>>, vector<64x72xf32>
    %c0_51 = arith.constant 0 : index
    %c0_52 = arith.constant 0 : index
    %c0_53 = arith.constant 0 : index
    %46 = vector.load %arg4[%c0_51, %c0_52, %c0_53] : memref<3x72x8xf32, #tpu.memory_space<vmem>>, vector<1x72x8xf32>
    %47 = vector.shape_cast %46 : vector<1x72x8xf32> to vector<72x8xf32>
    %cst_54 = arith.constant dense<0.000000e+00> : vector<64x8xf32>
    %48 = tpu.matmul %45, %47, %cst_54 {dimension_numbers = #tpu.dot_dimension_numbers<[1], [0], [0], [1], [0, 0, 1, 1], [], []>} : vector<64x72xf32>, vector<72x8xf32>, vector<64x8xf32> -> vector<64x8xf32>
    %c0_55 = arith.constant 0 : index
    %c0_56 = arith.constant 0 : index
    %c0_57 = arith.constant 0 : index
    %49 = vector.load %arg5[%c0_55, %c0_56, %c0_57] : memref<3x1x8xf32, #tpu.memory_space<vmem>>, vector<1x1x8xf32>
    %50 = vector.shape_cast %49 : vector<1x1x8xf32> to vector<1x8xf32>
    %51 = vector.broadcast %50 : vector<1x8xf32> to vector<64x8xf32>
    %52 = arith.addf %48, %51 : vector<64x8xf32>
    %cst_58 = arith.constant 0.000000e+00 : f32
    %53 = vector.broadcast %cst_58 : f32 to vector<64x8xf32>
    %54 = arith.maximumf %52, %53 : vector<64x8xf32>
    %c0_59 = arith.constant 0 : index
    %c8_60 = arith.constant 8 : index
    %55 = vector.load %arg11[%c0_59, %c8_60] : memref<64x32xf32, #tpu.memory_space<vmem>>, vector<64x8xf32>
    tpu.vector_store %arg11[%c0_59, %c8_60], %54 {strides = array<i32>} : memref<64x32xf32, #tpu.memory_space<vmem>>, vector<64x8xf32>,
    %56 = vector.extract_strided_slice %9 {offsets = [0, 16], sizes = [64, 8], strides = [1, 1]} : vector<64x128xf32> to vector<64x8xf32>
    %57 = arith.addf %56, %54 : vector<64x8xf32>
    %58 = vector.shape_cast %57 : vector<64x8xf32> to vector<8x8x8xf32>
    %c1_61 = arith.constant 1 : index
    %c8_62 = arith.constant 8 : index
    %c0_63 = arith.constant 0 : index
    %59 = vector.load %arg9[%c1_61, %c8_62, %c0_63] : memref<10x24x8xf32, #tpu.memory_space<vmem>>, vector<8x8x8xf32>
    tpu.vector_store %arg9[%c1_61, %c8_62, %c0_63], %58 {strides = array<i32>} : memref<10x24x8xf32, #tpu.memory_space<vmem>>, vector<8x8x8xf32>,
    %c0_64 = arith.constant 0 : index
    %c7_65 = arith.constant 7 : index
    %c0_66 = arith.constant 0 : index
    %60 = vector.load %arg9[%c0_64, %c7_65, %c0_66] : memref<10x24x8xf32, #tpu.memory_space<vmem>>, vector<8x8x8xf32>
    %61 = vector.shape_cast %60 : vector<8x8x8xf32> to vector<64x8xf32>
    %c0_67 = arith.constant 0 : index
    %c0_68 = arith.constant 0 : index
    %62 = vector.load %arg10[%c0_67, %c0_68] : memref<64x72xf32, #tpu.memory_space<vmem>>, vector<64x8xf32>
    tpu.vector_store %arg10[%c0_67, %c0_68], %61 {strides = array<i32>} : memref<64x72xf32, #tpu.memory_space<vmem>>, vector<64x8xf32>,
    %c0_69 = arith.constant 0 : index
    %c8_70 = arith.constant 8 : index
    %c0_71 = arith.constant 0 : index
    %63 = vector.load %arg9[%c0_69, %c8_70, %c0_71] : memref<10x24x8xf32, #tpu.memory_space<vmem>>, vector<8x8x8xf32>
    %64 = vector.shape_cast %63 : vector<8x8x8xf32> to vector<64x8xf32>
    %c0_72 = arith.constant 0 : index
    %c8_73 = arith.constant 8 : index
    %65 = vector.load %arg10[%c0_72, %c8_73] : memref<64x72xf32, #tpu.memory_space<vmem>>, vector<64x8xf32>
    tpu.vector_store %arg10[%c0_72, %c8_73], %64 {strides = array<i32>} : memref<64x72xf32, #tpu.memory_space<vmem>>, vector<64x8xf32>,
    %c0_74 = arith.constant 0 : index
    %c9_75 = arith.constant 9 : index
    %c0_76 = arith.constant 0 : index
    %66 = vector.load %arg9[%c0_74, %c9_75, %c0_76] : memref<10x24x8xf32, #tpu.memory_space<vmem>>, vector<8x8x8xf32>
    %67 = vector.shape_cast %66 : vector<8x8x8xf32> to vector<64x8xf32>
    %c0_77 = arith.constant 0 : index
    %c16_78 = arith.constant 16 : index
    %68 = vector.load %arg10[%c0_77, %c16_78] : memref<64x72xf32, #tpu.memory_space<vmem>>, vector<64x8xf32>
    tpu.vector_store %arg10[%c0_77, %c16_78], %67 {strides = array<i32>} : memref<64x72xf32, #tpu.memory_space<vmem>>, vector<64x8xf32>,
    %c1_79 = arith.constant 1 : index
    %c7_80 = arith.constant 7 : index
    %c0_81 = arith.constant 0 : index
    %69 = vector.load %arg9[%c1_79, %c7_80, %c0_81] : memref<10x24x8xf32, #tpu.memory_space<vmem>>, vector<8x8x8xf32>
    %70 = vector.shape_cast %69 : vector<8x8x8xf32> to vector<64x8xf32>
    %c0_82 = arith.constant 0 : index
    %c24_83 = arith.constant 24 : index
    %71 = vector.load %arg10[%c0_82, %c24_83] : memref<64x72xf32, #tpu.memory_space<vmem>>, vector<64x8xf32>
    tpu.vector_store %arg10[%c0_82, %c24_83], %70 {strides = array<i32>} : memref<64x72xf32, #tpu.memory_space<vmem>>, vector<64x8xf32>,
    %c1_84 = arith.constant 1 : index
    %c8_85 = arith.constant 8 : index
    %c0_86 = arith.constant 0 : index
    %72 = vector.load %arg9[%c1_84, %c8_85, %c0_86] : memref<10x24x8xf32, #tpu.memory_space<vmem>>, vector<8x8x8xf32>
    %73 = vector.shape_cast %72 : vector<8x8x8xf32> to vector<64x8xf32>
    %c0_87 = arith.constant 0 : index
    %c32_88 = arith.constant 32 : index
    %74 = vector.load %arg10[%c0_87, %c32_88] : memref<64x72xf32, #tpu.memory_space<vmem>>, vector<64x8xf32>
    tpu.vector_store %arg10[%c0_87, %c32_88], %73 {strides = array<i32>} : memref<64x72xf32, #tpu.memory_space<vmem>>, vector<64x8xf32>,
    %c1_89 = arith.constant 1 : index
    %c9_90 = arith.constant 9 : index
    %c0_91 = arith.constant 0 : index
    %75 = vector.load %arg9[%c1_89, %c9_90, %c0_91] : memref<10x24x8xf32, #tpu.memory_space<vmem>>, vector<8x8x8xf32>
    %76 = vector.shape_cast %75 : vector<8x8x8xf32> to vector<64x8xf32>
    %c0_92 = arith.constant 0 : index
    %c40_93 = arith.constant 40 : index
    %77 = vector.load %arg10[%c0_92, %c40_93] : memref<64x72xf32, #tpu.memory_space<vmem>>, vector<64x8xf32>
    tpu.vector_store %arg10[%c0_92, %c40_93], %76 {strides = array<i32>} : memref<64x72xf32, #tpu.memory_space<vmem>>, vector<64x8xf32>,
    %c2_94 = arith.constant 2 : index
    %c7_95 = arith.constant 7 : index
    %c0_96 = arith.constant 0 : index
    %78 = vector.load %arg9[%c2_94, %c7_95, %c0_96] : memref<10x24x8xf32, #tpu.memory_space<vmem>>, vector<8x8x8xf32>
    %79 = vector.shape_cast %78 : vector<8x8x8xf32> to vector<64x8xf32>
    %c0_97 = arith.constant 0 : index
    %c48_98 = arith.constant 48 : index
    %80 = vector.load %arg10[%c0_97, %c48_98] : memref<64x72xf32, #tpu.memory_space<vmem>>, vector<64x8xf32>
    tpu.vector_store %arg10[%c0_97, %c48_98], %79 {strides = array<i32>} : memref<64x72xf32, #tpu.memory_space<vmem>>, vector<64x8xf32>,
    %c2_99 = arith.constant 2 : index
    %c8_100 = arith.constant 8 : index
    %c0_101 = arith.constant 0 : index
    %81 = vector.load %arg9[%c2_99, %c8_100, %c0_101] : memref<10x24x8xf32, #tpu.memory_space<vmem>>, vector<8x8x8xf32>
    %82 = vector.shape_cast %81 : vector<8x8x8xf32> to vector<64x8xf32>
    %c0_102 = arith.constant 0 : index
    %c56_103 = arith.constant 56 : index
    %83 = vector.load %arg10[%c0_102, %c56_103] : memref<64x72xf32, #tpu.memory_space<vmem>>, vector<64x8xf32>
    tpu.vector_store %arg10[%c0_102, %c56_103], %82 {strides = array<i32>} : memref<64x72xf32, #tpu.memory_space<vmem>>, vector<64x8xf32>,
    %c2_104 = arith.constant 2 : index
    %c9_105 = arith.constant 9 : index
    %c0_106 = arith.constant 0 : index
    %84 = vector.load %arg9[%c2_104, %c9_105, %c0_106] : memref<10x24x8xf32, #tpu.memory_space<vmem>>, vector<8x8x8xf32>
    %85 = vector.shape_cast %84 : vector<8x8x8xf32> to vector<64x8xf32>
    %c0_107 = arith.constant 0 : index
    %c64_108 = arith.constant 64 : index
    %86 = vector.load %arg10[%c0_107, %c64_108] : memref<64x72xf32, #tpu.memory_space<vmem>>, vector<64x8xf32>
    tpu.vector_store %arg10[%c0_107, %c64_108], %85 {strides = array<i32>} : memref<64x72xf32, #tpu.memory_space<vmem>>, vector<64x8xf32>,
    %c0_109 = arith.constant 0 : index
    %c0_110 = arith.constant 0 : index
    %87 = vector.load %arg10[%c0_109, %c0_110] : memref<64x72xf32, #tpu.memory_space<vmem>>, vector<64x72xf32>
    %c1_111 = arith.constant 1 : index
    %c0_112 = arith.constant 0 : index
    %c0_113 = arith.constant 0 : index
    %88 = vector.load %arg4[%c1_111, %c0_112, %c0_113] : memref<3x72x8xf32, #tpu.memory_space<vmem>>, vector<1x72x8xf32>
    %89 = vector.shape_cast %88 : vector<1x72x8xf32> to vector<72x8xf32>
    %cst_114 = arith.constant dense<0.000000e+00> : vector<64x8xf32>
    %90 = tpu.matmul %87, %89, %cst_114 {dimension_numbers = #tpu.dot_dimension_numbers<[1], [0], [0], [1], [0, 0, 1, 1], [], []>} : vector<64x72xf32>, vector<72x8xf32>, vector<64x8xf32> -> vector<64x8xf32>
    %c1_115 = arith.constant 1 : index
    %c0_116 = arith.constant 0 : index
    %c0_117 = arith.constant 0 : index
    %91 = vector.load %arg5[%c1_115, %c0_116, %c0_117] : memref<3x1x8xf32, #tpu.memory_space<vmem>>, vector<1x1x8xf32>
    %92 = vector.shape_cast %91 : vector<1x1x8xf32> to vector<1x8xf32>
    %93 = vector.broadcast %92 : vector<1x8xf32> to vector<64x8xf32>
    %94 = arith.addf %90, %93 : vector<64x8xf32>
    %cst_118 = arith.constant 0.000000e+00 : f32
    %95 = vector.broadcast %cst_118 : f32 to vector<64x8xf32>
    %96 = arith.maximumf %94, %95 : vector<64x8xf32>
    %c0_119 = arith.constant 0 : index
    %c16_120 = arith.constant 16 : index
    %97 = vector.load %arg11[%c0_119, %c16_120] : memref<64x32xf32, #tpu.memory_space<vmem>>, vector<64x8xf32>
    tpu.vector_store %arg11[%c0_119, %c16_120], %96 {strides = array<i32>} : memref<64x32xf32, #tpu.memory_space<vmem>>, vector<64x8xf32>,
    %98 = vector.extract_strided_slice %9 {offsets = [0, 24], sizes = [64, 8], strides = [1, 1]} : vector<64x128xf32> to vector<64x8xf32>
    %99 = arith.addf %98, %96 : vector<64x8xf32>
    %100 = vector.shape_cast %99 : vector<64x8xf32> to vector<8x8x8xf32>
    %c1_121 = arith.constant 1 : index
    %c8_122 = arith.constant 8 : index
    %c0_123 = arith.constant 0 : index
    %101 = vector.load %arg9[%c1_121, %c8_122, %c0_123] : memref<10x24x8xf32, #tpu.memory_space<vmem>>, vector<8x8x8xf32>
    tpu.vector_store %arg9[%c1_121, %c8_122, %c0_123], %100 {strides = array<i32>} : memref<10x24x8xf32, #tpu.memory_space<vmem>>, vector<8x8x8xf32>,
    %c0_124 = arith.constant 0 : index
    %c7_125 = arith.constant 7 : index
    %c0_126 = arith.constant 0 : index
    %102 = vector.load %arg9[%c0_124, %c7_125, %c0_126] : memref<10x24x8xf32, #tpu.memory_space<vmem>>, vector<8x8x8xf32>
    %103 = vector.shape_cast %102 : vector<8x8x8xf32> to vector<64x8xf32>
    %c0_127 = arith.constant 0 : index
    %c0_128 = arith.constant 0 : index
    %104 = vector.load %arg10[%c0_127, %c0_128] : memref<64x72xf32, #tpu.memory_space<vmem>>, vector<64x8xf32>
    tpu.vector_store %arg10[%c0_127, %c0_128], %103 {strides = array<i32>} : memref<64x72xf32, #tpu.memory_space<vmem>>, vector<64x8xf32>,
    %c0_129 = arith.constant 0 : index
    %c8_130 = arith.constant 8 : index
    %c0_131 = arith.constant 0 : index
    %105 = vector.load %arg9[%c0_129, %c8_130, %c0_131] : memref<10x24x8xf32, #tpu.memory_space<vmem>>, vector<8x8x8xf32>
    %106 = vector.shape_cast %105 : vector<8x8x8xf32> to vector<64x8xf32>
    %c0_132 = arith.constant 0 : index
    %c8_133 = arith.constant 8 : index
    %107 = vector.load %arg10[%c0_132, %c8_133] : memref<64x72xf32, #tpu.memory_space<vmem>>, vector<64x8xf32>
    tpu.vector_store %arg10[%c0_132, %c8_133], %106 {strides = array<i32>} : memref<64x72xf32, #tpu.memory_space<vmem>>, vector<64x8xf32>,
    %c0_134 = arith.constant 0 : index
    %c9_135 = arith.constant 9 : index
    %c0_136 = arith.constant 0 : index
    %108 = vector.load %arg9[%c0_134, %c9_135, %c0_136] : memref<10x24x8xf32, #tpu.memory_space<vmem>>, vector<8x8x8xf32>
    %109 = vector.shape_cast %108 : vector<8x8x8xf32> to vector<64x8xf32>
    %c0_137 = arith.constant 0 : index
    %c16_138 = arith.constant 16 : index
    %110 = vector.load %arg10[%c0_137, %c16_138] : memref<64x72xf32, #tpu.memory_space<vmem>>, vector<64x8xf32>
    tpu.vector_store %arg10[%c0_137, %c16_138], %109 {strides = array<i32>} : memref<64x72xf32, #tpu.memory_space<vmem>>, vector<64x8xf32>,
    %c1_139 = arith.constant 1 : index
    %c7_140 = arith.constant 7 : index
    %c0_141 = arith.constant 0 : index
    %111 = vector.load %arg9[%c1_139, %c7_140, %c0_141] : memref<10x24x8xf32, #tpu.memory_space<vmem>>, vector<8x8x8xf32>
    %112 = vector.shape_cast %111 : vector<8x8x8xf32> to vector<64x8xf32>
    %c0_142 = arith.constant 0 : index
    %c24_143 = arith.constant 24 : index
    %113 = vector.load %arg10[%c0_142, %c24_143] : memref<64x72xf32, #tpu.memory_space<vmem>>, vector<64x8xf32>
    tpu.vector_store %arg10[%c0_142, %c24_143], %112 {strides = array<i32>} : memref<64x72xf32, #tpu.memory_space<vmem>>, vector<64x8xf32>,
    %c1_144 = arith.constant 1 : index
    %c8_145 = arith.constant 8 : index
    %c0_146 = arith.constant 0 : index
    %114 = vector.load %arg9[%c1_144, %c8_145, %c0_146] : memref<10x24x8xf32, #tpu.memory_space<vmem>>, vector<8x8x8xf32>
    %115 = vector.shape_cast %114 : vector<8x8x8xf32> to vector<64x8xf32>
    %c0_147 = arith.constant 0 : index
    %c32_148 = arith.constant 32 : index
    %116 = vector.load %arg10[%c0_147, %c32_148] : memref<64x72xf32, #tpu.memory_space<vmem>>, vector<64x8xf32>
    tpu.vector_store %arg10[%c0_147, %c32_148], %115 {strides = array<i32>} : memref<64x72xf32, #tpu.memory_space<vmem>>, vector<64x8xf32>,
    %c1_149 = arith.constant 1 : index
    %c9_150 = arith.constant 9 : index
    %c0_151 = arith.constant 0 : index
    %117 = vector.load %arg9[%c1_149, %c9_150, %c0_151] : memref<10x24x8xf32, #tpu.memory_space<vmem>>, vector<8x8x8xf32>
    %118 = vector.shape_cast %117 : vector<8x8x8xf32> to vector<64x8xf32>
    %c0_152 = arith.constant 0 : index
    %c40_153 = arith.constant 40 : index
    %119 = vector.load %arg10[%c0_152, %c40_153] : memref<64x72xf32, #tpu.memory_space<vmem>>, vector<64x8xf32>
    tpu.vector_store %arg10[%c0_152, %c40_153], %118 {strides = array<i32>} : memref<64x72xf32, #tpu.memory_space<vmem>>, vector<64x8xf32>,
    %c2_154 = arith.constant 2 : index
    %c7_155 = arith.constant 7 : index
    %c0_156 = arith.constant 0 : index
    %120 = vector.load %arg9[%c2_154, %c7_155, %c0_156] : memref<10x24x8xf32, #tpu.memory_space<vmem>>, vector<8x8x8xf32>
    %121 = vector.shape_cast %120 : vector<8x8x8xf32> to vector<64x8xf32>
    %c0_157 = arith.constant 0 : index
    %c48_158 = arith.constant 48 : index
    %122 = vector.load %arg10[%c0_157, %c48_158] : memref<64x72xf32, #tpu.memory_space<vmem>>, vector<64x8xf32>
    tpu.vector_store %arg10[%c0_157, %c48_158], %121 {strides = array<i32>} : memref<64x72xf32, #tpu.memory_space<vmem>>, vector<64x8xf32>,
    %c2_159 = arith.constant 2 : index
    %c8_160 = arith.constant 8 : index
    %c0_161 = arith.constant 0 : index
    %123 = vector.load %arg9[%c2_159, %c8_160, %c0_161] : memref<10x24x8xf32, #tpu.memory_space<vmem>>, vector<8x8x8xf32>
    %124 = vector.shape_cast %123 : vector<8x8x8xf32> to vector<64x8xf32>
    %c0_162 = arith.constant 0 : index
    %c56_163 = arith.constant 56 : index
    %125 = vector.load %arg10[%c0_162, %c56_163] : memref<64x72xf32, #tpu.memory_space<vmem>>, vector<64x8xf32>
    tpu.vector_store %arg10[%c0_162, %c56_163], %124 {strides = array<i32>} : memref<64x72xf32, #tpu.memory_space<vmem>>, vector<64x8xf32>,
    %c2_164 = arith.constant 2 : index
    %c9_165 = arith.constant 9 : index
    %c0_166 = arith.constant 0 : index
    %126 = vector.load %arg9[%c2_164, %c9_165, %c0_166] : memref<10x24x8xf32, #tpu.memory_space<vmem>>, vector<8x8x8xf32>
    %127 = vector.shape_cast %126 : vector<8x8x8xf32> to vector<64x8xf32>
    %c0_167 = arith.constant 0 : index
    %c64_168 = arith.constant 64 : index
    %128 = vector.load %arg10[%c0_167, %c64_168] : memref<64x72xf32, #tpu.memory_space<vmem>>, vector<64x8xf32>
    tpu.vector_store %arg10[%c0_167, %c64_168], %127 {strides = array<i32>} : memref<64x72xf32, #tpu.memory_space<vmem>>, vector<64x8xf32>,
    %c0_169 = arith.constant 0 : index
    %c0_170 = arith.constant 0 : index
    %129 = vector.load %arg10[%c0_169, %c0_170] : memref<64x72xf32, #tpu.memory_space<vmem>>, vector<64x72xf32>
    %c2_171 = arith.constant 2 : index
    %c0_172 = arith.constant 0 : index
    %c0_173 = arith.constant 0 : index
    %130 = vector.load %arg4[%c2_171, %c0_172, %c0_173] : memref<3x72x8xf32, #tpu.memory_space<vmem>>, vector<1x72x8xf32>
    %131 = vector.shape_cast %130 : vector<1x72x8xf32> to vector<72x8xf32>
    %cst_174 = arith.constant dense<0.000000e+00> : vector<64x8xf32>
    %132 = tpu.matmul %129, %131, %cst_174 {dimension_numbers = #tpu.dot_dimension_numbers<[1], [0], [0], [1], [0, 0, 1, 1], [], []>} : vector<64x72xf32>, vector<72x8xf32>, vector<64x8xf32> -> vector<64x8xf32>
    %c2_175 = arith.constant 2 : index
    %c0_176 = arith.constant 0 : index
    %c0_177 = arith.constant 0 : index
    %133 = vector.load %arg5[%c2_175, %c0_176, %c0_177] : memref<3x1x8xf32, #tpu.memory_space<vmem>>, vector<1x1x8xf32>
    %134 = vector.shape_cast %133 : vector<1x1x8xf32> to vector<1x8xf32>
    %135 = vector.broadcast %134 : vector<1x8xf32> to vector<64x8xf32>
    %136 = arith.addf %132, %135 : vector<64x8xf32>
    %cst_178 = arith.constant 0.000000e+00 : f32
    %137 = vector.broadcast %cst_178 : f32 to vector<64x8xf32>
    %138 = arith.maximumf %136, %137 : vector<64x8xf32>
    %c0_179 = arith.constant 0 : index
    %c24_180 = arith.constant 24 : index
    %139 = vector.load %arg11[%c0_179, %c24_180] : memref<64x32xf32, #tpu.memory_space<vmem>>, vector<64x8xf32>
    tpu.vector_store %arg11[%c0_179, %c24_180], %138 {strides = array<i32>} : memref<64x32xf32, #tpu.memory_space<vmem>>, vector<64x8xf32>,
    %c0_181 = arith.constant 0 : index
    %c0_182 = arith.constant 0 : index
    %140 = vector.load %arg11[%c0_181, %c0_182] : memref<64x32xf32, #tpu.memory_space<vmem>>, vector<64x32xf32>
    %c0_183 = arith.constant 0 : index
    %c0_184 = arith.constant 0 : index
    %141 = vector.load %arg6[%c0_183, %c0_184] : memref<32x128xf32, #tpu.memory_space<vmem>>, vector<32x128xf32>
    %cst_185 = arith.constant dense<0.000000e+00> : vector<64x128xf32>
    %142 = tpu.matmul %140, %141, %cst_185 {dimension_numbers = #tpu.dot_dimension_numbers<[1], [0], [0], [1], [0, 0, 1, 1], [], []>} : vector<64x32xf32>, vector<32x128xf32>, vector<64x128xf32> -> vector<64x128xf32>
    %c0_186 = arith.constant 0 : index
    %c0_187 = arith.constant 0 : index
    %143 = vector.load %arg7[%c0_186, %c0_187] : memref<1x128xf32, #tpu.memory_space<vmem>>, vector<1x128xf32>
    %144 = vector.broadcast %143 : vector<1x128xf32> to vector<64x128xf32>
    %145 = arith.addf %142, %144 : vector<64x128xf32>
    %146 = arith.addf %145, %10 : vector<64x128xf32>
    %cst_188 = arith.constant 0.000000e+00 : f32
    %147 = vector.broadcast %cst_188 : f32 to vector<64x128xf32>
    %148 = arith.maximumf %146, %147 : vector<64x128xf32>
    %c0_189 = arith.constant 0 : index
    %c0_190 = arith.constant 0 : index
    %c0_191 = arith.constant 0 : index
    %149 = vector.load %arg8[%c0_189, %c0_190, %c0_191] : memref<1x64x128xf32, #tpu.memory_space<vmem>>, vector<1x64x128xf32>
    %150 = vector.shape_cast %149 : vector<1x64x128xf32> to vector<64x128xf32>
    %151 = vector.shape_cast %148 : vector<64x128xf32> to vector<1x64x128xf32>
    tpu.vector_store %arg8[%c0_189, %c0_190, %c0_191], %151 {strides = array<i32>} : memref<1x64x128xf32, #tpu.memory_space<vmem>>, vector<1x64x128xf32>,
    return
  }
  func.func @transform_0(%arg0: i32) -> (i32, i32, i32) {
    %c0_i32 = arith.constant 0 : i32
    %c0_i32_0 = arith.constant 0 : i32
    %c0_i32_1 = arith.constant 0 : i32
    return %arg0, %c0_i32, %c0_i32_0 : i32, i32, i32
  }
  func.func @transform_1(%arg0: i32) -> (i32, i32) {
    %c0_i32 = arith.constant 0 : i32
    %c0_i32_0 = arith.constant 0 : i32
    %c0_i32_1 = arith.constant 0 : i32
    return %c0_i32, %c0_i32_0 : i32, i32
  }
  func.func @transform_2(%arg0: i32) -> (i32, i32) {
    %c0_i32 = arith.constant 0 : i32
    %c0_i32_0 = arith.constant 0 : i32
    %c0_i32_1 = arith.constant 0 : i32
    return %c0_i32, %c0_i32_0 : i32, i32
  }
  func.func @transform_3(%arg0: i32) -> (i32, i32, i32) {
    %c0_i32 = arith.constant 0 : i32
    %c0_i32_0 = arith.constant 0 : i32
    %c0_i32_1 = arith.constant 0 : i32
    %c0_i32_2 = arith.constant 0 : i32
    return %c0_i32, %c0_i32_0, %c0_i32_1 : i32, i32, i32
  }
  func.func @transform_4(%arg0: i32) -> (i32, i32, i32) {
    %c0_i32 = arith.constant 0 : i32
    %c0_i32_0 = arith.constant 0 : i32
    %c0_i32_1 = arith.constant 0 : i32
    %c0_i32_2 = arith.constant 0 : i32
    return %c0_i32, %c0_i32_0, %c0_i32_1 : i32, i32, i32
  }
  func.func @transform_5(%arg0: i32) -> (i32, i32) {
    %c0_i32 = arith.constant 0 : i32
    %c0_i32_0 = arith.constant 0 : i32
    %c0_i32_1 = arith.constant 0 : i32
    return %c0_i32, %c0_i32_0 : i32, i32
  }
  func.func @transform_6(%arg0: i32) -> (i32, i32) {
    %c0_i32 = arith.constant 0 : i32
    %c0_i32_0 = arith.constant 0 : i32
    %c0_i32_1 = arith.constant 0 : i32
    return %c0_i32, %c0_i32_0 : i32, i32
  }
  func.func @transform_7(%arg0: i32) -> (i32, i32, i32) {
    %c0_i32 = arith.constant 0 : i32
    %c0_i32_0 = arith.constant 0 : i32
    %c0_i32_1 = arith.constant 0 : i32
    return %arg0, %c0_i32, %c0_i32_0 : i32, i32, i32
  }
}

module attributes {stable_mosaic.version = 11 : i64} {
  func.func @_res2net_block_kernel(%arg0: i32, %arg1: memref<1x64x128xf32, #tpu.memory_space<vmem>>, %arg2: memref<128x128xf32, #tpu.memory_space<vmem>>, %arg3: memref<1x128xf32, #tpu.memory_space<vmem>>, %arg4: memref<3x72x8xf32, #tpu.memory_space<vmem>>, %arg5: memref<3x1x8xf32, #tpu.memory_space<vmem>>, %arg6: memref<32x128xf32, #tpu.memory_space<vmem>>, %arg7: memref<1x128xf32, #tpu.memory_space<vmem>>, %arg8: memref<1x64x128xf32, #tpu.memory_space<vmem>>, %arg9: memref<10x24x8xf32, #tpu.memory_space<vmem>>, %arg10: memref<64x72xf32, #tpu.memory_space<vmem>>, %arg11: memref<64x32xf32, #tpu.memory_space<vmem>>) attributes {dimension_semantics = [#tpu.dimension_semantics<parallel>], iteration_bounds = array<i64: 2>, scalar_prefetch = 0 : i64, scratch_operands = 3 : i64, tpu.core_type = #tpu.core_type<tc>, window_params = [{transform_indices = @transform_0, window_bounds = array<i64: 1, 64, 128>}, {pipeline_mode = #tpu.pipeline_mode<synchronous>, transform_indices = @transform_1, window_bounds = array<i64: 128, 128>}, {pipeline_mode = #tpu.pipeline_mode<synchronous>, transform_indices = @transform_2, window_bounds = array<i64: 1, 128>}, {pipeline_mode = #tpu.pipeline_mode<synchronous>, transform_indices = @transform_3, window_bounds = array<i64: 3, 72, 8>}, {pipeline_mode = #tpu.pipeline_mode<synchronous>, transform_indices = @transform_4, window_bounds = array<i64: 3, 1, 8>}, {pipeline_mode = #tpu.pipeline_mode<synchronous>, transform_indices = @transform_5, window_bounds = array<i64: 32, 128>}, {pipeline_mode = #tpu.pipeline_mode<synchronous>, transform_indices = @transform_6, window_bounds = array<i64: 1, 128>}, {transform_indices = @transform_7, window_bounds = array<i64: 1, 64, 128>}]} {
    %c0 = arith.constant 0 : index
    %c0_0 = arith.constant 0 : index
    %c0_1 = arith.constant 0 : index
    %0 = vector.load %arg1[%c0, %c0_0, %c0_1] : memref<1x64x128xf32, #tpu.memory_space<vmem>>, vector<1x64x128xf32>
    %1 = vector.shape_cast %0 : vector<1x64x128xf32> to vector<64x128xf32>
    %c0_2 = arith.constant 0 : index
    %c0_3 = arith.constant 0 : index
    %2 = vector.load %arg2[%c0_2, %c0_3] : memref<128x128xf32, #tpu.memory_space<vmem>>, vector<128x128xf32>
    %cst = arith.constant dense<0.000000e+00> : vector<64x128xf32>
    %3 = tpu.matmul %1, %2, %cst {dimension_numbers = #tpu.dot_dimension_numbers<[1], [0], [0], [1], [0, 0, 1, 1], [], []>} : vector<64x128xf32>, vector<128x128xf32>, vector<64x128xf32> -> vector<64x128xf32>
    %c0_4 = arith.constant 0 : index
    %c0_5 = arith.constant 0 : index
    %4 = vector.load %arg3[%c0_4, %c0_5] : memref<1x128xf32, #tpu.memory_space<vmem>>, vector<1x128xf32>
    %5 = vector.broadcast %4 : vector<1x128xf32> to vector<64x128xf32>
    %6 = arith.addf %3, %5 : vector<64x128xf32>
    %cst_6 = arith.constant 0.000000e+00 : f32
    %7 = vector.broadcast %cst_6 : f32 to vector<64x128xf32>
    %8 = arith.maximumf %6, %7 : vector<64x128xf32>
    %9 = vector.extract_strided_slice %8 {offsets = [0, 0], sizes = [64, 8], strides = [1, 1]} : vector<64x128xf32> to vector<64x8xf32>
    %c0_7 = arith.constant 0 : index
    %c0_8 = arith.constant 0 : index
    %10 = vector.load %arg11[%c0_7, %c0_8] : memref<64x32xf32, #tpu.memory_space<vmem>>, vector<64x8xf32>
    tpu.vector_store %arg11[%c0_7, %c0_8], %9 {strides = array<i32>} : memref<64x32xf32, #tpu.memory_space<vmem>>, vector<64x8xf32>,
    %cst_9 = arith.constant 0.000000e+00 : f32
    %11 = vector.broadcast %cst_9 : f32 to vector<10x24x8xf32>
    %c0_10 = arith.constant 0 : index
    %c0_11 = arith.constant 0 : index
    %c0_12 = arith.constant 0 : index
    %12 = vector.load %arg9[%c0_10, %c0_11, %c0_12] : memref<10x24x8xf32, #tpu.memory_space<vmem>>, vector<10x24x8xf32>
    tpu.vector_store %arg9[%c0_10, %c0_11, %c0_12], %11 {strides = array<i32>} : memref<10x24x8xf32, #tpu.memory_space<vmem>>, vector<10x24x8xf32>,
    %13 = vector.extract_strided_slice %8 {offsets = [0, 8], sizes = [64, 8], strides = [1, 1]} : vector<64x128xf32> to vector<64x8xf32>
    %14 = vector.shape_cast %13 : vector<64x8xf32> to vector<8x8x8xf32>
    %c1 = arith.constant 1 : index
    %c8 = arith.constant 8 : index
    %c0_13 = arith.constant 0 : index
    %15 = vector.load %arg9[%c1, %c8, %c0_13] : memref<10x24x8xf32, #tpu.memory_space<vmem>>, vector<8x8x8xf32>
    tpu.vector_store %arg9[%c1, %c8, %c0_13], %14 {strides = array<i32>} : memref<10x24x8xf32, #tpu.memory_space<vmem>>, vector<8x8x8xf32>,
    %c0_14 = arith.constant 0 : index
    %c7 = arith.constant 7 : index
    %c0_15 = arith.constant 0 : index
    %16 = vector.load %arg9[%c0_14, %c7, %c0_15] : memref<10x24x8xf32, #tpu.memory_space<vmem>>, vector<8x8x8xf32>
    %17 = vector.shape_cast %16 : vector<8x8x8xf32> to vector<64x8xf32>
    %c0_16 = arith.constant 0 : index
    %c0_17 = arith.constant 0 : index
    %18 = vector.load %arg10[%c0_16, %c0_17] : memref<64x72xf32, #tpu.memory_space<vmem>>, vector<64x8xf32>
    tpu.vector_store %arg10[%c0_16, %c0_17], %17 {strides = array<i32>} : memref<64x72xf32, #tpu.memory_space<vmem>>, vector<64x8xf32>,
    %c0_18 = arith.constant 0 : index
    %c8_19 = arith.constant 8 : index
    %c0_20 = arith.constant 0 : index
    %19 = vector.load %arg9[%c0_18, %c8_19, %c0_20] : memref<10x24x8xf32, #tpu.memory_space<vmem>>, vector<8x8x8xf32>
    %20 = vector.shape_cast %19 : vector<8x8x8xf32> to vector<64x8xf32>
    %c0_21 = arith.constant 0 : index
    %c8_22 = arith.constant 8 : index
    %21 = vector.load %arg10[%c0_21, %c8_22] : memref<64x72xf32, #tpu.memory_space<vmem>>, vector<64x8xf32>
    tpu.vector_store %arg10[%c0_21, %c8_22], %20 {strides = array<i32>} : memref<64x72xf32, #tpu.memory_space<vmem>>, vector<64x8xf32>,
    %c0_23 = arith.constant 0 : index
    %c9 = arith.constant 9 : index
    %c0_24 = arith.constant 0 : index
    %22 = vector.load %arg9[%c0_23, %c9, %c0_24] : memref<10x24x8xf32, #tpu.memory_space<vmem>>, vector<8x8x8xf32>
    %23 = vector.shape_cast %22 : vector<8x8x8xf32> to vector<64x8xf32>
    %c0_25 = arith.constant 0 : index
    %c16 = arith.constant 16 : index
    %24 = vector.load %arg10[%c0_25, %c16] : memref<64x72xf32, #tpu.memory_space<vmem>>, vector<64x8xf32>
    tpu.vector_store %arg10[%c0_25, %c16], %23 {strides = array<i32>} : memref<64x72xf32, #tpu.memory_space<vmem>>, vector<64x8xf32>,
    %c1_26 = arith.constant 1 : index
    %c7_27 = arith.constant 7 : index
    %c0_28 = arith.constant 0 : index
    %25 = vector.load %arg9[%c1_26, %c7_27, %c0_28] : memref<10x24x8xf32, #tpu.memory_space<vmem>>, vector<8x8x8xf32>
    %26 = vector.shape_cast %25 : vector<8x8x8xf32> to vector<64x8xf32>
    %c0_29 = arith.constant 0 : index
    %c24 = arith.constant 24 : index
    %27 = vector.load %arg10[%c0_29, %c24] : memref<64x72xf32, #tpu.memory_space<vmem>>, vector<64x8xf32>
    tpu.vector_store %arg10[%c0_29, %c24], %26 {strides = array<i32>} : memref<64x72xf32, #tpu.memory_space<vmem>>, vector<64x8xf32>,
    %c1_30 = arith.constant 1 : index
    %c8_31 = arith.constant 8 : index
    %c0_32 = arith.constant 0 : index
    %28 = vector.load %arg9[%c1_30, %c8_31, %c0_32] : memref<10x24x8xf32, #tpu.memory_space<vmem>>, vector<8x8x8xf32>
    %29 = vector.shape_cast %28 : vector<8x8x8xf32> to vector<64x8xf32>
    %c0_33 = arith.constant 0 : index
    %c32 = arith.constant 32 : index
    %30 = vector.load %arg10[%c0_33, %c32] : memref<64x72xf32, #tpu.memory_space<vmem>>, vector<64x8xf32>
    tpu.vector_store %arg10[%c0_33, %c32], %29 {strides = array<i32>} : memref<64x72xf32, #tpu.memory_space<vmem>>, vector<64x8xf32>,
    %c1_34 = arith.constant 1 : index
    %c9_35 = arith.constant 9 : index
    %c0_36 = arith.constant 0 : index
    %31 = vector.load %arg9[%c1_34, %c9_35, %c0_36] : memref<10x24x8xf32, #tpu.memory_space<vmem>>, vector<8x8x8xf32>
    %32 = vector.shape_cast %31 : vector<8x8x8xf32> to vector<64x8xf32>
    %c0_37 = arith.constant 0 : index
    %c40 = arith.constant 40 : index
    %33 = vector.load %arg10[%c0_37, %c40] : memref<64x72xf32, #tpu.memory_space<vmem>>, vector<64x8xf32>
    tpu.vector_store %arg10[%c0_37, %c40], %32 {strides = array<i32>} : memref<64x72xf32, #tpu.memory_space<vmem>>, vector<64x8xf32>,
    %c2 = arith.constant 2 : index
    %c7_38 = arith.constant 7 : index
    %c0_39 = arith.constant 0 : index
    %34 = vector.load %arg9[%c2, %c7_38, %c0_39] : memref<10x24x8xf32, #tpu.memory_space<vmem>>, vector<8x8x8xf32>
    %35 = vector.shape_cast %34 : vector<8x8x8xf32> to vector<64x8xf32>
    %c0_40 = arith.constant 0 : index
    %c48 = arith.constant 48 : index
    %36 = vector.load %arg10[%c0_40, %c48] : memref<64x72xf32, #tpu.memory_space<vmem>>, vector<64x8xf32>
    tpu.vector_store %arg10[%c0_40, %c48], %35 {strides = array<i32>} : memref<64x72xf32, #tpu.memory_space<vmem>>, vector<64x8xf32>,
    %c2_41 = arith.constant 2 : index
    %c8_42 = arith.constant 8 : index
    %c0_43 = arith.constant 0 : index
    %37 = vector.load %arg9[%c2_41, %c8_42, %c0_43] : memref<10x24x8xf32, #tpu.memory_space<vmem>>, vector<8x8x8xf32>
    %38 = vector.shape_cast %37 : vector<8x8x8xf32> to vector<64x8xf32>
    %c0_44 = arith.constant 0 : index
    %c56 = arith.constant 56 : index
    %39 = vector.load %arg10[%c0_44, %c56] : memref<64x72xf32, #tpu.memory_space<vmem>>, vector<64x8xf32>
    tpu.vector_store %arg10[%c0_44, %c56], %38 {strides = array<i32>} : memref<64x72xf32, #tpu.memory_space<vmem>>, vector<64x8xf32>,
    %c2_45 = arith.constant 2 : index
    %c9_46 = arith.constant 9 : index
    %c0_47 = arith.constant 0 : index
    %40 = vector.load %arg9[%c2_45, %c9_46, %c0_47] : memref<10x24x8xf32, #tpu.memory_space<vmem>>, vector<8x8x8xf32>
    %41 = vector.shape_cast %40 : vector<8x8x8xf32> to vector<64x8xf32>
    %c0_48 = arith.constant 0 : index
    %c64 = arith.constant 64 : index
    %42 = vector.load %arg10[%c0_48, %c64] : memref<64x72xf32, #tpu.memory_space<vmem>>, vector<64x8xf32>
    tpu.vector_store %arg10[%c0_48, %c64], %41 {strides = array<i32>} : memref<64x72xf32, #tpu.memory_space<vmem>>, vector<64x8xf32>,
    %c0_49 = arith.constant 0 : index
    %c0_50 = arith.constant 0 : index
    %43 = vector.load %arg10[%c0_49, %c0_50] : memref<64x72xf32, #tpu.memory_space<vmem>>, vector<64x72xf32>
    %c0_51 = arith.constant 0 : index
    %c0_52 = arith.constant 0 : index
    %c0_53 = arith.constant 0 : index
    %44 = vector.load %arg4[%c0_51, %c0_52, %c0_53] : memref<3x72x8xf32, #tpu.memory_space<vmem>>, vector<1x72x8xf32>
    %45 = vector.shape_cast %44 : vector<1x72x8xf32> to vector<72x8xf32>
    %cst_54 = arith.constant dense<0.000000e+00> : vector<64x8xf32>
    %46 = tpu.matmul %43, %45, %cst_54 {dimension_numbers = #tpu.dot_dimension_numbers<[1], [0], [0], [1], [0, 0, 1, 1], [], []>} : vector<64x72xf32>, vector<72x8xf32>, vector<64x8xf32> -> vector<64x8xf32>
    %c0_55 = arith.constant 0 : index
    %c0_56 = arith.constant 0 : index
    %c0_57 = arith.constant 0 : index
    %47 = vector.load %arg5[%c0_55, %c0_56, %c0_57] : memref<3x1x8xf32, #tpu.memory_space<vmem>>, vector<1x1x8xf32>
    %48 = vector.shape_cast %47 : vector<1x1x8xf32> to vector<1x8xf32>
    %49 = vector.broadcast %48 : vector<1x8xf32> to vector<64x8xf32>
    %50 = arith.addf %46, %49 : vector<64x8xf32>
    %cst_58 = arith.constant 0.000000e+00 : f32
    %51 = vector.broadcast %cst_58 : f32 to vector<64x8xf32>
    %52 = arith.maximumf %50, %51 : vector<64x8xf32>
    %c0_59 = arith.constant 0 : index
    %c8_60 = arith.constant 8 : index
    %53 = vector.load %arg11[%c0_59, %c8_60] : memref<64x32xf32, #tpu.memory_space<vmem>>, vector<64x8xf32>
    tpu.vector_store %arg11[%c0_59, %c8_60], %52 {strides = array<i32>} : memref<64x32xf32, #tpu.memory_space<vmem>>, vector<64x8xf32>,
    %54 = vector.extract_strided_slice %8 {offsets = [0, 16], sizes = [64, 8], strides = [1, 1]} : vector<64x128xf32> to vector<64x8xf32>
    %55 = arith.addf %54, %52 : vector<64x8xf32>
    %56 = vector.shape_cast %55 : vector<64x8xf32> to vector<8x8x8xf32>
    %c1_61 = arith.constant 1 : index
    %c8_62 = arith.constant 8 : index
    %c0_63 = arith.constant 0 : index
    %57 = vector.load %arg9[%c1_61, %c8_62, %c0_63] : memref<10x24x8xf32, #tpu.memory_space<vmem>>, vector<8x8x8xf32>
    tpu.vector_store %arg9[%c1_61, %c8_62, %c0_63], %56 {strides = array<i32>} : memref<10x24x8xf32, #tpu.memory_space<vmem>>, vector<8x8x8xf32>,
    %c0_64 = arith.constant 0 : index
    %c7_65 = arith.constant 7 : index
    %c0_66 = arith.constant 0 : index
    %58 = vector.load %arg9[%c0_64, %c7_65, %c0_66] : memref<10x24x8xf32, #tpu.memory_space<vmem>>, vector<8x8x8xf32>
    %59 = vector.shape_cast %58 : vector<8x8x8xf32> to vector<64x8xf32>
    %c0_67 = arith.constant 0 : index
    %c0_68 = arith.constant 0 : index
    %60 = vector.load %arg10[%c0_67, %c0_68] : memref<64x72xf32, #tpu.memory_space<vmem>>, vector<64x8xf32>
    tpu.vector_store %arg10[%c0_67, %c0_68], %59 {strides = array<i32>} : memref<64x72xf32, #tpu.memory_space<vmem>>, vector<64x8xf32>,
    %c0_69 = arith.constant 0 : index
    %c8_70 = arith.constant 8 : index
    %c0_71 = arith.constant 0 : index
    %61 = vector.load %arg9[%c0_69, %c8_70, %c0_71] : memref<10x24x8xf32, #tpu.memory_space<vmem>>, vector<8x8x8xf32>
    %62 = vector.shape_cast %61 : vector<8x8x8xf32> to vector<64x8xf32>
    %c0_72 = arith.constant 0 : index
    %c8_73 = arith.constant 8 : index
    %63 = vector.load %arg10[%c0_72, %c8_73] : memref<64x72xf32, #tpu.memory_space<vmem>>, vector<64x8xf32>
    tpu.vector_store %arg10[%c0_72, %c8_73], %62 {strides = array<i32>} : memref<64x72xf32, #tpu.memory_space<vmem>>, vector<64x8xf32>,
    %c0_74 = arith.constant 0 : index
    %c9_75 = arith.constant 9 : index
    %c0_76 = arith.constant 0 : index
    %64 = vector.load %arg9[%c0_74, %c9_75, %c0_76] : memref<10x24x8xf32, #tpu.memory_space<vmem>>, vector<8x8x8xf32>
    %65 = vector.shape_cast %64 : vector<8x8x8xf32> to vector<64x8xf32>
    %c0_77 = arith.constant 0 : index
    %c16_78 = arith.constant 16 : index
    %66 = vector.load %arg10[%c0_77, %c16_78] : memref<64x72xf32, #tpu.memory_space<vmem>>, vector<64x8xf32>
    tpu.vector_store %arg10[%c0_77, %c16_78], %65 {strides = array<i32>} : memref<64x72xf32, #tpu.memory_space<vmem>>, vector<64x8xf32>,
    %c1_79 = arith.constant 1 : index
    %c7_80 = arith.constant 7 : index
    %c0_81 = arith.constant 0 : index
    %67 = vector.load %arg9[%c1_79, %c7_80, %c0_81] : memref<10x24x8xf32, #tpu.memory_space<vmem>>, vector<8x8x8xf32>
    %68 = vector.shape_cast %67 : vector<8x8x8xf32> to vector<64x8xf32>
    %c0_82 = arith.constant 0 : index
    %c24_83 = arith.constant 24 : index
    %69 = vector.load %arg10[%c0_82, %c24_83] : memref<64x72xf32, #tpu.memory_space<vmem>>, vector<64x8xf32>
    tpu.vector_store %arg10[%c0_82, %c24_83], %68 {strides = array<i32>} : memref<64x72xf32, #tpu.memory_space<vmem>>, vector<64x8xf32>,
    %c1_84 = arith.constant 1 : index
    %c8_85 = arith.constant 8 : index
    %c0_86 = arith.constant 0 : index
    %70 = vector.load %arg9[%c1_84, %c8_85, %c0_86] : memref<10x24x8xf32, #tpu.memory_space<vmem>>, vector<8x8x8xf32>
    %71 = vector.shape_cast %70 : vector<8x8x8xf32> to vector<64x8xf32>
    %c0_87 = arith.constant 0 : index
    %c32_88 = arith.constant 32 : index
    %72 = vector.load %arg10[%c0_87, %c32_88] : memref<64x72xf32, #tpu.memory_space<vmem>>, vector<64x8xf32>
    tpu.vector_store %arg10[%c0_87, %c32_88], %71 {strides = array<i32>} : memref<64x72xf32, #tpu.memory_space<vmem>>, vector<64x8xf32>,
    %c1_89 = arith.constant 1 : index
    %c9_90 = arith.constant 9 : index
    %c0_91 = arith.constant 0 : index
    %73 = vector.load %arg9[%c1_89, %c9_90, %c0_91] : memref<10x24x8xf32, #tpu.memory_space<vmem>>, vector<8x8x8xf32>
    %74 = vector.shape_cast %73 : vector<8x8x8xf32> to vector<64x8xf32>
    %c0_92 = arith.constant 0 : index
    %c40_93 = arith.constant 40 : index
    %75 = vector.load %arg10[%c0_92, %c40_93] : memref<64x72xf32, #tpu.memory_space<vmem>>, vector<64x8xf32>
    tpu.vector_store %arg10[%c0_92, %c40_93], %74 {strides = array<i32>} : memref<64x72xf32, #tpu.memory_space<vmem>>, vector<64x8xf32>,
    %c2_94 = arith.constant 2 : index
    %c7_95 = arith.constant 7 : index
    %c0_96 = arith.constant 0 : index
    %76 = vector.load %arg9[%c2_94, %c7_95, %c0_96] : memref<10x24x8xf32, #tpu.memory_space<vmem>>, vector<8x8x8xf32>
    %77 = vector.shape_cast %76 : vector<8x8x8xf32> to vector<64x8xf32>
    %c0_97 = arith.constant 0 : index
    %c48_98 = arith.constant 48 : index
    %78 = vector.load %arg10[%c0_97, %c48_98] : memref<64x72xf32, #tpu.memory_space<vmem>>, vector<64x8xf32>
    tpu.vector_store %arg10[%c0_97, %c48_98], %77 {strides = array<i32>} : memref<64x72xf32, #tpu.memory_space<vmem>>, vector<64x8xf32>,
    %c2_99 = arith.constant 2 : index
    %c8_100 = arith.constant 8 : index
    %c0_101 = arith.constant 0 : index
    %79 = vector.load %arg9[%c2_99, %c8_100, %c0_101] : memref<10x24x8xf32, #tpu.memory_space<vmem>>, vector<8x8x8xf32>
    %80 = vector.shape_cast %79 : vector<8x8x8xf32> to vector<64x8xf32>
    %c0_102 = arith.constant 0 : index
    %c56_103 = arith.constant 56 : index
    %81 = vector.load %arg10[%c0_102, %c56_103] : memref<64x72xf32, #tpu.memory_space<vmem>>, vector<64x8xf32>
    tpu.vector_store %arg10[%c0_102, %c56_103], %80 {strides = array<i32>} : memref<64x72xf32, #tpu.memory_space<vmem>>, vector<64x8xf32>,
    %c2_104 = arith.constant 2 : index
    %c9_105 = arith.constant 9 : index
    %c0_106 = arith.constant 0 : index
    %82 = vector.load %arg9[%c2_104, %c9_105, %c0_106] : memref<10x24x8xf32, #tpu.memory_space<vmem>>, vector<8x8x8xf32>
    %83 = vector.shape_cast %82 : vector<8x8x8xf32> to vector<64x8xf32>
    %c0_107 = arith.constant 0 : index
    %c64_108 = arith.constant 64 : index
    %84 = vector.load %arg10[%c0_107, %c64_108] : memref<64x72xf32, #tpu.memory_space<vmem>>, vector<64x8xf32>
    tpu.vector_store %arg10[%c0_107, %c64_108], %83 {strides = array<i32>} : memref<64x72xf32, #tpu.memory_space<vmem>>, vector<64x8xf32>,
    %c0_109 = arith.constant 0 : index
    %c0_110 = arith.constant 0 : index
    %85 = vector.load %arg10[%c0_109, %c0_110] : memref<64x72xf32, #tpu.memory_space<vmem>>, vector<64x72xf32>
    %c1_111 = arith.constant 1 : index
    %c0_112 = arith.constant 0 : index
    %c0_113 = arith.constant 0 : index
    %86 = vector.load %arg4[%c1_111, %c0_112, %c0_113] : memref<3x72x8xf32, #tpu.memory_space<vmem>>, vector<1x72x8xf32>
    %87 = vector.shape_cast %86 : vector<1x72x8xf32> to vector<72x8xf32>
    %cst_114 = arith.constant dense<0.000000e+00> : vector<64x8xf32>
    %88 = tpu.matmul %85, %87, %cst_114 {dimension_numbers = #tpu.dot_dimension_numbers<[1], [0], [0], [1], [0, 0, 1, 1], [], []>} : vector<64x72xf32>, vector<72x8xf32>, vector<64x8xf32> -> vector<64x8xf32>
    %c1_115 = arith.constant 1 : index
    %c0_116 = arith.constant 0 : index
    %c0_117 = arith.constant 0 : index
    %89 = vector.load %arg5[%c1_115, %c0_116, %c0_117] : memref<3x1x8xf32, #tpu.memory_space<vmem>>, vector<1x1x8xf32>
    %90 = vector.shape_cast %89 : vector<1x1x8xf32> to vector<1x8xf32>
    %91 = vector.broadcast %90 : vector<1x8xf32> to vector<64x8xf32>
    %92 = arith.addf %88, %91 : vector<64x8xf32>
    %cst_118 = arith.constant 0.000000e+00 : f32
    %93 = vector.broadcast %cst_118 : f32 to vector<64x8xf32>
    %94 = arith.maximumf %92, %93 : vector<64x8xf32>
    %c0_119 = arith.constant 0 : index
    %c16_120 = arith.constant 16 : index
    %95 = vector.load %arg11[%c0_119, %c16_120] : memref<64x32xf32, #tpu.memory_space<vmem>>, vector<64x8xf32>
    tpu.vector_store %arg11[%c0_119, %c16_120], %94 {strides = array<i32>} : memref<64x32xf32, #tpu.memory_space<vmem>>, vector<64x8xf32>,
    %96 = vector.extract_strided_slice %8 {offsets = [0, 24], sizes = [64, 8], strides = [1, 1]} : vector<64x128xf32> to vector<64x8xf32>
    %97 = arith.addf %96, %94 : vector<64x8xf32>
    %98 = vector.shape_cast %97 : vector<64x8xf32> to vector<8x8x8xf32>
    %c1_121 = arith.constant 1 : index
    %c8_122 = arith.constant 8 : index
    %c0_123 = arith.constant 0 : index
    %99 = vector.load %arg9[%c1_121, %c8_122, %c0_123] : memref<10x24x8xf32, #tpu.memory_space<vmem>>, vector<8x8x8xf32>
    tpu.vector_store %arg9[%c1_121, %c8_122, %c0_123], %98 {strides = array<i32>} : memref<10x24x8xf32, #tpu.memory_space<vmem>>, vector<8x8x8xf32>,
    %c0_124 = arith.constant 0 : index
    %c7_125 = arith.constant 7 : index
    %c0_126 = arith.constant 0 : index
    %100 = vector.load %arg9[%c0_124, %c7_125, %c0_126] : memref<10x24x8xf32, #tpu.memory_space<vmem>>, vector<8x8x8xf32>
    %101 = vector.shape_cast %100 : vector<8x8x8xf32> to vector<64x8xf32>
    %c0_127 = arith.constant 0 : index
    %c0_128 = arith.constant 0 : index
    %102 = vector.load %arg10[%c0_127, %c0_128] : memref<64x72xf32, #tpu.memory_space<vmem>>, vector<64x8xf32>
    tpu.vector_store %arg10[%c0_127, %c0_128], %101 {strides = array<i32>} : memref<64x72xf32, #tpu.memory_space<vmem>>, vector<64x8xf32>,
    %c0_129 = arith.constant 0 : index
    %c8_130 = arith.constant 8 : index
    %c0_131 = arith.constant 0 : index
    %103 = vector.load %arg9[%c0_129, %c8_130, %c0_131] : memref<10x24x8xf32, #tpu.memory_space<vmem>>, vector<8x8x8xf32>
    %104 = vector.shape_cast %103 : vector<8x8x8xf32> to vector<64x8xf32>
    %c0_132 = arith.constant 0 : index
    %c8_133 = arith.constant 8 : index
    %105 = vector.load %arg10[%c0_132, %c8_133] : memref<64x72xf32, #tpu.memory_space<vmem>>, vector<64x8xf32>
    tpu.vector_store %arg10[%c0_132, %c8_133], %104 {strides = array<i32>} : memref<64x72xf32, #tpu.memory_space<vmem>>, vector<64x8xf32>,
    %c0_134 = arith.constant 0 : index
    %c9_135 = arith.constant 9 : index
    %c0_136 = arith.constant 0 : index
    %106 = vector.load %arg9[%c0_134, %c9_135, %c0_136] : memref<10x24x8xf32, #tpu.memory_space<vmem>>, vector<8x8x8xf32>
    %107 = vector.shape_cast %106 : vector<8x8x8xf32> to vector<64x8xf32>
    %c0_137 = arith.constant 0 : index
    %c16_138 = arith.constant 16 : index
    %108 = vector.load %arg10[%c0_137, %c16_138] : memref<64x72xf32, #tpu.memory_space<vmem>>, vector<64x8xf32>
    tpu.vector_store %arg10[%c0_137, %c16_138], %107 {strides = array<i32>} : memref<64x72xf32, #tpu.memory_space<vmem>>, vector<64x8xf32>,
    %c1_139 = arith.constant 1 : index
    %c7_140 = arith.constant 7 : index
    %c0_141 = arith.constant 0 : index
    %109 = vector.load %arg9[%c1_139, %c7_140, %c0_141] : memref<10x24x8xf32, #tpu.memory_space<vmem>>, vector<8x8x8xf32>
    %110 = vector.shape_cast %109 : vector<8x8x8xf32> to vector<64x8xf32>
    %c0_142 = arith.constant 0 : index
    %c24_143 = arith.constant 24 : index
    %111 = vector.load %arg10[%c0_142, %c24_143] : memref<64x72xf32, #tpu.memory_space<vmem>>, vector<64x8xf32>
    tpu.vector_store %arg10[%c0_142, %c24_143], %110 {strides = array<i32>} : memref<64x72xf32, #tpu.memory_space<vmem>>, vector<64x8xf32>,
    %c1_144 = arith.constant 1 : index
    %c8_145 = arith.constant 8 : index
    %c0_146 = arith.constant 0 : index
    %112 = vector.load %arg9[%c1_144, %c8_145, %c0_146] : memref<10x24x8xf32, #tpu.memory_space<vmem>>, vector<8x8x8xf32>
    %113 = vector.shape_cast %112 : vector<8x8x8xf32> to vector<64x8xf32>
    %c0_147 = arith.constant 0 : index
    %c32_148 = arith.constant 32 : index
    %114 = vector.load %arg10[%c0_147, %c32_148] : memref<64x72xf32, #tpu.memory_space<vmem>>, vector<64x8xf32>
    tpu.vector_store %arg10[%c0_147, %c32_148], %113 {strides = array<i32>} : memref<64x72xf32, #tpu.memory_space<vmem>>, vector<64x8xf32>,
    %c1_149 = arith.constant 1 : index
    %c9_150 = arith.constant 9 : index
    %c0_151 = arith.constant 0 : index
    %115 = vector.load %arg9[%c1_149, %c9_150, %c0_151] : memref<10x24x8xf32, #tpu.memory_space<vmem>>, vector<8x8x8xf32>
    %116 = vector.shape_cast %115 : vector<8x8x8xf32> to vector<64x8xf32>
    %c0_152 = arith.constant 0 : index
    %c40_153 = arith.constant 40 : index
    %117 = vector.load %arg10[%c0_152, %c40_153] : memref<64x72xf32, #tpu.memory_space<vmem>>, vector<64x8xf32>
    tpu.vector_store %arg10[%c0_152, %c40_153], %116 {strides = array<i32>} : memref<64x72xf32, #tpu.memory_space<vmem>>, vector<64x8xf32>,
    %c2_154 = arith.constant 2 : index
    %c7_155 = arith.constant 7 : index
    %c0_156 = arith.constant 0 : index
    %118 = vector.load %arg9[%c2_154, %c7_155, %c0_156] : memref<10x24x8xf32, #tpu.memory_space<vmem>>, vector<8x8x8xf32>
    %119 = vector.shape_cast %118 : vector<8x8x8xf32> to vector<64x8xf32>
    %c0_157 = arith.constant 0 : index
    %c48_158 = arith.constant 48 : index
    %120 = vector.load %arg10[%c0_157, %c48_158] : memref<64x72xf32, #tpu.memory_space<vmem>>, vector<64x8xf32>
    tpu.vector_store %arg10[%c0_157, %c48_158], %119 {strides = array<i32>} : memref<64x72xf32, #tpu.memory_space<vmem>>, vector<64x8xf32>,
    %c2_159 = arith.constant 2 : index
    %c8_160 = arith.constant 8 : index
    %c0_161 = arith.constant 0 : index
    %121 = vector.load %arg9[%c2_159, %c8_160, %c0_161] : memref<10x24x8xf32, #tpu.memory_space<vmem>>, vector<8x8x8xf32>
    %122 = vector.shape_cast %121 : vector<8x8x8xf32> to vector<64x8xf32>
    %c0_162 = arith.constant 0 : index
    %c56_163 = arith.constant 56 : index
    %123 = vector.load %arg10[%c0_162, %c56_163] : memref<64x72xf32, #tpu.memory_space<vmem>>, vector<64x8xf32>
    tpu.vector_store %arg10[%c0_162, %c56_163], %122 {strides = array<i32>} : memref<64x72xf32, #tpu.memory_space<vmem>>, vector<64x8xf32>,
    %c2_164 = arith.constant 2 : index
    %c9_165 = arith.constant 9 : index
    %c0_166 = arith.constant 0 : index
    %124 = vector.load %arg9[%c2_164, %c9_165, %c0_166] : memref<10x24x8xf32, #tpu.memory_space<vmem>>, vector<8x8x8xf32>
    %125 = vector.shape_cast %124 : vector<8x8x8xf32> to vector<64x8xf32>
    %c0_167 = arith.constant 0 : index
    %c64_168 = arith.constant 64 : index
    %126 = vector.load %arg10[%c0_167, %c64_168] : memref<64x72xf32, #tpu.memory_space<vmem>>, vector<64x8xf32>
    tpu.vector_store %arg10[%c0_167, %c64_168], %125 {strides = array<i32>} : memref<64x72xf32, #tpu.memory_space<vmem>>, vector<64x8xf32>,
    %c0_169 = arith.constant 0 : index
    %c0_170 = arith.constant 0 : index
    %127 = vector.load %arg10[%c0_169, %c0_170] : memref<64x72xf32, #tpu.memory_space<vmem>>, vector<64x72xf32>
    %c2_171 = arith.constant 2 : index
    %c0_172 = arith.constant 0 : index
    %c0_173 = arith.constant 0 : index
    %128 = vector.load %arg4[%c2_171, %c0_172, %c0_173] : memref<3x72x8xf32, #tpu.memory_space<vmem>>, vector<1x72x8xf32>
    %129 = vector.shape_cast %128 : vector<1x72x8xf32> to vector<72x8xf32>
    %cst_174 = arith.constant dense<0.000000e+00> : vector<64x8xf32>
    %130 = tpu.matmul %127, %129, %cst_174 {dimension_numbers = #tpu.dot_dimension_numbers<[1], [0], [0], [1], [0, 0, 1, 1], [], []>} : vector<64x72xf32>, vector<72x8xf32>, vector<64x8xf32> -> vector<64x8xf32>
    %c2_175 = arith.constant 2 : index
    %c0_176 = arith.constant 0 : index
    %c0_177 = arith.constant 0 : index
    %131 = vector.load %arg5[%c2_175, %c0_176, %c0_177] : memref<3x1x8xf32, #tpu.memory_space<vmem>>, vector<1x1x8xf32>
    %132 = vector.shape_cast %131 : vector<1x1x8xf32> to vector<1x8xf32>
    %133 = vector.broadcast %132 : vector<1x8xf32> to vector<64x8xf32>
    %134 = arith.addf %130, %133 : vector<64x8xf32>
    %cst_178 = arith.constant 0.000000e+00 : f32
    %135 = vector.broadcast %cst_178 : f32 to vector<64x8xf32>
    %136 = arith.maximumf %134, %135 : vector<64x8xf32>
    %c0_179 = arith.constant 0 : index
    %c24_180 = arith.constant 24 : index
    %137 = vector.load %arg11[%c0_179, %c24_180] : memref<64x32xf32, #tpu.memory_space<vmem>>, vector<64x8xf32>
    tpu.vector_store %arg11[%c0_179, %c24_180], %136 {strides = array<i32>} : memref<64x32xf32, #tpu.memory_space<vmem>>, vector<64x8xf32>,
    %c0_181 = arith.constant 0 : index
    %c0_182 = arith.constant 0 : index
    %138 = vector.load %arg11[%c0_181, %c0_182] : memref<64x32xf32, #tpu.memory_space<vmem>>, vector<64x32xf32>
    %c0_183 = arith.constant 0 : index
    %c0_184 = arith.constant 0 : index
    %139 = vector.load %arg6[%c0_183, %c0_184] : memref<32x128xf32, #tpu.memory_space<vmem>>, vector<32x128xf32>
    %cst_185 = arith.constant dense<0.000000e+00> : vector<64x128xf32>
    %140 = tpu.matmul %138, %139, %cst_185 {dimension_numbers = #tpu.dot_dimension_numbers<[1], [0], [0], [1], [0, 0, 1, 1], [], []>} : vector<64x32xf32>, vector<32x128xf32>, vector<64x128xf32> -> vector<64x128xf32>
    %c0_186 = arith.constant 0 : index
    %c0_187 = arith.constant 0 : index
    %141 = vector.load %arg7[%c0_186, %c0_187] : memref<1x128xf32, #tpu.memory_space<vmem>>, vector<1x128xf32>
    %142 = vector.broadcast %141 : vector<1x128xf32> to vector<64x128xf32>
    %143 = arith.addf %140, %142 : vector<64x128xf32>
    %144 = arith.addf %143, %1 : vector<64x128xf32>
    %cst_188 = arith.constant 0.000000e+00 : f32
    %145 = vector.broadcast %cst_188 : f32 to vector<64x128xf32>
    %146 = arith.maximumf %144, %145 : vector<64x128xf32>
    %c0_189 = arith.constant 0 : index
    %c0_190 = arith.constant 0 : index
    %c0_191 = arith.constant 0 : index
    %147 = vector.load %arg8[%c0_189, %c0_190, %c0_191] : memref<1x64x128xf32, #tpu.memory_space<vmem>>, vector<1x64x128xf32>
    %148 = vector.shape_cast %147 : vector<1x64x128xf32> to vector<64x128xf32>
    %149 = vector.shape_cast %146 : vector<64x128xf32> to vector<1x64x128xf32>
    tpu.vector_store %arg8[%c0_189, %c0_190, %c0_191], %149 {strides = array<i32>} : memref<1x64x128xf32, #tpu.memory_space<vmem>>, vector<1x64x128xf32>,
    return
  }
  func.func @transform_0(%arg0: i32) -> (i32, i32, i32) {
    %c0_i32 = arith.constant 0 : i32
    %c0_i32_0 = arith.constant 0 : i32
    %c0_i32_1 = arith.constant 0 : i32
    return %arg0, %c0_i32, %c0_i32_0 : i32, i32, i32
  }
  func.func @transform_1(%arg0: i32) -> (i32, i32) {
    %c0_i32 = arith.constant 0 : i32
    %c0_i32_0 = arith.constant 0 : i32
    %c0_i32_1 = arith.constant 0 : i32
    return %c0_i32, %c0_i32_0 : i32, i32
  }
  func.func @transform_2(%arg0: i32) -> (i32, i32) {
    %c0_i32 = arith.constant 0 : i32
    %c0_i32_0 = arith.constant 0 : i32
    %c0_i32_1 = arith.constant 0 : i32
    return %c0_i32, %c0_i32_0 : i32, i32
  }
  func.func @transform_3(%arg0: i32) -> (i32, i32, i32) {
    %c0_i32 = arith.constant 0 : i32
    %c0_i32_0 = arith.constant 0 : i32
    %c0_i32_1 = arith.constant 0 : i32
    %c0_i32_2 = arith.constant 0 : i32
    return %c0_i32, %c0_i32_0, %c0_i32_1 : i32, i32, i32
  }
  func.func @transform_4(%arg0: i32) -> (i32, i32, i32) {
    %c0_i32 = arith.constant 0 : i32
    %c0_i32_0 = arith.constant 0 : i32
    %c0_i32_1 = arith.constant 0 : i32
    %c0_i32_2 = arith.constant 0 : i32
    return %c0_i32, %c0_i32_0, %c0_i32_1 : i32, i32, i32
  }
  func.func @transform_5(%arg0: i32) -> (i32, i32) {
    %c0_i32 = arith.constant 0 : i32
    %c0_i32_0 = arith.constant 0 : i32
    %c0_i32_1 = arith.constant 0 : i32
    return %c0_i32, %c0_i32_0 : i32, i32
  }
  func.func @transform_6(%arg0: i32) -> (i32, i32) {
    %c0_i32 = arith.constant 0 : i32
    %c0_i32_0 = arith.constant 0 : i32
    %c0_i32_1 = arith.constant 0 : i32
    return %c0_i32, %c0_i32_0 : i32, i32
  }
  func.func @transform_7(%arg0: i32) -> (i32, i32, i32) {
    %c0_i32 = arith.constant 0 : i32
    %c0_i32_0 = arith.constant 0 : i32
    %c0_i32_1 = arith.constant 0 : i32
    return %arg0, %c0_i32, %c0_i32_0 : i32, i32, i32
  }
}

</mosaic_0001>

<llo_original>
// kernel: fwd.4
$region0: #{fwd.4}
  #allocation0 [shape = 'u32[]', space=smem, size = 0x4, offset = 0x4, fixed_abs, tag = 'smem constant byte address 0x4 - core index']
  #allocation1 [shape = 'u32[72,128]{1,0:T(1,128)}', space=vmem, size = 0x9000, scoped, tag = 'internal scratch']
  #allocation2 [shape = 'f32[10,24,8]{2,1,0:T(8,128)}', space=vmem, size = 0x1e000, scoped, tag = 'scratch operand']
  #allocation3 [shape = 'f32[64,72]{1,0:T(8,128)}', space=vmem, size = 0x8000, scoped, tag = 'scratch operand']
  #allocation4 [shape = 'f32[64,32]{1,0:T(8,128)}', space=vmem, size = 0x8000, scoped, tag = 'scratch operand']
  %s0 = inlined_call_operand.vmem [shape: f32[2,64,128], index: 0, kind: input, shape index: {}]
  %s1 = inlined_call_operand.vmem [shape: f32[128,128], index: 1, kind: input, shape index: {}]
  %s2 = inlined_call_operand.vmem [shape: f32[1,128], index: 2, kind: input, shape index: {}]
  %s3 = inlined_call_operand.vmem [shape: f32[3,72,8], index: 3, kind: input, shape index: {}]
  %s4 = inlined_call_operand.vmem [shape: f32[3,1,8], index: 4, kind: input, shape index: {}]
  %s5 = inlined_call_operand.vmem [shape: f32[32,128], index: 5, kind: input, shape index: {}]
  %s6 = inlined_call_operand.vmem [shape: f32[1,128], index: 6, kind: input, shape index: {}]
  %s7 = inlined_call_operand.vmem [shape: f32[2,64,128], index: 7, kind: output, shape index: {}]
  %s8 = sld [smem:[#allocation0]]
  $region61: #{fwd.4} parent=0
    _
  %s10 = ssub.s32 1, %s8
  %s11 = scalar_select 0, %s10, %s8
  loop: start=0, step=1, limit=4
  $region2: #{fwd.4} parent=0 // loop_pre_header
    _
  $region3: #{fwd.4} parent=0 // loop_header
    %s13 = sphi 0, %s17
    %p14 = scmp.ge.s32.totalorder %s13, 4
    %s23 = sphi 0, %s25
    %s26 = sphi 0, %s23
    %s27 = sphi 0, %s26
    %s43 = sphi 0, %s27
    %s47 = sphi 0, %s47
    %s49 = sphi 0, %s47
    %s50 = sphi 0, %s49
    %s64 = sphi 0, %s50
    %s68 = sphi 0, %s68
    %s70 = sphi 0, %s68
    %s71 = sphi 0, %s70
    %s85 = sphi 0, %s71
    %s89 = sphi 0, %s89
    %s91 = sphi 0, %s89
    %s92 = sphi 0, %s91
    %s106 = sphi 0, %s92
    %s110 = sphi 0, %s110
    %s112 = sphi 0, %s110
    %s113 = sphi 0, %s112
    %s127 = sphi 0, %s113
    %s131 = sphi 0, %s131
    %s133 = sphi 0, %s131
    %s134 = sphi 0, %s133
    %s148 = sphi 0, %s134
    %s152 = sphi 0, %s152
    %s154 = sphi 0, %s152
    %s155 = sphi 0, %s154
    %s169 = sphi 0, %s155
    %s175 = sphi 0, %s177
    %s178 = sphi 0, %s175
    %s179 = sphi 0, %s178
    %s195 = sphi 0, %s179
  $region4: #{fwd.4} parent=0 // loop_header_branch
    %16 = sbr.rel (%p14) target = $region8
  $region5: #{fwd.4} parent=0 // loop_body
    %s18 = ssub.s32 %s13, 1
    %s19 = ssub.s32 %s13, 2
    %s20 = sadd.s32 %s13, 1
    %s21 = ssub.s32 %s13, %s20
    %p22 = scmp.eq.s32.totalorder %s21, 0
    %s24 = sadd.s32 %s23, 1
    %s25 = scalar_select %p22, %s23, %s24
    %p28 = pneg %p22
    %p29 = scmp.eq.s32.totalorder %s13, 1
    %p30 = por %p28, %p29
    %p31 = scmp.ne.s32.totalorder %s23, %s26
    %p32 = scmp.eq.s32.totalorder %s13, 0
    %p33 = por %p31, %p32
    %p34 = scmp.ne.s32.totalorder %s23, %s26
    %p35 = scmp.eq.s32.totalorder %s18, 1
    %p36 = por %p34, %p35
    %p37 = scmp.ne.s32.totalorder %s26, %s27
    %p38 = scmp.eq.s32.totalorder %s18, 0
    %p39 = por %p37, %p38
    %p40 = scmp.ne.s32.totalorder %s26, %s27
    %p41 = scmp.eq.s32.totalorder %s19, 1
    %p42 = por %p40, %p41
    %p44 = scmp.ne.s32.totalorder %s27, %s43
    %p45 = scmp.eq.s32.totalorder %s19, 0
    %p46 = por %p44, %p45
    %s48 = sadd.s32 %s47, 1
    %p51 = scmp.eq.s32.totalorder %s13, 1
    %p52 = scmp.ne.s32.totalorder %s47, %s49
    %p53 = scmp.eq.s32.totalorder %s13, 0
    %p54 = por %p52, %p53
    %p55 = scmp.ne.s32.totalorder %s47, %s49
    %p56 = scmp.eq.s32.totalorder %s18, 1
    %p57 = por %p55, %p56
    %p58 = scmp.ne.s32.totalorder %s49, %s50
    %p59 = scmp.eq.s32.totalorder %s18, 0
    %p60 = por %p58, %p59
    %p61 = scmp.ne.s32.totalorder %s49, %s50
    %p62 = scmp.eq.s32.totalorder %s19, 1
    %p63 = por %p61, %p62
    %p65 = scmp.ne.s32.totalorder %s50, %s64
    %p66 = scmp.eq.s32.totalorder %s19, 0
    %p67 = por %p65, %p66
    %s69 = sadd.s32 %s68, 1
    %p72 = scmp.eq.s32.totalorder %s13, 1
    %p73 = scmp.ne.s32.totalorder %s68, %s70
    %p74 = scmp.eq.s32.totalorder %s13, 0
    %p75 = por %p73, %p74
    %p76 = scmp.ne.s32.totalorder %s68, %s70
    %p77 = scmp.eq.s32.totalorder %s18, 1
    %p78 = por %p76, %p77
    %p79 = scmp.ne.s32.totalorder %s70, %s71
    %p80 = scmp.eq.s32.totalorder %s18, 0
    %p81 = por %p79, %p80
    %p82 = scmp.ne.s32.totalorder %s70, %s71
    %p83 = scmp.eq.s32.totalorder %s19, 1
    %p84 = por %p82, %p83
    %p86 = scmp.ne.s32.totalorder %s71, %s85
    %p87 = scmp.eq.s32.totalorder %s19, 0
    %p88 = por %p86, %p87
    %s90 = sadd.s32 %s89, 1
    %p93 = scmp.eq.s32.totalorder %s13, 1
    %p94 = scmp.ne.s32.totalorder %s89, %s91
    %p95 = scmp.eq.s32.totalorder %s13, 0
    %p96 = por %p94, %p95
    %p97 = scmp.ne.s32.totalorder %s89, %s91
    %p98 = scmp.eq.s32.totalorder %s18, 1
    %p99 = por %p97, %p98
    %p100 = scmp.ne.s32.totalorder %s91, %s92
    %p101 = scmp.eq.s32.totalorder %s18, 0
    %p102 = por %p100, %p101
    %p103 = scmp.ne.s32.totalorder %s91, %s92
    %p104 = scmp.eq.s32.totalorder %s19, 1
    %p105 = por %p103, %p104
    %p107 = scmp.ne.s32.totalorder %s92, %s106
    %p108 = scmp.eq.s32.totalorder %s19, 0
    %p109 = por %p107, %p108
    %s111 = sadd.s32 %s110, 1
    %p114 = scmp.eq.s32.totalorder %s13, 1
    %p115 = scmp.ne.s32.totalorder %s110, %s112
    %p116 = scmp.eq.s32.totalorder %s13, 0
    %p117 = por %p115, %p116
    %p118 = scmp.ne.s32.totalorder %s110, %s112
    %p119 = scmp.eq.s32.totalorder %s18, 1
    %p120 = por %p118, %p119
    %p121 = scmp.ne.s32.totalorder %s112, %s113
    %p122 = scmp.eq.s32.totalorder %s18, 0
    %p123 = por %p121, %p122
    %p124 = scmp.ne.s32.totalorder %s112, %s113
    %p125 = scmp.eq.s32.totalorder %s19, 1
    %p126 = por %p124, %p125
    %p128 = scmp.ne.s32.totalorder %s113, %s127
    %p129 = scmp.eq.s32.totalorder %s19, 0
    %p130 = por %p128, %p129
    %s132 = sadd.s32 %s131, 1
    %p135 = scmp.eq.s32.totalorder %s13, 1
    %p136 = scmp.ne.s32.totalorder %s131, %s133
    %p137 = scmp.eq.s32.totalorder %s13, 0
    %p138 = por %p136, %p137
    %p139 = scmp.ne.s32.totalorder %s131, %s133
    %p140 = scmp.eq.s32.totalorder %s18, 1
    %p141 = por %p139, %p140
    %p142 = scmp.ne.s32.totalorder %s133, %s134
    %p143 = scmp.eq.s32.totalorder %s18, 0
    %p144 = por %p142, %p143
    %p145 = scmp.ne.s32.totalorder %s133, %s134
    %p146 = scmp.eq.s32.totalorder %s19, 1
    %p147 = por %p145, %p146
    %p149 = scmp.ne.s32.totalorder %s134, %s148
    %p150 = scmp.eq.s32.totalorder %s19, 0
    %p151 = por %p149, %p150
    %s153 = sadd.s32 %s152, 1
    %p156 = scmp.eq.s32.totalorder %s13, 1
    %p157 = scmp.ne.s32.totalorder %s152, %s154
    %p158 = scmp.eq.s32.totalorder %s13, 0
    %p159 = por %p157, %p158
    %p160 = scmp.ne.s32.totalorder %s152, %s154
    %p161 = scmp.eq.s32.totalorder %s18, 1
    %p162 = por %p160, %p161
    %p163 = scmp.ne.s32.totalorder %s154, %s155
    %p164 = scmp.eq.s32.totalorder %s18, 0
    %p165 = por %p163, %p164
    %p166 = scmp.ne.s32.totalorder %s154, %s155
    %p167 = scmp.eq.s32.totalorder %s19, 1
    %p168 = por %p166, %p167
    %p170 = scmp.ne.s32.totalorder %s155, %s169
    %p171 = scmp.eq.s32.totalorder %s19, 0
    %p172 = por %p170, %p171
    %s173 = ssub.s32 %s13, %s20
    %p174 = scmp.eq.s32.totalorder %s173, 0
    %s176 = sadd.s32 %s175, 1
    %s177 = scalar_select %p174, %s175, %s176
    %p180 = pneg %p174
    %p181 = scmp.eq.s32.totalorder %s13, 1
    %p182 = por %p180, %p181
    %p183 = scmp.ne.s32.totalorder %s175, %s178
    %p184 = scmp.eq.s32.totalorder %s13, 0
    %p185 = por %p183, %p184
    %p186 = scmp.ne.s32.totalorder %s175, %s178
    %p187 = scmp.eq.s32.totalorder %s18, 1
    %p188 = por %p186, %p187
    %p189 = scmp.ne.s32.totalorder %s178, %s179
    %p190 = scmp.eq.s32.totalorder %s18, 0
    %p191 = por %p189, %p190
    %p192 = scmp.ne.s32.totalorder %s178, %s179
    %p193 = scmp.eq.s32.totalorder %s19, 1
    %p194 = por %p192, %p193
    %p196 = scmp.ne.s32.totalorder %s179, %s195
    %p197 = scmp.eq.s32.totalorder %s19, 0
    %p198 = por %p196, %p197
    %p199 = scmp.le.s32.totalorder 1, %s13
    %p200 = scmp.lt.s32.totalorder %s13, 3
    %p201 = pnand %p199, %p200
    %p202 = pneg %p201
    // Predicated region
    $region9: #{fwd.4} parent=5 // pred_check
      _
    $region10: #{fwd.4} parent=5 // pred_check_branch
      %204 = sbr.rel (%p201) target = $region12
    $region11: #{fwd.4} parent=5 // pred_region
      %s205 = ssub.s32 %s13, 1
      // Predicated region
      $region13: #{fwd.4} parent=11 // pred_check
        %p206 = pneg %p60
      $region14: #{fwd.4} parent=11 // pred_check_branch
        %208 = sbr.rel (%p206) target = $region16
      $region15: #{fwd.4} parent=11 // pred_region
        _
      $region16: #{fwd.4} parent=11 // pred_fallthru
        _
      // Predicated region
      $region17: #{fwd.4} parent=11 // pred_check
        %p209 = pneg %p81
      $region18: #{fwd.4} parent=11 // pred_check_branch
        %211 = sbr.rel (%p209) target = $region20
      $region19: #{fwd.4} parent=11 // pred_region
        _
      $region20: #{fwd.4} parent=11 // pred_fallthru
        _
      // Predicated region
      $region21: #{fwd.4} parent=11 // pred_check
        %p212 = pneg %p102
      $region22: #{fwd.4} parent=11 // pred_check_branch
        %214 = sbr.rel (%p212) target = $region24
      $region23: #{fwd.4} parent=11 // pred_region
        _
      $region24: #{fwd.4} parent=11 // pred_fallthru
        _
      // Predicated region
      $region25: #{fwd.4} parent=11 // pred_check
        %p215 = pneg %p123
      $region26: #{fwd.4} parent=11 // pred_check_branch
        %217 = sbr.rel (%p215) target = $region28
      $region27: #{fwd.4} parent=11 // pred_region
        _
      $region28: #{fwd.4} parent=11 // pred_fallthru
        _
      // Predicated region
      $region29: #{fwd.4} parent=11 // pred_check
        %p218 = pneg %p144
      $region30: #{fwd.4} parent=11 // pred_check_branch
        %220 = sbr.rel (%p218) target = $region32
      $region31: #{fwd.4} parent=11 // pred_region
        _
      $region32: #{fwd.4} parent=11 // pred_fallthru
        _
      // Predicated region
      $region33: #{fwd.4} parent=11 // pred_check
        %p221 = pneg %p165
      $region34: #{fwd.4} parent=11 // pred_check_branch
        %223 = sbr.rel (%p221) target = $region36
      $region35: #{fwd.4} parent=11 // pred_region
        _
      $region36: #{fwd.4} parent=11 // pred_fallthru
        _
    $region12: #{fwd.4} parent=5 // pred_fallthru
      _
    %p224 = scmp.lt.s32.totalorder %s13, 2
    // Predicated region
    $region37: #{fwd.4} parent=5 // pred_check
      %p225 = pneg %p224
    $region38: #{fwd.4} parent=5 // pred_check_branch
      %227 = sbr.rel (%p225) target = $region40
    $region39: #{fwd.4} parent=5 // pred_region
      // Predicated region
      $region41: #{fwd.4} parent=39 // pred_check
        %p228 = pneg %p33
      $region42: #{fwd.4} parent=39 // pred_check_branch
        %230 = sbr.rel (%p228) target = $region44
      $region43: #{fwd.4} parent=39 // pred_region
        %p231 = scmp.lt.s32.totalorder %s13, 1
        %s232 = scalar_select %p231, %s13, 1
        %s233 = smul.addr %s232, 8
        %s234 = smul.addr %s233, 8
        %s235 = scalar_lea.vmem %s0, %s234
      $region44: #{fwd.4} parent=39 // pred_fallthru
        _
    $region40: #{fwd.4} parent=5 // pred_fallthru
      _
    %p236 = scmp.le.s32.totalorder 1, %s13
    %p237 = scmp.lt.s32.totalorder %s13, 3
    %p238 = pnand %p236, %p237
    %p239 = pneg %p238
    // Predicated region
    $region45: #{fwd.4} parent=5 // pred_check
      _
    $region46: #{fwd.4} parent=5 // pred_check_branch
      %241 = sbr.rel (%p238) target = $region48
    $region47: #{fwd.4} parent=5 // pred_region
      %s242 = ssub.s32 %s13, 1
      %p243 = scmp.lt.s32.totalorder %s18, 1
      %s244 = scalar_select %p243, %s18, 1
      %s245 = smul.addr %s244, 8
      %s246 = smul.addr %s245, 8
      %s247 = scalar_lea.vmem %s0, %s246
      %p248 = pneg %p39
      %p249 = pneg %p36
      %p250 = pneg %p60
      %p251 = pneg %p57
      %p252 = pneg %p81
      %p253 = pneg %p78
      %p254 = pneg %p102
      %p255 = pneg %p99
      %p256 = pneg %p123
      %p257 = pneg %p120
      %p258 = pneg %p144
      %p259 = pneg %p141
      %p260 = pneg %p165
      %p261 = pneg %p162
      %p262 = pneg %p191
      %p263 = pneg %p188
      %p264 = scmp.lt.s32.totalorder %s18, 1
      %s265 = scalar_select %p264, %s18, 1
      %s266 = smul.addr %s265, 8
      %s267 = smul.addr %s266, 8
      %s268 = scalar_lea.vmem %s7, %s267
      %p269 = scmp.lt.s32.totalorder %s18, 1
      %s270 = scalar_select %p269, %s18, 1
      %s271 = smul.addr %s270, 8
      %s272 = smul.addr %s271, 8
      %s273 = scalar_lea.vmem %s0, %s272
      %p274 = scmp.lt.s32.totalorder %s18, 1
      %s275 = scalar_select %p274, %s18, 1
      %s276 = smul.addr %s275, 8
      %s277 = smul.addr %s276, 8
      %s278 = scalar_lea.vmem %s7, %s277
      %v279 = vld [vmem:[%s273] sm:$0xff]
      %v280 = vld [vmem:[%s273 + $0x8] sm:$0xff]
      %v281 = vld [vmem:[%s273 + $0x10] sm:$0xff]
      %v282 = vld [vmem:[%s273 + $0x18] sm:$0xff]
      %v283 = vld [vmem:[%s273 + $0x20] sm:$0xff]
      %v284 = vld [vmem:[%s273 + $0x28] sm:$0xff]
      %v285 = vld [vmem:[%s273 + $0x30] sm:$0xff]
      %v286 = vld [vmem:[%s273 + $0x38] sm:$0xff]
      %v287 = vld [vmem:[%s1] sm:$0xff]
      %v288 = vld [vmem:[%s1 + $0x8] sm:$0xff]
      %v289 = vld [vmem:[%s1 + $0x10] sm:$0xff]
      %v290 = vld [vmem:[%s1 + $0x18] sm:$0xff]
      %v291 = vld [vmem:[%s1 + $0x20] sm:$0xff]
      %v292 = vld [vmem:[%s1 + $0x28] sm:$0xff]
      %v293 = vld [vmem:[%s1 + $0x30] sm:$0xff]
      %v294 = vld [vmem:[%s1 + $0x38] sm:$0xff]
      %v295 = vld [vmem:[%s1 + $0x40] sm:$0xff]
      %v296 = vld [vmem:[%s1 + $0x48] sm:$0xff]
      %v297 = vld [vmem:[%s1 + $0x50] sm:$0xff]
      %v298 = vld [vmem:[%s1 + $0x58] sm:$0xff]
      %v299 = vld [vmem:[%s1 + $0x60] sm:$0xff]
      %v300 = vld [vmem:[%s1 + $0x68] sm:$0xff]
      %v301 = vld [vmem:[%s1 + $0x70] sm:$0xff]
      %v302 = vld [vmem:[%s1 + $0x78] sm:$0xff]
      %v303 = vld [vmem:[%s2] sm:$0x1]
      %v305 = vperm.slane %v303, 0
      %307 = vmatpush.msra.mxu0 %v302
      %308 = vmatpush.msra.mxu0 %v301
      %309 = vmatpush.msra.mxu0 %v300
      %310 = vmatpush.msra.mxu0 %v299
      %311 = vmatpush.msra.mxu0 %v298
      %312 = vmatpush.msra.mxu0 %v297
      %313 = vmatpush.msra.mxu0 %v296
      %314 = vmatpush.msra.mxu0 %v295
      %315 = vmatpush.msra.mxu0 %v294
      %316 = vmatpush.msra.mxu0 %v293
      %317 = vmatpush.msra.mxu0 %v292
      %318 = vmatpush.msra.mxu0 %v291
      %319 = vmatpush.msra.mxu0 %v290
      %320 = vmatpush.msra.mxu0 %v289
      %321 = vmatpush.msra.mxu0 %v288
      %322 = vmatpush.msra.mxu0 %v287
      %323 = vmatmul.f32.gmra.mxu0 %v279
      %v324 = vpop.f32.mrf.mxu0
      %v325 = vadd.f32 %v305, %v324
      %326 = vmatmul.f32.gmra.mxu0 %v280
      %v327 = vpop.f32.mrf.mxu0
      %v328 = vadd.f32 %v305, %v327
      %329 = vmatmul.f32.gmra.mxu0 %v281
      %v330 = vpop.f32.mrf.mxu0
      %v331 = vadd.f32 %v305, %v330
      %332 = vmatmul.f32.gmra.mxu0 %v282
      %v333 = vpop.f32.mrf.mxu0
      %v334 = vadd.f32 %v305, %v333
      %335 = vmatmul.f32.gmra.mxu0 %v283
      %v336 = vpop.f32.mrf.mxu0
      %v337 = vadd.f32 %v305, %v336
      %338 = vmatmul.f32.gmra.mxu0 %v284
      %v339 = vpop.f32.mrf.mxu0
      %v340 = vadd.f32 %v305, %v339
      %341 = vmatmul.f32.gmra.mxu0 %v285
      %v342 = vpop.f32.mrf.mxu0
      %v343 = vadd.f32 %v305, %v342
      %344 = vmatmul.f32.gmra.mxu0 %v286
      %v345 = vpop.f32.mrf.mxu0
      %v346 = vadd.f32 %v305, %v345
      %347 = vdwg.mxu0
      %v348 = vmax.f32 %v325, 0.0
      %v349 = vmax.f32 %v328, 0.0
      %v350 = vmax.f32 %v331, 0.0
      %v351 = vmax.f32 %v334, 0.0
      %v352 = vmax.f32 %v337, 0.0
      %v353 = vmax.f32 %v340, 0.0
      %v354 = vmax.f32 %v343, 0.0
      %v355 = vmax.f32 %v346, 0.0
      %vm356 = vcmask 64512
      %357 = vst.msk [vmem:[#allocation4] sm:$0xff] %vm356, %v348
      %358 = vst.msk [vmem:[#allocation4 + $0x8] sm:$0xff] %vm356, %v349
      %359 = vst.msk [vmem:[#allocation4 + $0x10] sm:$0xff] %vm356, %v350
      %360 = vst.msk [vmem:[#allocation4 + $0x18] sm:$0xff] %vm356, %v351
      %361 = vst.msk [vmem:[#allocation4 + $0x20] sm:$0xff] %vm356, %v352
      %362 = vst.msk [vmem:[#allocation4 + $0x28] sm:$0xff] %vm356, %v353
      %363 = vst.msk [vmem:[#allocation4 + $0x30] sm:$0xff] %vm356, %v354
      %364 = vst.msk [vmem:[#allocation4 + $0x38] sm:$0xff] %vm356, %v355
      %365 = vst.msk [vmem:[#allocation2] sm:$0xff] %vm356, 0.0
      %366 = vst.msk [vmem:[#allocation2 + $0x8] sm:$0xff] %vm356, 0.0
      %367 = vst.msk [vmem:[#allocation2 + $0x10] sm:$0xff] %vm356, 0.0
      %368 = vst.msk [vmem:[#allocation2 + $0x18] sm:$0xff] %vm356, 0.0
      %369 = vst.msk [vmem:[#allocation2 + $0x20] sm:$0xff] %vm356, 0.0
      %370 = vst.msk [vmem:[#allocation2 + $0x28] sm:$0xff] %vm356, 0.0
      %371 = vst.msk [vmem:[#allocation2 + $0x30] sm:$0xff] %vm356, 0.0
      %372 = vst.msk [vmem:[#allocation2 + $0x38] sm:$0xff] %vm356, 0.0
      %373 = vst.msk [vmem:[#allocation2 + $0x40] sm:$0xff] %vm356, 0.0
      %374 = vst.msk [vmem:[#allocation2 + $0x48] sm:$0xff] %vm356, 0.0
      %375 = vst.msk [vmem:[#allocation2 + $0x50] sm:$0xff] %vm356, 0.0
      %376 = vst.msk [vmem:[#allocation2 + $0x58] sm:$0xff] %vm356, 0.0
      %377 = vst.msk [vmem:[#allocation2 + $0x60] sm:$0xff] %vm356, 0.0
      %378 = vst.msk [vmem:[#allocation2 + $0x68] sm:$0xff] %vm356, 0.0
      %379 = vst.msk [vmem:[#allocation2 + $0x70] sm:$0xff] %vm356, 0.0
      %380 = vst.msk [vmem:[#allocation2 + $0x78] sm:$0xff] %vm356, 0.0
      %381 = vst.msk [vmem:[#allocation2 + $0x80] sm:$0xff] %vm356, 0.0
      %382 = vst.msk [vmem:[#allocation2 + $0x88] sm:$0xff] %vm356, 0.0
      %383 = vst.msk [vmem:[#allocation2 + $0x90] sm:$0xff] %vm356, 0.0
      %384 = vst.msk [vmem:[#allocation2 + $0x98] sm:$0xff] %vm356, 0.0
      %385 = vst.msk [vmem:[#allocation2 + $0xa0] sm:$0xff] %vm356, 0.0
      %386 = vst.msk [vmem:[#allocation2 + $0xa8] sm:$0xff] %vm356, 0.0
      %387 = vst.msk [vmem:[#allocation2 + $0xb0] sm:$0xff] %vm356, 0.0
      %388 = vst.msk [vmem:[#allocation2 + $0xb8] sm:$0xff] %vm356, 0.0
      %389 = vst.msk [vmem:[#allocation2 + $0xc0] sm:$0xff] %vm356, 0.0
      %390 = vst.msk [vmem:[#allocation2 + $0xc8] sm:$0xff] %vm356, 0.0
      %391 = vst.msk [vmem:[#allocation2 + $0xd0] sm:$0xff] %vm356, 0.0
      %392 = vst.msk [vmem:[#allocation2 + $0xd8] sm:$0xff] %vm356, 0.0
      %393 = vst.msk [vmem:[#allocation2 + $0xe0] sm:$0xff] %vm356, 0.0
      %394 = vst.msk [vmem:[#allocation2 + $0xe8] sm:$0xff] %vm356, 0.0
      %403 = vrot.lane.b32.xlu0 %v348, 120
      %v404 = vpop.permute.xlu0 %403
      %405 = vrot.lane.b32.xlu0 %v349, 120
      %v406 = vpop.permute.xlu0 %405
      %407 = vrot.lane.b32.xlu0 %v350, 120
      %v408 = vpop.permute.xlu0 %407
      %409 = vrot.lane.b32.xlu0 %v351, 120
      %v410 = vpop.permute.xlu0 %409
      %411 = vrot.lane.b32.xlu0 %v352, 120
      %v412 = vpop.permute.xlu0 %411
      %413 = vrot.lane.b32.xlu0 %v353, 120
      %v414 = vpop.permute.xlu0 %413
      %415 = vrot.lane.b32.xlu0 %v354, 120
      %v416 = vpop.permute.xlu0 %415
      %417 = vrot.lane.b32.xlu0 %v355, 120
      %v418 = vpop.permute.xlu0 %417
      %s427 = scalar_lea.vmem [#allocation2], 24
      %428 = vst.msk [vmem:[%s427 + $0x8] sm:$0xff] %vm356, %v404
      %429 = vst.msk [vmem:[%s427 + $0x20] sm:$0xff] %vm356, %v406
      %430 = vst.msk [vmem:[%s427 + $0x38] sm:$0xff] %vm356, %v408
      %431 = vst.msk [vmem:[%s427 + $0x50] sm:$0xff] %vm356, %v410
      %432 = vst.msk [vmem:[%s427 + $0x68] sm:$0xff] %vm356, %v412
      %433 = vst.msk [vmem:[%s427 + $0x80] sm:$0xff] %vm356, %v414
      %434 = vst.msk [vmem:[%s427 + $0x98] sm:$0xff] %vm356, %v416
      %435 = vst.msk [vmem:[%s427 + $0xb0] sm:$0xff] %vm356, %v418
      %v436 = vld [vmem:[#allocation2 + $0x7] sm:$0xff]
      %v437 = vld [vmem:[#allocation2 + $0x1f] sm:$0xff]
      %v438 = vld [vmem:[#allocation2 + $0x37] sm:$0xff]
      %v439 = vld [vmem:[#allocation2 + $0x4f] sm:$0xff]
      %v440 = vld [vmem:[#allocation2 + $0x67] sm:$0xff]
      %v441 = vld [vmem:[#allocation2 + $0x7f] sm:$0xff]
      %v442 = vld [vmem:[#allocation2 + $0x97] sm:$0xff]
      %v443 = vld [vmem:[#allocation2 + $0xaf] sm:$0xff]
      %444 = vst.msk [vmem:[#allocation3] sm:$0xff] %vm356, %v436
      %445 = vst.msk [vmem:[#allocation3 + $0x8] sm:$0xff] %vm356, %v437
      %446 = vst.msk [vmem:[#allocation3 + $0x10] sm:$0xff] %vm356, %v438
      %447 = vst.msk [vmem:[#allocation3 + $0x18] sm:$0xff] %vm356, %v439
      %448 = vst.msk [vmem:[#allocation3 + $0x20] sm:$0xff] %vm356, %v440
      %449 = vst.msk [vmem:[#allocation3 + $0x28] sm:$0xff] %vm356, %v441
      %450 = vst.msk [vmem:[#allocation3 + $0x30] sm:$0xff] %vm356, %v442
      %451 = vst.msk [vmem:[#allocation3 + $0x38] sm:$0xff] %vm356, %v443
      %v452 = vld [vmem:[#allocation2 + $0x8] sm:$0xff]
      %v453 = vld [vmem:[#allocation2 + $0x20] sm:$0xff]
      %v454 = vld [vmem:[#allocation2 + $0x38] sm:$0xff]
      %v455 = vld [vmem:[#allocation2 + $0x50] sm:$0xff]
      %v456 = vld [vmem:[#allocation2 + $0x68] sm:$0xff]
      %v457 = vld [vmem:[#allocation2 + $0x80] sm:$0xff]
      %v458 = vld [vmem:[#allocation2 + $0x98] sm:$0xff]
      %v459 = vld [vmem:[#allocation2 + $0xb0] sm:$0xff]
      %468 = vrot.lane.b32.xlu0 %v452, 8
      %v469 = vpop.permute.xlu0 %468
      %470 = vrot.lane.b32.xlu0 %v453, 8
      %v471 = vpop.permute.xlu0 %470
      %472 = vrot.lane.b32.xlu0 %v454, 8
      %v473 = vpop.permute.xlu0 %472
      %474 = vrot.lane.b32.xlu0 %v455, 8
      %v475 = vpop.permute.xlu0 %474
      %476 = vrot.lane.b32.xlu0 %v456, 8
      %v477 = vpop.permute.xlu0 %476
      %478 = vrot.lane.b32.xlu0 %v457, 8
      %v479 = vpop.permute.xlu0 %478
      %480 = vrot.lane.b32.xlu0 %v458, 8
      %v481 = vpop.permute.xlu0 %480
      %482 = vrot.lane.b32.xlu0 %v459, 8
      %v483 = vpop.permute.xlu0 %482
      %vm492 = vcmask 130112
      %493 = vst.msk [vmem:[#allocation3] sm:$0xff] %vm492, %v469
      %494 = vst.msk [vmem:[#allocation3 + $0x8] sm:$0xff] %vm492, %v471
      %495 = vst.msk [vmem:[#allocation3 + $0x10] sm:$0xff] %vm492, %v473
      %496 = vst.msk [vmem:[#allocation3 + $0x18] sm:$0xff] %vm492, %v475
      %497 = vst.msk [vmem:[#allocation3 + $0x20] sm:$0xff] %vm492, %v477
      %498 = vst.msk [vmem:[#allocation3 + $0x28] sm:$0xff] %vm492, %v479
      %499 = vst.msk [vmem:[#allocation3 + $0x30] sm:$0xff] %vm492, %v481
      %500 = vst.msk [vmem:[#allocation3 + $0x38] sm:$0xff] %vm492, %v483
      %v501 = vld [vmem:[#allocation2 + $0x9] sm:$0xff]
      %v502 = vld [vmem:[#allocation2 + $0x21] sm:$0xff]
      %v503 = vld [vmem:[#allocation2 + $0x39] sm:$0xff]
      %v504 = vld [vmem:[#allocation2 + $0x51] sm:$0xff]
      %v505 = vld [vmem:[#allocation2 + $0x69] sm:$0xff]
      %v506 = vld [vmem:[#allocation2 + $0x81] sm:$0xff]
      %v507 = vld [vmem:[#allocation2 + $0x99] sm:$0xff]
      %v508 = vld [vmem:[#allocation2 + $0xb1] sm:$0xff]
      %517 = vrot.lane.b32.xlu0 %v501, 16
      %v518 = vpop.permute.xlu0 %517
      %519 = vrot.lane.b32.xlu0 %v502, 16
      %v520 = vpop.permute.xlu0 %519
      %521 = vrot.lane.b32.xlu0 %v503, 16
      %v522 = vpop.permute.xlu0 %521
      %523 = vrot.lane.b32.xlu0 %v504, 16
      %v524 = vpop.permute.xlu0 %523
      %525 = vrot.lane.b32.xlu0 %v505, 16
      %v526 = vpop.permute.xlu0 %525
      %527 = vrot.lane.b32.xlu0 %v506, 16
      %v528 = vpop.permute.xlu0 %527
      %529 = vrot.lane.b32.xlu0 %v507, 16
      %v530 = vpop.permute.xlu0 %529
      %531 = vrot.lane.b32.xlu0 %v508, 16
      %v532 = vpop.permute.xlu0 %531
      %vm541 = vcmask 195712
      %542 = vst.msk [vmem:[#allocation3] sm:$0xff] %vm541, %v518
      %543 = vst.msk [vmem:[#allocation3 + $0x8] sm:$0xff] %vm541, %v520
      %544 = vst.msk [vmem:[#allocation3 + $0x10] sm:$0xff] %vm541, %v522
      %545 = vst.msk [vmem:[#allocation3 + $0x18] sm:$0xff] %vm541, %v524
      %546 = vst.msk [vmem:[#allocation3 + $0x20] sm:$0xff] %vm541, %v526
      %547 = vst.msk [vmem:[#allocation3 + $0x28] sm:$0xff] %vm541, %v528
      %548 = vst.msk [vmem:[#allocation3 + $0x30] sm:$0xff] %vm541, %v530
      %549 = vst.msk [vmem:[#allocation3 + $0x38] sm:$0xff] %vm541, %v532
      %v550 = vld [vmem:[%s427 + $0x7] sm:$0xff]
      %v551 = vld [vmem:[%s427 + $0x1f] sm:$0xff]
      %v552 = vld [vmem:[%s427 + $0x37] sm:$0xff]
      %v553 = vld [vmem:[%s427 + $0x4f] sm:$0xff]
      %v554 = vld [vmem:[%s427 + $0x67] sm:$0xff]
      %v555 = vld [vmem:[%s427 + $0x7f] sm:$0xff]
      %v556 = vld [vmem:[%s427 + $0x97] sm:$0xff]
      %v557 = vld [vmem:[%s427 + $0xaf] sm:$0xff]
      %566 = vrot.lane.b32.xlu0 %v550, 24
      %v567 = vpop.permute.xlu0 %566
      %568 = vrot.lane.b32.xlu0 %v551, 24
      %v569 = vpop.permute.xlu0 %568
      %570 = vrot.lane.b32.xlu0 %v552, 24
      %v571 = vpop.permute.xlu0 %570
      %572 = vrot.lane.b32.xlu0 %v553, 24
      %v573 = vpop.permute.xlu0 %572
      %574 = vrot.lane.b32.xlu0 %v554, 24
      %v575 = vpop.permute.xlu0 %574
      %576 = vrot.lane.b32.xlu0 %v555, 24
      %v577 = vpop.permute.xlu0 %576
      %578 = vrot.lane.b32.xlu0 %v556, 24
      %v579 = vpop.permute.xlu0 %578
      %580 = vrot.lane.b32.xlu0 %v557, 24
      %v581 = vpop.permute.xlu0 %580
      %vm590 = vcmask 261312
      %591 = vst.msk [vmem:[#allocation3] sm:$0xff] %vm590, %v567
      %592 = vst.msk [vmem:[#allocation3 + $0x8] sm:$0xff] %vm590, %v569
      %593 = vst.msk [vmem:[#allocation3 + $0x10] sm:$0xff] %vm590, %v571
      %594 = vst.msk [vmem:[#allocation3 + $0x18] sm:$0xff] %vm590, %v573
      %595 = vst.msk [vmem:[#allocation3 + $0x20] sm:$0xff] %vm590, %v575
      %596 = vst.msk [vmem:[#allocation3 + $0x28] sm:$0xff] %vm590, %v577
      %597 = vst.msk [vmem:[#allocation3 + $0x30] sm:$0xff] %vm590, %v579
      %598 = vst.msk [vmem:[#allocation3 + $0x38] sm:$0xff] %vm590, %v581
      %v599 = vld [vmem:[%s427 + $0x8] sm:$0xff]
      %v600 = vld [vmem:[%s427 + $0x20] sm:$0xff]
      %v601 = vld [vmem:[%s427 + $0x38] sm:$0xff]
      %v602 = vld [vmem:[%s427 + $0x50] sm:$0xff]
      %v603 = vld [vmem:[%s427 + $0x68] sm:$0xff]
      %v604 = vld [vmem:[%s427 + $0x80] sm:$0xff]
      %v605 = vld [vmem:[%s427 + $0x98] sm:$0xff]
      %v606 = vld [vmem:[%s427 + $0xb0] sm:$0xff]
      %615 = vrot.lane.b32.xlu0 %v599, 32
      %v616 = vpop.permute.xlu0 %615
      %617 = vrot.lane.b32.xlu0 %v600, 32
      %v618 = vpop.permute.xlu0 %617
      %619 = vrot.lane.b32.xlu0 %v601, 32
      %v620 = vpop.permute.xlu0 %619
      %621 = vrot.lane.b32.xlu0 %v602, 32
      %v622 = vpop.permute.xlu0 %621
      %623 = vrot.lane.b32.xlu0 %v603, 32
      %v624 = vpop.permute.xlu0 %623
      %625 = vrot.lane.b32.xlu0 %v604, 32
      %v626 = vpop.permute.xlu0 %625
      %627 = vrot.lane.b32.xlu0 %v605, 32
      %v628 = vpop.permute.xlu0 %627
      %629 = vrot.lane.b32.xlu0 %v606, 32
      %v630 = vpop.permute.xlu0 %629
      %vm639 = vcmask 326912
      %640 = vst.msk [vmem:[#allocation3] sm:$0xff] %vm639, %v616
      %641 = vst.msk [vmem:[#allocation3 + $0x8] sm:$0xff] %vm639, %v618
      %642 = vst.msk [vmem:[#allocation3 + $0x10] sm:$0xff] %vm639, %v620
      %643 = vst.msk [vmem:[#allocation3 + $0x18] sm:$0xff] %vm639, %v622
      %644 = vst.msk [vmem:[#allocation3 + $0x20] sm:$0xff] %vm639, %v624
      %645 = vst.msk [vmem:[#allocation3 + $0x28] sm:$0xff] %vm639, %v626
      %646 = vst.msk [vmem:[#allocation3 + $0x30] sm:$0xff] %vm639, %v628
      %647 = vst.msk [vmem:[#allocation3 + $0x38] sm:$0xff] %vm639, %v630
      %v648 = vld [vmem:[%s427 + $0x9] sm:$0xff]
      %v649 = vld [vmem:[%s427 + $0x21] sm:$0xff]
      %v650 = vld [vmem:[%s427 + $0x39] sm:$0xff]
      %v651 = vld [vmem:[%s427 + $0x51] sm:$0xff]
      %v652 = vld [vmem:[%s427 + $0x69] sm:$0xff]
      %v653 = vld [vmem:[%s427 + $0x81] sm:$0xff]
      %v654 = vld [vmem:[%s427 + $0x99] sm:$0xff]
      %v655 = vld [vmem:[%s427 + $0xb1] sm:$0xff]
      %664 = vrot.lane.b32.xlu0 %v648, 40
      %v665 = vpop.permute.xlu0 %664
      %666 = vrot.lane.b32.xlu0 %v649, 40
      %v667 = vpop.permute.xlu0 %666
      %668 = vrot.lane.b32.xlu0 %v650, 40
      %v669 = vpop.permute.xlu0 %668
      %670 = vrot.lane.b32.xlu0 %v651, 40
      %v671 = vpop.permute.xlu0 %670
      %672 = vrot.lane.b32.xlu0 %v652, 40
      %v673 = vpop.permute.xlu0 %672
      %674 = vrot.lane.b32.xlu0 %v653, 40
      %v675 = vpop.permute.xlu0 %674
      %676 = vrot.lane.b32.xlu0 %v654, 40
      %v677 = vpop.permute.xlu0 %676
      %678 = vrot.lane.b32.xlu0 %v655, 40
      %v679 = vpop.permute.xlu0 %678
      %vm688 = vcmask 392512
      %689 = vst.msk [vmem:[#allocation3] sm:$0xff] %vm688, %v665
      %690 = vst.msk [vmem:[#allocation3 + $0x8] sm:$0xff] %vm688, %v667
      %691 = vst.msk [vmem:[#allocation3 + $0x10] sm:$0xff] %vm688, %v669
      %692 = vst.msk [vmem:[#allocation3 + $0x18] sm:$0xff] %vm688, %v671
      %693 = vst.msk [vmem:[#allocation3 + $0x20] sm:$0xff] %vm688, %v673
      %694 = vst.msk [vmem:[#allocation3 + $0x28] sm:$0xff] %vm688, %v675
      %695 = vst.msk [vmem:[#allocation3 + $0x30] sm:$0xff] %vm688, %v677
      %696 = vst.msk [vmem:[#allocation3 + $0x38] sm:$0xff] %vm688, %v679
      %s697 = scalar_lea.vmem [#allocation2], 48
      %v698 = vld [vmem:[%s697 + $0x7] sm:$0xff]
      %v699 = vld [vmem:[%s697 + $0x1f] sm:$0xff]
      %v700 = vld [vmem:[%s697 + $0x37] sm:$0xff]
      %v701 = vld [vmem:[%s697 + $0x4f] sm:$0xff]
      %v702 = vld [vmem:[%s697 + $0x67] sm:$0xff]
      %v703 = vld [vmem:[%s697 + $0x7f] sm:$0xff]
      %v704 = vld [vmem:[%s697 + $0x97] sm:$0xff]
      %v705 = vld [vmem:[%s697 + $0xaf] sm:$0xff]
      %714 = vrot.lane.b32.xlu0 %v698, 48
      %v715 = vpop.permute.xlu0 %714
      %716 = vrot.lane.b32.xlu0 %v699, 48
      %v717 = vpop.permute.xlu0 %716
      %718 = vrot.lane.b32.xlu0 %v700, 48
      %v719 = vpop.permute.xlu0 %718
      %720 = vrot.lane.b32.xlu0 %v701, 48
      %v721 = vpop.permute.xlu0 %720
      %722 = vrot.lane.b32.xlu0 %v702, 48
      %v723 = vpop.permute.xlu0 %722
      %724 = vrot.lane.b32.xlu0 %v703, 48
      %v725 = vpop.permute.xlu0 %724
      %726 = vrot.lane.b32.xlu0 %v704, 48
      %v727 = vpop.permute.xlu0 %726
      %728 = vrot.lane.b32.xlu0 %v705, 48
      %v729 = vpop.permute.xlu0 %728
      %vm738 = vcmask 458112
      %739 = vst.msk [vmem:[#allocation3] sm:$0xff] %vm738, %v715
      %740 = vst.msk [vmem:[#allocation3 + $0x8] sm:$0xff] %vm738, %v717
      %741 = vst.msk [vmem:[#allocation3 + $0x10] sm:$0xff] %vm738, %v719
      %742 = vst.msk [vmem:[#allocation3 + $0x18] sm:$0xff] %vm738, %v721
      %743 = vst.msk [vmem:[#allocation3 + $0x20] sm:$0xff] %vm738, %v723
      %744 = vst.msk [vmem:[#allocation3 + $0x28] sm:$0xff] %vm738, %v725
      %745 = vst.msk [vmem:[#allocation3 + $0x30] sm:$0xff] %vm738, %v727
      %746 = vst.msk [vmem:[#allocation3 + $0x38] sm:$0xff] %vm738, %v729
      %v747 = vld [vmem:[%s697 + $0x8] sm:$0xff]
      %v748 = vld [vmem:[%s697 + $0x20] sm:$0xff]
      %v749 = vld [vmem:[%s697 + $0x38] sm:$0xff]
      %v750 = vld [vmem:[%s697 + $0x50] sm:$0xff]
      %v751 = vld [vmem:[%s697 + $0x68] sm:$0xff]
      %v752 = vld [vmem:[%s697 + $0x80] sm:$0xff]
      %v753 = vld [vmem:[%s697 + $0x98] sm:$0xff]
      %v754 = vld [vmem:[%s697 + $0xb0] sm:$0xff]
      %763 = vrot.lane.b32.xlu0 %v747, 56
      %v764 = vpop.permute.xlu0 %763
      %765 = vrot.lane.b32.xlu0 %v748, 56
      %v766 = vpop.permute.xlu0 %765
      %767 = vrot.lane.b32.xlu0 %v749, 56
      %v768 = vpop.permute.xlu0 %767
      %769 = vrot.lane.b32.xlu0 %v750, 56
      %v770 = vpop.permute.xlu0 %769
      %771 = vrot.lane.b32.xlu0 %v751, 56
      %v772 = vpop.permute.xlu0 %771
      %773 = vrot.lane.b32.xlu0 %v752, 56
      %v774 = vpop.permute.xlu0 %773
      %775 = vrot.lane.b32.xlu0 %v753, 56
      %v776 = vpop.permute.xlu0 %775
      %777 = vrot.lane.b32.xlu0 %v754, 56
      %v778 = vpop.permute.xlu0 %777
      %vm787 = vcmask 523712
      %788 = vst.msk [vmem:[#allocation3] sm:$0xff] %vm787, %v764
      %789 = vst.msk [vmem:[#allocation3 + $0x8] sm:$0xff] %vm787, %v766
      %790 = vst.msk [vmem:[#allocation3 + $0x10] sm:$0xff] %vm787, %v768
      %791 = vst.msk [vmem:[#allocation3 + $0x18] sm:$0xff] %vm787, %v770
      %792 = vst.msk [vmem:[#allocation3 + $0x20] sm:$0xff] %vm787, %v772
      %793 = vst.msk [vmem:[#allocation3 + $0x28] sm:$0xff] %vm787, %v774
      %794 = vst.msk [vmem:[#allocation3 + $0x30] sm:$0xff] %vm787, %v776
      %795 = vst.msk [vmem:[#allocation3 + $0x38] sm:$0xff] %vm787, %v778
      %v796 = vld [vmem:[%s697 + $0x9] sm:$0xff]
      %v797 = vld [vmem:[%s697 + $0x21] sm:$0xff]
      %v798 = vld [vmem:[%s697 + $0x39] sm:$0xff]
      %v799 = vld [vmem:[%s697 + $0x51] sm:$0xff]
      %v800 = vld [vmem:[%s697 + $0x69] sm:$0xff]
      %v801 = vld [vmem:[%s697 + $0x81] sm:$0xff]
      %v802 = vld [vmem:[%s697 + $0x99] sm:$0xff]
      %v803 = vld [vmem:[%s697 + $0xb1] sm:$0xff]
      %812 = vrot.lane.b32.xlu0 %v796, 64
      %v813 = vpop.permute.xlu0 %812
      %814 = vrot.lane.b32.xlu0 %v797, 64
      %v815 = vpop.permute.xlu0 %814
      %816 = vrot.lane.b32.xlu0 %v798, 64
      %v817 = vpop.permute.xlu0 %816
      %818 = vrot.lane.b32.xlu0 %v799, 64
      %v819 = vpop.permute.xlu0 %818
      %820 = vrot.lane.b32.xlu0 %v800, 64
      %v821 = vpop.permute.xlu0 %820
      %822 = vrot.lane.b32.xlu0 %v801, 64
      %v823 = vpop.permute.xlu0 %822
      %824 = vrot.lane.b32.xlu0 %v802, 64
      %v825 = vpop.permute.xlu0 %824
      %826 = vrot.lane.b32.xlu0 %v803, 64
      %v827 = vpop.permute.xlu0 %826
      %vm836 = vcmask 589312
      %837 = vst.msk [vmem:[#allocation3] sm:$0xff] %vm836, %v813
      %838 = vst.msk [vmem:[#allocation3 + $0x8] sm:$0xff] %vm836, %v815
      %839 = vst.msk [vmem:[#allocation3 + $0x10] sm:$0xff] %vm836, %v817
      %840 = vst.msk [vmem:[#allocation3 + $0x18] sm:$0xff] %vm836, %v819
      %841 = vst.msk [vmem:[#allocation3 + $0x20] sm:$0xff] %vm836, %v821
      %842 = vst.msk [vmem:[#allocation3 + $0x28] sm:$0xff] %vm836, %v823
      %843 = vst.msk [vmem:[#allocation3 + $0x30] sm:$0xff] %vm836, %v825
      %844 = vst.msk [vmem:[#allocation3 + $0x38] sm:$0xff] %vm836, %v827
      %v845 = vld [vmem:[#allocation3] sm:$0xff]
      %v846 = vld [vmem:[#allocation3 + $0x8] sm:$0xff]
      %v847 = vld [vmem:[#allocation3 + $0x10] sm:$0xff]
      %v848 = vld [vmem:[#allocation3 + $0x18] sm:$0xff]
      %v849 = vld [vmem:[#allocation3 + $0x20] sm:$0xff]
      %v850 = vld [vmem:[#allocation3 + $0x28] sm:$0xff]
      %v851 = vld [vmem:[#allocation3 + $0x30] sm:$0xff]
      %v852 = vld [vmem:[#allocation3 + $0x38] sm:$0xff]
      %v853 = vld [vmem:[%s3] sm:$0xff]
      %v854 = vld [vmem:[%s3 + $0x8] sm:$0xff]
      %v855 = vld [vmem:[%s3 + $0x10] sm:$0xff]
      %v856 = vld [vmem:[%s3 + $0x18] sm:$0xff]
      %v857 = vld [vmem:[%s3 + $0x20] sm:$0xff]
      %v858 = vld [vmem:[%s3 + $0x28] sm:$0xff]
      %v859 = vld [vmem:[%s3 + $0x30] sm:$0xff]
      %v860 = vld [vmem:[%s3 + $0x38] sm:$0xff]
      %v861 = vld [vmem:[%s3 + $0x40] sm:$0xff]
      %v862 = vld [vmem:[%s4] sm:$0x1]
      %v864 = vperm.slane %v862, 0
      %vm866 = vcmask 588800
      %v868 = vsel %vm866, %v845, 0
      %v871 = vsel %vm866, %v846, 0
      %v874 = vsel %vm866, %v847, 0
      %v877 = vsel %vm866, %v848, 0
      %v880 = vsel %vm866, %v849, 0
      %v883 = vsel %vm866, %v850, 0
      %v886 = vsel %vm866, %v851, 0
      %v889 = vsel %vm866, %v852, 0
      %891 = vmatpush.msra.mxu0 0.0
      %892 = vmatpush.msra.mxu0 0.0
      %893 = vmatpush.msra.mxu0 0.0
      %894 = vmatpush.msra.mxu0 0.0
      %895 = vmatpush.msra.mxu0 0.0
      %896 = vmatpush.msra.mxu0 0.0
      %897 = vmatpush.msra.mxu0 0.0
      %898 = vmatpush.msra.mxu0 %v861
      %899 = vmatpush.msra.mxu0 %v860
      %900 = vmatpush.msra.mxu0 %v859
      %901 = vmatpush.msra.mxu0 %v858
      %902 = vmatpush.msra.mxu0 %v857
      %903 = vmatpush.msra.mxu0 %v856
      %904 = vmatpush.msra.mxu0 %v855
      %905 = vmatpush.msra.mxu0 %v854
      %906 = vmatpush.msra.mxu0 %v853
      %907 = vmatmul.f32.gmra.mxu0 %v868
      %v908 = vpop.f32.mrf.mxu0
      %v909 = vadd.f32 %v864, %v908
      %910 = vmatmul.f32.gmra.mxu0 %v871
      %v911 = vpop.f32.mrf.mxu0
      %v912 = vadd.f32 %v864, %v911
      %913 = vmatmul.f32.gmra.mxu0 %v874
      %v914 = vpop.f32.mrf.mxu0
      %v915 = vadd.f32 %v864, %v914
      %916 = vmatmul.f32.gmra.mxu0 %v877
      %v917 = vpop.f32.mrf.mxu0
      %v918 = vadd.f32 %v864, %v917
      %919 = vmatmul.f32.gmra.mxu0 %v880
      %v920 = vpop.f32.mrf.mxu0
      %v921 = vadd.f32 %v864, %v920
      %922 = vmatmul.f32.gmra.mxu0 %v883
      %v923 = vpop.f32.mrf.mxu0
      %v924 = vadd.f32 %v864, %v923
      %925 = vmatmul.f32.gmra.mxu0 %v886
      %v926 = vpop.f32.mrf.mxu0
      %v927 = vadd.f32 %v864, %v926
      %928 = vmatmul.f32.gmra.mxu0 %v889
      %v929 = vpop.f32.mrf.mxu0
      %v930 = vadd.f32 %v864, %v929
      %931 = vdwg.mxu0
      %v932 = vmax.f32 %v909, 0.0
      %v933 = vmax.f32 %v912, 0.0
      %v934 = vmax.f32 %v915, 0.0
      %v935 = vmax.f32 %v918, 0.0
      %v936 = vmax.f32 %v921, 0.0
      %v937 = vmax.f32 %v924, 0.0
      %v938 = vmax.f32 %v927, 0.0
      %v939 = vmax.f32 %v930, 0.0
      %948 = vrot.lane.b32.xlu0 %v932, 8
      %v949 = vpop.permute.xlu0 %948
      %950 = vrot.lane.b32.xlu0 %v933, 8
      %v951 = vpop.permute.xlu0 %950
      %952 = vrot.lane.b32.xlu0 %v934, 8
      %v953 = vpop.permute.xlu0 %952
      %954 = vrot.lane.b32.xlu0 %v935, 8
      %v955 = vpop.permute.xlu0 %954
      %956 = vrot.lane.b32.xlu0 %v936, 8
      %v957 = vpop.permute.xlu0 %956
      %958 = vrot.lane.b32.xlu0 %v937, 8
      %v959 = vpop.permute.xlu0 %958
      %960 = vrot.lane.b32.xlu0 %v938, 8
      %v961 = vpop.permute.xlu0 %960
      %962 = vrot.lane.b32.xlu0 %v939, 8
      %v963 = vpop.permute.xlu0 %962
      %972 = vst.msk [vmem:[#allocation4] sm:$0xff] %vm492, %v949
      %973 = vst.msk [vmem:[#allocation4 + $0x8] sm:$0xff] %vm492, %v951
      %974 = vst.msk [vmem:[#allocation4 + $0x10] sm:$0xff] %vm492, %v953
      %975 = vst.msk [vmem:[#allocation4 + $0x18] sm:$0xff] %vm492, %v955
      %976 = vst.msk [vmem:[#allocation4 + $0x20] sm:$0xff] %vm492, %v957
      %977 = vst.msk [vmem:[#allocation4 + $0x28] sm:$0xff] %vm492, %v959
      %978 = vst.msk [vmem:[#allocation4 + $0x30] sm:$0xff] %vm492, %v961
      %979 = vst.msk [vmem:[#allocation4 + $0x38] sm:$0xff] %vm492, %v963
      %980 = vrot.lane.b32.xlu0 %v932, 16
      %v981 = vpop.permute.xlu0 %980
      %982 = vrot.lane.b32.xlu0 %v933, 16
      %v983 = vpop.permute.xlu0 %982
      %984 = vrot.lane.b32.xlu0 %v934, 16
      %v985 = vpop.permute.xlu0 %984
      %986 = vrot.lane.b32.xlu0 %v935, 16
      %v987 = vpop.permute.xlu0 %986
      %988 = vrot.lane.b32.xlu0 %v936, 16
      %v989 = vpop.permute.xlu0 %988
      %990 = vrot.lane.b32.xlu0 %v937, 16
      %v991 = vpop.permute.xlu0 %990
      %992 = vrot.lane.b32.xlu0 %v938, 16
      %v993 = vpop.permute.xlu0 %992
      %994 = vrot.lane.b32.xlu0 %v939, 16
      %v995 = vpop.permute.xlu0 %994
      %v1004 = vadd.f32 %v348, %v981
      %v1005 = vadd.f32 %v349, %v983
      %v1006 = vadd.f32 %v350, %v985
      %v1007 = vadd.f32 %v351, %v987
      %v1008 = vadd.f32 %v352, %v989
      %v1009 = vadd.f32 %v353, %v991
      %v1010 = vadd.f32 %v354, %v993
      %v1011 = vadd.f32 %v355, %v995
      %1020 = vrot.lane.b32.xlu0 %v1004, 112
      %v1021 = vpop.permute.xlu0 %1020
      %1022 = vrot.lane.b32.xlu0 %v1005, 112
      %v1023 = vpop.permute.xlu0 %1022
      %1024 = vrot.lane.b32.xlu0 %v1006, 112
      %v1025 = vpop.permute.xlu0 %1024
      %1026 = vrot.lane.b32.xlu0 %v1007, 112
      %v1027 = vpop.permute.xlu0 %1026
      %1028 = vrot.lane.b32.xlu0 %v1008, 112
      %v1029 = vpop.permute.xlu0 %1028
      %1030 = vrot.lane.b32.xlu0 %v1009, 112
      %v1031 = vpop.permute.xlu0 %1030
      %1032 = vrot.lane.b32.xlu0 %v1010, 112
      %v1033 = vpop.permute.xlu0 %1032
      %1034 = vrot.lane.b32.xlu0 %v1011, 112
      %v1035 = vpop.permute.xlu0 %1034
      %1044 = vst.msk [vmem:[%s427 + $0x8] sm:$0xff] %vm356, %v1021
      %1045 = vst.msk [vmem:[%s427 + $0x20] sm:$0xff] %vm356, %v1023
      %1046 = vst.msk [vmem:[%s427 + $0x38] sm:$0xff] %vm356, %v1025
      %1047 = vst.msk [vmem:[%s427 + $0x50] sm:$0xff] %vm356, %v1027
      %1048 = vst.msk [vmem:[%s427 + $0x68] sm:$0xff] %vm356, %v1029
      %1049 = vst.msk [vmem:[%s427 + $0x80] sm:$0xff] %vm356, %v1031
      %1050 = vst.msk [vmem:[%s427 + $0x98] sm:$0xff] %vm356, %v1033
      %1051 = vst.msk [vmem:[%s427 + $0xb0] sm:$0xff] %vm356, %v1035
      %v1052 = vld [vmem:[#allocation2 + $0x7] sm:$0xff]
      %v1053 = vld [vmem:[#allocation2 + $0x1f] sm:$0xff]
      %v1054 = vld [vmem:[#allocation2 + $0x37] sm:$0xff]
      %v1055 = vld [vmem:[#allocation2 + $0x4f] sm:$0xff]
      %v1056 = vld [vmem:[#allocation2 + $0x67] sm:$0xff]
      %v1057 = vld [vmem:[#allocation2 + $0x7f] sm:$0xff]
      %v1058 = vld [vmem:[#allocation2 + $0x97] sm:$0xff]
      %v1059 = vld [vmem:[#allocation2 + $0xaf] sm:$0xff]
      %1060 = vst.msk [vmem:[#allocation3] sm:$0xff] %vm356, %v1052
      %1061 = vst.msk [vmem:[#allocation3 + $0x8] sm:$0xff] %vm356, %v1053
      %1062 = vst.msk [vmem:[#allocation3 + $0x10] sm:$0xff] %vm356, %v1054
      %1063 = vst.msk [vmem:[#allocation3 + $0x18] sm:$0xff] %vm356, %v1055
      %1064 = vst.msk [vmem:[#allocation3 + $0x20] sm:$0xff] %vm356, %v1056
      %1065 = vst.msk [vmem:[#allocation3 + $0x28] sm:$0xff] %vm356, %v1057
      %1066 = vst.msk [vmem:[#allocation3 + $0x30] sm:$0xff] %vm356, %v1058
      %1067 = vst.msk [vmem:[#allocation3 + $0x38] sm:$0xff] %vm356, %v1059
      %v1068 = vld [vmem:[#allocation2 + $0x8] sm:$0xff]
      %v1069 = vld [vmem:[#allocation2 + $0x20] sm:$0xff]
      %v1070 = vld [vmem:[#allocation2 + $0x38] sm:$0xff]
      %v1071 = vld [vmem:[#allocation2 + $0x50] sm:$0xff]
      %v1072 = vld [vmem:[#allocation2 + $0x68] sm:$0xff]
      %v1073 = vld [vmem:[#allocation2 + $0x80] sm:$0xff]
      %v1074 = vld [vmem:[#allocation2 + $0x98] sm:$0xff]
      %v1075 = vld [vmem:[#allocation2 + $0xb0] sm:$0xff]
      %1084 = vrot.lane.b32.xlu0 %v1068, 8
      %v1085 = vpop.permute.xlu0 %1084
      %1086 = vrot.lane.b32.xlu0 %v1069, 8
      %v1087 = vpop.permute.xlu0 %1086
      %1088 = vrot.lane.b32.xlu0 %v1070, 8
      %v1089 = vpop.permute.xlu0 %1088
      %1090 = vrot.lane.b32.xlu0 %v1071, 8
      %v1091 = vpop.permute.xlu0 %1090
      %1092 = vrot.lane.b32.xlu0 %v1072, 8
      %v1093 = vpop.permute.xlu0 %1092
      %1094 = vrot.lane.b32.xlu0 %v1073, 8
      %v1095 = vpop.permute.xlu0 %1094
      %1096 = vrot.lane.b32.xlu0 %v1074, 8
      %v1097 = vpop.permute.xlu0 %1096
      %1098 = vrot.lane.b32.xlu0 %v1075, 8
      %v1099 = vpop.permute.xlu0 %1098
      %1108 = vst.msk [vmem:[#allocation3] sm:$0xff] %vm492, %v1085
      %1109 = vst.msk [vmem:[#allocation3 + $0x8] sm:$0xff] %vm492, %v1087
      %1110 = vst.msk [vmem:[#allocation3 + $0x10] sm:$0xff] %vm492, %v1089
      %1111 = vst.msk [vmem:[#allocation3 + $0x18] sm:$0xff] %vm492, %v1091
      %1112 = vst.msk [vmem:[#allocation3 + $0x20] sm:$0xff] %vm492, %v1093
      %1113 = vst.msk [vmem:[#allocation3 + $0x28] sm:$0xff] %vm492, %v1095
      %1114 = vst.msk [vmem:[#allocation3 + $0x30] sm:$0xff] %vm492, %v1097
      %1115 = vst.msk [vmem:[#allocation3 + $0x38] sm:$0xff] %vm492, %v1099
      %v1116 = vld [vmem:[#allocation2 + $0x9] sm:$0xff]
      %v1117 = vld [vmem:[#allocation2 + $0x21] sm:$0xff]
      %v1118 = vld [vmem:[#allocation2 + $0x39] sm:$0xff]
      %v1119 = vld [vmem:[#allocation2 + $0x51] sm:$0xff]
      %v1120 = vld [vmem:[#allocation2 + $0x69] sm:$0xff]
      %v1121 = vld [vmem:[#allocation2 + $0x81] sm:$0xff]
      %v1122 = vld [vmem:[#allocation2 + $0x99] sm:$0xff]
      %v1123 = vld [vmem:[#allocation2 + $0xb1] sm:$0xff]
      %1132 = vrot.lane.b32.xlu0 %v1116, 16
      %v1133 = vpop.permute.xlu0 %1132
      %1134 = vrot.lane.b32.xlu0 %v1117, 16
      %v1135 = vpop.permute.xlu0 %1134
      %1136 = vrot.lane.b32.xlu0 %v1118, 16
      %v1137 = vpop.permute.xlu0 %1136
      %1138 = vrot.lane.b32.xlu0 %v1119, 16
      %v1139 = vpop.permute.xlu0 %1138
      %1140 = vrot.lane.b32.xlu0 %v1120, 16
      %v1141 = vpop.permute.xlu0 %1140
      %1142 = vrot.lane.b32.xlu0 %v1121, 16
      %v1143 = vpop.permute.xlu0 %1142
      %1144 = vrot.lane.b32.xlu0 %v1122, 16
      %v1145 = vpop.permute.xlu0 %1144
      %1146 = vrot.lane.b32.xlu0 %v1123, 16
      %v1147 = vpop.permute.xlu0 %1146
      %1156 = vst.msk [vmem:[#allocation3] sm:$0xff] %vm541, %v1133
      %1157 = vst.msk [vmem:[#allocation3 + $0x8] sm:$0xff] %vm541, %v1135
      %1158 = vst.msk [vmem:[#allocation3 + $0x10] sm:$0xff] %vm541, %v1137
      %1159 = vst.msk [vmem:[#allocation3 + $0x18] sm:$0xff] %vm541, %v1139
      %1160 = vst.msk [vmem:[#allocation3 + $0x20] sm:$0xff] %vm541, %v1141
      %1161 = vst.msk [vmem:[#allocation3 + $0x28] sm:$0xff] %vm541, %v1143
      %1162 = vst.msk [vmem:[#allocation3 + $0x30] sm:$0xff] %vm541, %v1145
      %1163 = vst.msk [vmem:[#allocation3 + $0x38] sm:$0xff] %vm541, %v1147
      %v1164 = vld [vmem:[%s427 + $0x7] sm:$0xff]
      %v1165 = vld [vmem:[%s427 + $0x1f] sm:$0xff]
      %v1166 = vld [vmem:[%s427 + $0x37] sm:$0xff]
      %v1167 = vld [vmem:[%s427 + $0x4f] sm:$0xff]
      %v1168 = vld [vmem:[%s427 + $0x67] sm:$0xff]
      %v1169 = vld [vmem:[%s427 + $0x7f] sm:$0xff]
      %v1170 = vld [vmem:[%s427 + $0x97] sm:$0xff]
      %v1171 = vld [vmem:[%s427 + $0xaf] sm:$0xff]
      %1180 = vrot.lane.b32.xlu0 %v1164, 24
      %v1181 = vpop.permute.xlu0 %1180
      %1182 = vrot.lane.b32.xlu0 %v1165, 24
      %v1183 = vpop.permute.xlu0 %1182
      %1184 = vrot.lane.b32.xlu0 %v1166, 24
      %v1185 = vpop.permute.xlu0 %1184
      %1186 = vrot.lane.b32.xlu0 %v1167, 24
      %v1187 = vpop.permute.xlu0 %1186
      %1188 = vrot.lane.b32.xlu0 %v1168, 24
      %v1189 = vpop.permute.xlu0 %1188
      %1190 = vrot.lane.b32.xlu0 %v1169, 24
      %v1191 = vpop.permute.xlu0 %1190
      %1192 = vrot.lane.b32.xlu0 %v1170, 24
      %v1193 = vpop.permute.xlu0 %1192
      %1194 = vrot.lane.b32.xlu0 %v1171, 24
      %v1195 = vpop.permute.xlu0 %1194
      %1204 = vst.msk [vmem:[#allocation3] sm:$0xff] %vm590, %v1181
      %1205 = vst.msk [vmem:[#allocation3 + $0x8] sm:$0xff] %vm590, %v1183
      %1206 = vst.msk [vmem:[#allocation3 + $0x10] sm:$0xff] %vm590, %v1185
      %1207 = vst.msk [vmem:[#allocation3 + $0x18] sm:$0xff] %vm590, %v1187
      %1208 = vst.msk [vmem:[#allocation3 + $0x20] sm:$0xff] %vm590, %v1189
      %1209 = vst.msk [vmem:[#allocation3 + $0x28] sm:$0xff] %vm590, %v1191
      %1210 = vst.msk [vmem:[#allocation3 + $0x30] sm:$0xff] %vm590, %v1193
      %1211 = vst.msk [vmem:[#allocation3 + $0x38] sm:$0xff] %vm590, %v1195
      %v1212 = vld [vmem:[%s427 + $0x8] sm:$0xff]
      %v1213 = vld [vmem:[%s427 + $0x20] sm:$0xff]
      %v1214 = vld [vmem:[%s427 + $0x38] sm:$0xff]
      %v1215 = vld [vmem:[%s427 + $0x50] sm:$0xff]
      %v1216 = vld [vmem:[%s427 + $0x68] sm:$0xff]
      %v1217 = vld [vmem:[%s427 + $0x80] sm:$0xff]
      %v1218 = vld [vmem:[%s427 + $0x98] sm:$0xff]
      %v1219 = vld [vmem:[%s427 + $0xb0] sm:$0xff]
      %1228 = vrot.lane.b32.xlu0 %v1212, 32
      %v1229 = vpop.permute.xlu0 %1228
      %1230 = vrot.lane.b32.xlu0 %v1213, 32
      %v1231 = vpop.permute.xlu0 %1230
      %1232 = vrot.lane.b32.xlu0 %v1214, 32
      %v1233 = vpop.permute.xlu0 %1232
      %1234 = vrot.lane.b32.xlu0 %v1215, 32
      %v1235 = vpop.permute.xlu0 %1234
      %1236 = vrot.lane.b32.xlu0 %v1216, 32
      %v1237 = vpop.permute.xlu0 %1236
      %1238 = vrot.lane.b32.xlu0 %v1217, 32
      %v1239 = vpop.permute.xlu0 %1238
      %1240 = vrot.lane.b32.xlu0 %v1218, 32
      %v1241 = vpop.permute.xlu0 %1240
      %1242 = vrot.lane.b32.xlu0 %v1219, 32
      %v1243 = vpop.permute.xlu0 %1242
      %1252 = vst.msk [vmem:[#allocation3] sm:$0xff] %vm639, %v1229
      %1253 = vst.msk [vmem:[#allocation3 + $0x8] sm:$0xff] %vm639, %v1231
      %1254 = vst.msk [vmem:[#allocation3 + $0x10] sm:$0xff] %vm639, %v1233
      %1255 = vst.msk [vmem:[#allocation3 + $0x18] sm:$0xff] %vm639, %v1235
      %1256 = vst.msk [vmem:[#allocation3 + $0x20] sm:$0xff] %vm639, %v1237
      %1257 = vst.msk [vmem:[#allocation3 + $0x28] sm:$0xff] %vm639, %v1239
      %1258 = vst.msk [vmem:[#allocation3 + $0x30] sm:$0xff] %vm639, %v1241
      %1259 = vst.msk [vmem:[#allocation3 + $0x38] sm:$0xff] %vm639, %v1243
      %v1260 = vld [vmem:[%s427 + $0x9] sm:$0xff]
      %v1261 = vld [vmem:[%s427 + $0x21] sm:$0xff]
      %v1262 = vld [vmem:[%s427 + $0x39] sm:$0xff]
      %v1263 = vld [vmem:[%s427 + $0x51] sm:$0xff]
      %v1264 = vld [vmem:[%s427 + $0x69] sm:$0xff]
      %v1265 = vld [vmem:[%s427 + $0x81] sm:$0xff]
      %v1266 = vld [vmem:[%s427 + $0x99] sm:$0xff]
      %v1267 = vld [vmem:[%s427 + $0xb1] sm:$0xff]
      %1276 = vrot.lane.b32.xlu0 %v1260, 40
      %v1277 = vpop.permute.xlu0 %1276
      %1278 = vrot.lane.b32.xlu0 %v1261, 40
      %v1279 = vpop.permute.xlu0 %1278
      %1280 = vrot.lane.b32.xlu0 %v1262, 40
      %v1281 = vpop.permute.xlu0 %1280
      %1282 = vrot.lane.b32.xlu0 %v1263, 40
      %v1283 = vpop.permute.xlu0 %1282
      %1284 = vrot.lane.b32.xlu0 %v1264, 40
      %v1285 = vpop.permute.xlu0 %1284
      %1286 = vrot.lane.b32.xlu0 %v1265, 40
      %v1287 = vpop.permute.xlu0 %1286
      %1288 = vrot.lane.b32.xlu0 %v1266, 40
      %v1289 = vpop.permute.xlu0 %1288
      %1290 = vrot.lane.b32.xlu0 %v1267, 40
      %v1291 = vpop.permute.xlu0 %1290
      %1300 = vst.msk [vmem:[#allocation3] sm:$0xff] %vm688, %v1277
      %1301 = vst.msk [vmem:[#allocation3 + $0x8] sm:$0xff] %vm688, %v1279
      %1302 = vst.msk [vmem:[#allocation3 + $0x10] sm:$0xff] %vm688, %v1281
      %1303 = vst.msk [vmem:[#allocation3 + $0x18] sm:$0xff] %vm688, %v1283
      %1304 = vst.msk [vmem:[#allocation3 + $0x20] sm:$0xff] %vm688, %v1285
      %1305 = vst.msk [vmem:[#allocation3 + $0x28] sm:$0xff] %vm688, %v1287
      %1306 = vst.msk [vmem:[#allocation3 + $0x30] sm:$0xff] %vm688, %v1289
      %1307 = vst.msk [vmem:[#allocation3 + $0x38] sm:$0xff] %vm688, %v1291
      %v1308 = vld [vmem:[%s697 + $0x7] sm:$0xff]
      %v1309 = vld [vmem:[%s697 + $0x1f] sm:$0xff]
      %v1310 = vld [vmem:[%s697 + $0x37] sm:$0xff]
      %v1311 = vld [vmem:[%s697 + $0x4f] sm:$0xff]
      %v1312 = vld [vmem:[%s697 + $0x67] sm:$0xff]
      %v1313 = vld [vmem:[%s697 + $0x7f] sm:$0xff]
      %v1314 = vld [vmem:[%s697 + $0x97] sm:$0xff]
      %v1315 = vld [vmem:[%s697 + $0xaf] sm:$0xff]
      %1324 = vrot.lane.b32.xlu0 %v1308, 48
      %v1325 = vpop.permute.xlu0 %1324
      %1326 = vrot.lane.b32.xlu0 %v1309, 48
      %v1327 = vpop.permute.xlu0 %1326
      %1328 = vrot.lane.b32.xlu0 %v1310, 48
      %v1329 = vpop.permute.xlu0 %1328
      %1330 = vrot.lane.b32.xlu0 %v1311, 48
      %v1331 = vpop.permute.xlu0 %1330
      %1332 = vrot.lane.b32.xlu0 %v1312, 48
      %v1333 = vpop.permute.xlu0 %1332
      %1334 = vrot.lane.b32.xlu0 %v1313, 48
      %v1335 = vpop.permute.xlu0 %1334
      %1336 = vrot.lane.b32.xlu0 %v1314, 48
      %v1337 = vpop.permute.xlu0 %1336
      %1338 = vrot.lane.b32.xlu0 %v1315, 48
      %v1339 = vpop.permute.xlu0 %1338
      %1348 = vst.msk [vmem:[#allocation3] sm:$0xff] %vm738, %v1325
      %1349 = vst.msk [vmem:[#allocation3 + $0x8] sm:$0xff] %vm738, %v1327
      %1350 = vst.msk [vmem:[#allocation3 + $0x10] sm:$0xff] %vm738, %v1329
      %1351 = vst.msk [vmem:[#allocation3 + $0x18] sm:$0xff] %vm738, %v1331
      %1352 = vst.msk [vmem:[#allocation3 + $0x20] sm:$0xff] %vm738, %v1333
      %1353 = vst.msk [vmem:[#allocation3 + $0x28] sm:$0xff] %vm738, %v1335
      %1354 = vst.msk [vmem:[#allocation3 + $0x30] sm:$0xff] %vm738, %v1337
      %1355 = vst.msk [vmem:[#allocation3 + $0x38] sm:$0xff] %vm738, %v1339
      %v1356 = vld [vmem:[%s697 + $0x8] sm:$0xff]
      %v1357 = vld [vmem:[%s697 + $0x20] sm:$0xff]
      %v1358 = vld [vmem:[%s697 + $0x38] sm:$0xff]
      %v1359 = vld [vmem:[%s697 + $0x50] sm:$0xff]
      %v1360 = vld [vmem:[%s697 + $0x68] sm:$0xff]
      %v1361 = vld [vmem:[%s697 + $0x80] sm:$0xff]
      %v1362 = vld [vmem:[%s697 + $0x98] sm:$0xff]
      %v1363 = vld [vmem:[%s697 + $0xb0] sm:$0xff]
      %1372 = vrot.lane.b32.xlu0 %v1356, 56
      %v1373 = vpop.permute.xlu0 %1372
      %1374 = vrot.lane.b32.xlu0 %v1357, 56
      %v1375 = vpop.permute.xlu0 %1374
      %1376 = vrot.lane.b32.xlu0 %v1358, 56
      %v1377 = vpop.permute.xlu0 %1376
      %1378 = vrot.lane.b32.xlu0 %v1359, 56
      %v1379 = vpop.permute.xlu0 %1378
      %1380 = vrot.lane.b32.xlu0 %v1360, 56
      %v1381 = vpop.permute.xlu0 %1380
      %1382 = vrot.lane.b32.xlu0 %v1361, 56
      %v1383 = vpop.permute.xlu0 %1382
      %1384 = vrot.lane.b32.xlu0 %v1362, 56
      %v1385 = vpop.permute.xlu0 %1384
      %1386 = vrot.lane.b32.xlu0 %v1363, 56
      %v1387 = vpop.permute.xlu0 %1386
      %1396 = vst.msk [vmem:[#allocation3] sm:$0xff] %vm787, %v1373
      %1397 = vst.msk [vmem:[#allocation3 + $0x8] sm:$0xff] %vm787, %v1375
      %1398 = vst.msk [vmem:[#allocation3 + $0x10] sm:$0xff] %vm787, %v1377
      %1399 = vst.msk [vmem:[#allocation3 + $0x18] sm:$0xff] %vm787, %v1379
      %1400 = vst.msk [vmem:[#allocation3 + $0x20] sm:$0xff] %vm787, %v1381
      %1401 = vst.msk [vmem:[#allocation3 + $0x28] sm:$0xff] %vm787, %v1383
      %1402 = vst.msk [vmem:[#allocation3 + $0x30] sm:$0xff] %vm787, %v1385
      %1403 = vst.msk [vmem:[#allocation3 + $0x38] sm:$0xff] %vm787, %v1387
      %v1404 = vld [vmem:[%s697 + $0x9] sm:$0xff]
      %v1405 = vld [vmem:[%s697 + $0x21] sm:$0xff]
      %v1406 = vld [vmem:[%s697 + $0x39] sm:$0xff]
      %v1407 = vld [vmem:[%s697 + $0x51] sm:$0xff]
      %v1408 = vld [vmem:[%s697 + $0x69] sm:$0xff]
      %v1409 = vld [vmem:[%s697 + $0x81] sm:$0xff]
      %v1410 = vld [vmem:[%s697 + $0x99] sm:$0xff]
      %v1411 = vld [vmem:[%s697 + $0xb1] sm:$0xff]
      %1420 = vrot.lane.b32.xlu0 %v1404, 64
      %v1421 = vpop.permute.xlu0 %1420
      %1422 = vrot.lane.b32.xlu0 %v1405, 64
      %v1423 = vpop.permute.xlu0 %1422
      %1424 = vrot.lane.b32.xlu0 %v1406, 64
      %v1425 = vpop.permute.xlu0 %1424
      %1426 = vrot.lane.b32.xlu0 %v1407, 64
      %v1427 = vpop.permute.xlu0 %1426
      %1428 = vrot.lane.b32.xlu0 %v1408, 64
      %v1429 = vpop.permute.xlu0 %1428
      %1430 = vrot.lane.b32.xlu0 %v1409, 64
      %v1431 = vpop.permute.xlu0 %1430
      %1432 = vrot.lane.b32.xlu0 %v1410, 64
      %v1433 = vpop.permute.xlu0 %1432
      %1434 = vrot.lane.b32.xlu0 %v1411, 64
      %v1435 = vpop.permute.xlu0 %1434
      %1444 = vst.msk [vmem:[#allocation3] sm:$0xff] %vm836, %v1421
      %1445 = vst.msk [vmem:[#allocation3 + $0x8] sm:$0xff] %vm836, %v1423
      %1446 = vst.msk [vmem:[#allocation3 + $0x10] sm:$0xff] %vm836, %v1425
      %1447 = vst.msk [vmem:[#allocation3 + $0x18] sm:$0xff] %vm836, %v1427
      %1448 = vst.msk [vmem:[#allocation3 + $0x20] sm:$0xff] %vm836, %v1429
      %1449 = vst.msk [vmem:[#allocation3 + $0x28] sm:$0xff] %vm836, %v1431
      %1450 = vst.msk [vmem:[#allocation3 + $0x30] sm:$0xff] %vm836, %v1433
      %1451 = vst.msk [vmem:[#allocation3 + $0x38] sm:$0xff] %vm836, %v1435
      %v1452 = vld [vmem:[#allocation3] sm:$0xff]
      %v1453 = vld [vmem:[#allocation3 + $0x8] sm:$0xff]
      %v1454 = vld [vmem:[#allocation3 + $0x10] sm:$0xff]
      %v1455 = vld [vmem:[#allocation3 + $0x18] sm:$0xff]
      %v1456 = vld [vmem:[#allocation3 + $0x20] sm:$0xff]
      %v1457 = vld [vmem:[#allocation3 + $0x28] sm:$0xff]
      %v1458 = vld [vmem:[#allocation3 + $0x30] sm:$0xff]
      %v1459 = vld [vmem:[#allocation3 + $0x38] sm:$0xff]
      %s1460 = scalar_lea.vmem %s3, 72
      %v1461 = vld [vmem:[%s1460] sm:$0xff]
      %v1462 = vld [vmem:[%s1460 + $0x8] sm:$0xff]
      %v1463 = vld [vmem:[%s1460 + $0x10] sm:$0xff]
      %v1464 = vld [vmem:[%s1460 + $0x18] sm:$0xff]
      %v1465 = vld [vmem:[%s1460 + $0x20] sm:$0xff]
      %v1466 = vld [vmem:[%s1460 + $0x28] sm:$0xff]
      %v1467 = vld [vmem:[%s1460 + $0x30] sm:$0xff]
      %v1468 = vld [vmem:[%s1460 + $0x38] sm:$0xff]
      %v1469 = vld [vmem:[%s1460 + $0x40] sm:$0xff]
      %s1470 = scalar_lea.vmem %s4, 1
      %v1471 = vld [vmem:[%s1470] sm:$0x1]
      %v1473 = vperm.slane %v1471, 0
      %v1476 = vsel %vm866, %v1452, 0
      %v1479 = vsel %vm866, %v1453, 0
      %v1482 = vsel %vm866, %v1454, 0
      %v1485 = vsel %vm866, %v1455, 0
      %v1488 = vsel %vm866, %v1456, 0
      %v1491 = vsel %vm866, %v1457, 0
      %v1494 = vsel %vm866, %v1458, 0
      %v1497 = vsel %vm866, %v1459, 0
      %1499 = vmatpush.msra.mxu0 0.0
      %1500 = vmatpush.msra.mxu0 0.0
      %1501 = vmatpush.msra.mxu0 0.0
      %1502 = vmatpush.msra.mxu0 0.0
      %1503 = vmatpush.msra.mxu0 0.0
      %1504 = vmatpush.msra.mxu0 0.0
      %1505 = vmatpush.msra.mxu0 0.0
      %1506 = vmatpush.msra.mxu0 %v1469
      %1507 = vmatpush.msra.mxu0 %v1468
      %1508 = vmatpush.msra.mxu0 %v1467
      %1509 = vmatpush.msra.mxu0 %v1466
      %1510 = vmatpush.msra.mxu0 %v1465
      %1511 = vmatpush.msra.mxu0 %v1464
      %1512 = vmatpush.msra.mxu0 %v1463
      %1513 = vmatpush.msra.mxu0 %v1462
      %1514 = vmatpush.msra.mxu0 %v1461
      %1515 = vmatmul.f32.gmra.mxu0 %v1476
      %v1516 = vpop.f32.mrf.mxu0
      %v1517 = vadd.f32 %v1473, %v1516
      %1518 = vmatmul.f32.gmra.mxu0 %v1479
      %v1519 = vpop.f32.mrf.mxu0
      %v1520 = vadd.f32 %v1473, %v1519
      %1521 = vmatmul.f32.gmra.mxu0 %v1482
      %v1522 = vpop.f32.mrf.mxu0
      %v1523 = vadd.f32 %v1473, %v1522
      %1524 = vmatmul.f32.gmra.mxu0 %v1485
      %v1525 = vpop.f32.mrf.mxu0
      %v1526 = vadd.f32 %v1473, %v1525
      %1527 = vmatmul.f32.gmra.mxu0 %v1488
      %v1528 = vpop.f32.mrf.mxu0
      %v1529 = vadd.f32 %v1473, %v1528
      %1530 = vmatmul.f32.gmra.mxu0 %v1491
      %v1531 = vpop.f32.mrf.mxu0
      %v1532 = vadd.f32 %v1473, %v1531
      %1533 = vmatmul.f32.gmra.mxu0 %v1494
      %v1534 = vpop.f32.mrf.mxu0
      %v1535 = vadd.f32 %v1473, %v1534
      %1536 = vmatmul.f32.gmra.mxu0 %v1497
      %v1537 = vpop.f32.mrf.mxu0
      %v1538 = vadd.f32 %v1473, %v1537
      %1539 = vdwg.mxu0
      %v1540 = vmax.f32 %v1517, 0.0
      %v1541 = vmax.f32 %v1520, 0.0
      %v1542 = vmax.f32 %v1523, 0.0
      %v1543 = vmax.f32 %v1526, 0.0
      %v1544 = vmax.f32 %v1529, 0.0
      %v1545 = vmax.f32 %v1532, 0.0
      %v1546 = vmax.f32 %v1535, 0.0
      %v1547 = vmax.f32 %v1538, 0.0
      %1556 = vrot.lane.b32.xlu0 %v1540, 16
      %v1557 = vpop.permute.xlu0 %1556
      %1558 = vrot.lane.b32.xlu0 %v1541, 16
      %v1559 = vpop.permute.xlu0 %1558
      %1560 = vrot.lane.b32.xlu0 %v1542, 16
      %v1561 = vpop.permute.xlu0 %1560
      %1562 = vrot.lane.b32.xlu0 %v1543, 16
      %v1563 = vpop.permute.xlu0 %1562
      %1564 = vrot.lane.b32.xlu0 %v1544, 16
      %v1565 = vpop.permute.xlu0 %1564
      %1566 = vrot.lane.b32.xlu0 %v1545, 16
      %v1567 = vpop.permute.xlu0 %1566
      %1568 = vrot.lane.b32.xlu0 %v1546, 16
      %v1569 = vpop.permute.xlu0 %1568
      %1570 = vrot.lane.b32.xlu0 %v1547, 16
      %v1571 = vpop.permute.xlu0 %1570
      %1580 = vst.msk [vmem:[#allocation4] sm:$0xff] %vm541, %v1557
      %1581 = vst.msk [vmem:[#allocation4 + $0x8] sm:$0xff] %vm541, %v1559
      %1582 = vst.msk [vmem:[#allocation4 + $0x10] sm:$0xff] %vm541, %v1561
      %1583 = vst.msk [vmem:[#allocation4 + $0x18] sm:$0xff] %vm541, %v1563
      %1584 = vst.msk [vmem:[#allocation4 + $0x20] sm:$0xff] %vm541, %v1565
      %1585 = vst.msk [vmem:[#allocation4 + $0x28] sm:$0xff] %vm541, %v1567
      %1586 = vst.msk [vmem:[#allocation4 + $0x30] sm:$0xff] %vm541, %v1569
      %1587 = vst.msk [vmem:[#allocation4 + $0x38] sm:$0xff] %vm541, %v1571
      %1588 = vrot.lane.b32.xlu0 %v1540, 24
      %v1589 = vpop.permute.xlu0 %1588
      %1590 = vrot.lane.b32.xlu0 %v1541, 24
      %v1591 = vpop.permute.xlu0 %1590
      %1592 = vrot.lane.b32.xlu0 %v1542, 24
      %v1593 = vpop.permute.xlu0 %1592
      %1594 = vrot.lane.b32.xlu0 %v1543, 24
      %v1595 = vpop.permute.xlu0 %1594
      %1596 = vrot.lane.b32.xlu0 %v1544, 24
      %v1597 = vpop.permute.xlu0 %1596
      %1598 = vrot.lane.b32.xlu0 %v1545, 24
      %v1599 = vpop.permute.xlu0 %1598
      %1600 = vrot.lane.b32.xlu0 %v1546, 24
      %v1601 = vpop.permute.xlu0 %1600
      %1602 = vrot.lane.b32.xlu0 %v1547, 24
      %v1603 = vpop.permute.xlu0 %1602
      %v1612 = vadd.f32 %v348, %v1589
      %v1613 = vadd.f32 %v349, %v1591
      %v1614 = vadd.f32 %v350, %v1593
      %v1615 = vadd.f32 %v351, %v1595
      %v1616 = vadd.f32 %v352, %v1597
      %v1617 = vadd.f32 %v353, %v1599
      %v1618 = vadd.f32 %v354, %v1601
      %v1619 = vadd.f32 %v355, %v1603
      %1628 = vrot.lane.b32.xlu0 %v1612, 104
      %v1629 = vpop.permute.xlu0 %1628
      %1630 = vrot.lane.b32.xlu0 %v1613, 104
      %v1631 = vpop.permute.xlu0 %1630
      %1632 = vrot.lane.b32.xlu0 %v1614, 104
      %v1633 = vpop.permute.xlu0 %1632
      %1634 = vrot.lane.b32.xlu0 %v1615, 104
      %v1635 = vpop.permute.xlu0 %1634
      %1636 = vrot.lane.b32.xlu0 %v1616, 104
      %v1637 = vpop.permute.xlu0 %1636
      %1638 = vrot.lane.b32.xlu0 %v1617, 104
      %v1639 = vpop.permute.xlu0 %1638
      %1640 = vrot.lane.b32.xlu0 %v1618, 104
      %v1641 = vpop.permute.xlu0 %1640
      %1642 = vrot.lane.b32.xlu0 %v1619, 104
      %v1643 = vpop.permute.xlu0 %1642
      %1652 = vst.msk [vmem:[%s427 + $0x8] sm:$0xff] %vm356, %v1629
      %1653 = vst.msk [vmem:[%s427 + $0x20] sm:$0xff] %vm356, %v1631
      %1654 = vst.msk [vmem:[%s427 + $0x38] sm:$0xff] %vm356, %v1633
      %1655 = vst.msk [vmem:[%s427 + $0x50] sm:$0xff] %vm356, %v1635
      %1656 = vst.msk [vmem:[%s427 + $0x68] sm:$0xff] %vm356, %v1637
      %1657 = vst.msk [vmem:[%s427 + $0x80] sm:$0xff] %vm356, %v1639
      %1658 = vst.msk [vmem:[%s427 + $0x98] sm:$0xff] %vm356, %v1641
      %1659 = vst.msk [vmem:[%s427 + $0xb0] sm:$0xff] %vm356, %v1643
      %v1660 = vld [vmem:[#allocation2 + $0x7] sm:$0xff]
      %v1661 = vld [vmem:[#allocation2 + $0x1f] sm:$0xff]
      %v1662 = vld [vmem:[#allocation2 + $0x37] sm:$0xff]
      %v1663 = vld [vmem:[#allocation2 + $0x4f] sm:$0xff]
      %v1664 = vld [vmem:[#allocation2 + $0x67] sm:$0xff]
      %v1665 = vld [vmem:[#allocation2 + $0x7f] sm:$0xff]
      %v1666 = vld [vmem:[#allocation2 + $0x97] sm:$0xff]
      %v1667 = vld [vmem:[#allocation2 + $0xaf] sm:$0xff]
      %1668 = vst.msk [vmem:[#allocation3] sm:$0xff] %vm356, %v1660
      %1669 = vst.msk [vmem:[#allocation3 + $0x8] sm:$0xff] %vm356, %v1661
      %1670 = vst.msk [vmem:[#allocation3 + $0x10] sm:$0xff] %vm356, %v1662
      %1671 = vst.msk [vmem:[#allocation3 + $0x18] sm:$0xff] %vm356, %v1663
      %1672 = vst.msk [vmem:[#allocation3 + $0x20] sm:$0xff] %vm356, %v1664
      %1673 = vst.msk [vmem:[#allocation3 + $0x28] sm:$0xff] %vm356, %v1665
      %1674 = vst.msk [vmem:[#allocation3 + $0x30] sm:$0xff] %vm356, %v1666
      %1675 = vst.msk [vmem:[#allocation3 + $0x38] sm:$0xff] %vm356, %v1667
      %v1676 = vld [vmem:[#allocation2 + $0x8] sm:$0xff]
      %v1677 = vld [vmem:[#allocation2 + $0x20] sm:$0xff]
      %v1678 = vld [vmem:[#allocation2 + $0x38] sm:$0xff]
      %v1679 = vld [vmem:[#allocation2 + $0x50] sm:$0xff]
      %v1680 = vld [vmem:[#allocation2 + $0x68] sm:$0xff]
      %v1681 = vld [vmem:[#allocation2 + $0x80] sm:$0xff]
      %v1682 = vld [vmem:[#allocation2 + $0x98] sm:$0xff]
      %v1683 = vld [vmem:[#allocation2 + $0xb0] sm:$0xff]
      %1692 = vrot.lane.b32.xlu0 %v1676, 8
      %v1693 = vpop.permute.xlu0 %1692
      %1694 = vrot.lane.b32.xlu0 %v1677, 8
      %v1695 = vpop.permute.xlu0 %1694
      %1696 = vrot.lane.b32.xlu0 %v1678, 8
      %v1697 = vpop.permute.xlu0 %1696
      %1698 = vrot.lane.b32.xlu0 %v1679, 8
      %v1699 = vpop.permute.xlu0 %1698
      %1700 = vrot.lane.b32.xlu0 %v1680, 8
      %v1701 = vpop.permute.xlu0 %1700
      %1702 = vrot.lane.b32.xlu0 %v1681, 8
      %v1703 = vpop.permute.xlu0 %1702
      %1704 = vrot.lane.b32.xlu0 %v1682, 8
      %v1705 = vpop.permute.xlu0 %1704
      %1706 = vrot.lane.b32.xlu0 %v1683, 8
      %v1707 = vpop.permute.xlu0 %1706
      %1716 = vst.msk [vmem:[#allocation3] sm:$0xff] %vm492, %v1693
      %1717 = vst.msk [vmem:[#allocation3 + $0x8] sm:$0xff] %vm492, %v1695
      %1718 = vst.msk [vmem:[#allocation3 + $0x10] sm:$0xff] %vm492, %v1697
      %1719 = vst.msk [vmem:[#allocation3 + $0x18] sm:$0xff] %vm492, %v1699
      %1720 = vst.msk [vmem:[#allocation3 + $0x20] sm:$0xff] %vm492, %v1701
      %1721 = vst.msk [vmem:[#allocation3 + $0x28] sm:$0xff] %vm492, %v1703
      %1722 = vst.msk [vmem:[#allocation3 + $0x30] sm:$0xff] %vm492, %v1705
      %1723 = vst.msk [vmem:[#allocation3 + $0x38] sm:$0xff] %vm492, %v1707
      %v1724 = vld [vmem:[#allocation2 + $0x9] sm:$0xff]
      %v1725 = vld [vmem:[#allocation2 + $0x21] sm:$0xff]
      %v1726 = vld [vmem:[#allocation2 + $0x39] sm:$0xff]
      %v1727 = vld [vmem:[#allocation2 + $0x51] sm:$0xff]
      %v1728 = vld [vmem:[#allocation2 + $0x69] sm:$0xff]
      %v1729 = vld [vmem:[#allocation2 + $0x81] sm:$0xff]
      %v1730 = vld [vmem:[#allocation2 + $0x99] sm:$0xff]
      %v1731 = vld [vmem:[#allocation2 + $0xb1] sm:$0xff]
      %1740 = vrot.lane.b32.xlu0 %v1724, 16
      %v1741 = vpop.permute.xlu0 %1740
      %1742 = vrot.lane.b32.xlu0 %v1725, 16
      %v1743 = vpop.permute.xlu0 %1742
      %1744 = vrot.lane.b32.xlu0 %v1726, 16
      %v1745 = vpop.permute.xlu0 %1744
      %1746 = vrot.lane.b32.xlu0 %v1727, 16
      %v1747 = vpop.permute.xlu0 %1746
      %1748 = vrot.lane.b32.xlu0 %v1728, 16
      %v1749 = vpop.permute.xlu0 %1748
      %1750 = vrot.lane.b32.xlu0 %v1729, 16
      %v1751 = vpop.permute.xlu0 %1750
      %1752 = vrot.lane.b32.xlu0 %v1730, 16
      %v1753 = vpop.permute.xlu0 %1752
      %1754 = vrot.lane.b32.xlu0 %v1731, 16
      %v1755 = vpop.permute.xlu0 %1754
      %1764 = vst.msk [vmem:[#allocation3] sm:$0xff] %vm541, %v1741
      %1765 = vst.msk [vmem:[#allocation3 + $0x8] sm:$0xff] %vm541, %v1743
      %1766 = vst.msk [vmem:[#allocation3 + $0x10] sm:$0xff] %vm541, %v1745
      %1767 = vst.msk [vmem:[#allocation3 + $0x18] sm:$0xff] %vm541, %v1747
      %1768 = vst.msk [vmem:[#allocation3 + $0x20] sm:$0xff] %vm541, %v1749
      %1769 = vst.msk [vmem:[#allocation3 + $0x28] sm:$0xff] %vm541, %v1751
      %1770 = vst.msk [vmem:[#allocation3 + $0x30] sm:$0xff] %vm541, %v1753
      %1771 = vst.msk [vmem:[#allocation3 + $0x38] sm:$0xff] %vm541, %v1755
      %v1772 = vld [vmem:[%s427 + $0x7] sm:$0xff]
      %v1773 = vld [vmem:[%s427 + $0x1f] sm:$0xff]
      %v1774 = vld [vmem:[%s427 + $0x37] sm:$0xff]
      %v1775 = vld [vmem:[%s427 + $0x4f] sm:$0xff]
      %v1776 = vld [vmem:[%s427 + $0x67] sm:$0xff]
      %v1777 = vld [vmem:[%s427 + $0x7f] sm:$0xff]
      %v1778 = vld [vmem:[%s427 + $0x97] sm:$0xff]
      %v1779 = vld [vmem:[%s427 + $0xaf] sm:$0xff]
      %1788 = vrot.lane.b32.xlu0 %v1772, 24
      %v1789 = vpop.permute.xlu0 %1788
      %1790 = vrot.lane.b32.xlu0 %v1773, 24
      %v1791 = vpop.permute.xlu0 %1790
      %1792 = vrot.lane.b32.xlu0 %v1774, 24
      %v1793 = vpop.permute.xlu0 %1792
      %1794 = vrot.lane.b32.xlu0 %v1775, 24
      %v1795 = vpop.permute.xlu0 %1794
      %1796 = vrot.lane.b32.xlu0 %v1776, 24
      %v1797 = vpop.permute.xlu0 %1796
      %1798 = vrot.lane.b32.xlu0 %v1777, 24
      %v1799 = vpop.permute.xlu0 %1798
      %1800 = vrot.lane.b32.xlu0 %v1778, 24
      %v1801 = vpop.permute.xlu0 %1800
      %1802 = vrot.lane.b32.xlu0 %v1779, 24
      %v1803 = vpop.permute.xlu0 %1802
      %1812 = vst.msk [vmem:[#allocation3] sm:$0xff] %vm590, %v1789
      %1813 = vst.msk [vmem:[#allocation3 + $0x8] sm:$0xff] %vm590, %v1791
      %1814 = vst.msk [vmem:[#allocation3 + $0x10] sm:$0xff] %vm590, %v1793
      %1815 = vst.msk [vmem:[#allocation3 + $0x18] sm:$0xff] %vm590, %v1795
      %1816 = vst.msk [vmem:[#allocation3 + $0x20] sm:$0xff] %vm590, %v1797
      %1817 = vst.msk [vmem:[#allocation3 + $0x28] sm:$0xff] %vm590, %v1799
      %1818 = vst.msk [vmem:[#allocation3 + $0x30] sm:$0xff] %vm590, %v1801
      %1819 = vst.msk [vmem:[#allocation3 + $0x38] sm:$0xff] %vm590, %v1803
      %v1820 = vld [vmem:[%s427 + $0x8] sm:$0xff]
      %v1821 = vld [vmem:[%s427 + $0x20] sm:$0xff]
      %v1822 = vld [vmem:[%s427 + $0x38] sm:$0xff]
      %v1823 = vld [vmem:[%s427 + $0x50] sm:$0xff]
      %v1824 = vld [vmem:[%s427 + $0x68] sm:$0xff]
      %v1825 = vld [vmem:[%s427 + $0x80] sm:$0xff]
      %v1826 = vld [vmem:[%s427 + $0x98] sm:$0xff]
      %v1827 = vld [vmem:[%s427 + $0xb0] sm:$0xff]
      %1836 = vrot.lane.b32.xlu0 %v1820, 32
      %v1837 = vpop.permute.xlu0 %1836
      %1838 = vrot.lane.b32.xlu0 %v1821, 32
      %v1839 = vpop.permute.xlu0 %1838
      %1840 = vrot.lane.b32.xlu0 %v1822, 32
      %v1841 = vpop.permute.xlu0 %1840
      %1842 = vrot.lane.b32.xlu0 %v1823, 32
      %v1843 = vpop.permute.xlu0 %1842
      %1844 = vrot.lane.b32.xlu0 %v1824, 32
      %v1845 = vpop.permute.xlu0 %1844
      %1846 = vrot.lane.b32.xlu0 %v1825, 32
      %v1847 = vpop.permute.xlu0 %1846
      %1848 = vrot.lane.b32.xlu0 %v1826, 32
      %v1849 = vpop.permute.xlu0 %1848
      %1850 = vrot.lane.b32.xlu0 %v1827, 32
      %v1851 = vpop.permute.xlu0 %1850
      %1860 = vst.msk [vmem:[#allocation3] sm:$0xff] %vm639, %v1837
      %1861 = vst.msk [vmem:[#allocation3 + $0x8] sm:$0xff] %vm639, %v1839
      %1862 = vst.msk [vmem:[#allocation3 + $0x10] sm:$0xff] %vm639, %v1841
      %1863 = vst.msk [vmem:[#allocation3 + $0x18] sm:$0xff] %vm639, %v1843
      %1864 = vst.msk [vmem:[#allocation3 + $0x20] sm:$0xff] %vm639, %v1845
      %1865 = vst.msk [vmem:[#allocation3 + $0x28] sm:$0xff] %vm639, %v1847
      %1866 = vst.msk [vmem:[#allocation3 + $0x30] sm:$0xff] %vm639, %v1849
      %1867 = vst.msk [vmem:[#allocation3 + $0x38] sm:$0xff] %vm639, %v1851
      %v1868 = vld [vmem:[%s427 + $0x9] sm:$0xff]
      %v1869 = vld [vmem:[%s427 + $0x21] sm:$0xff]
      %v1870 = vld [vmem:[%s427 + $0x39] sm:$0xff]
      %v1871 = vld [vmem:[%s427 + $0x51] sm:$0xff]
      %v1872 = vld [vmem:[%s427 + $0x69] sm:$0xff]
      %v1873 = vld [vmem:[%s427 + $0x81] sm:$0xff]
      %v1874 = vld [vmem:[%s427 + $0x99] sm:$0xff]
      %v1875 = vld [vmem:[%s427 + $0xb1] sm:$0xff]
      %1884 = vrot.lane.b32.xlu0 %v1868, 40
      %v1885 = vpop.permute.xlu0 %1884
      %1886 = vrot.lane.b32.xlu0 %v1869, 40
      %v1887 = vpop.permute.xlu0 %1886
      %1888 = vrot.lane.b32.xlu0 %v1870, 40
      %v1889 = vpop.permute.xlu0 %1888
      %1890 = vrot.lane.b32.xlu0 %v1871, 40
      %v1891 = vpop.permute.xlu0 %1890
      %1892 = vrot.lane.b32.xlu0 %v1872, 40
      %v1893 = vpop.permute.xlu0 %1892
      %1894 = vrot.lane.b32.xlu0 %v1873, 40
      %v1895 = vpop.permute.xlu0 %1894
      %1896 = vrot.lane.b32.xlu0 %v1874, 40
      %v1897 = vpop.permute.xlu0 %1896
      %1898 = vrot.lane.b32.xlu0 %v1875, 40
      %v1899 = vpop.permute.xlu0 %1898
      %1908 = vst.msk [vmem:[#allocation3] sm:$0xff] %vm688, %v1885
      %1909 = vst.msk [vmem:[#allocation3 + $0x8] sm:$0xff] %vm688, %v1887
      %1910 = vst.msk [vmem:[#allocation3 + $0x10] sm:$0xff] %vm688, %v1889
      %1911 = vst.msk [vmem:[#allocation3 + $0x18] sm:$0xff] %vm688, %v1891
      %1912 = vst.msk [vmem:[#allocation3 + $0x20] sm:$0xff] %vm688, %v1893
      %1913 = vst.msk [vmem:[#allocation3 + $0x28] sm:$0xff] %vm688, %v1895
      %1914 = vst.msk [vmem:[#allocation3 + $0x30] sm:$0xff] %vm688, %v1897
      %1915 = vst.msk [vmem:[#allocation3 + $0x38] sm:$0xff] %vm688, %v1899
      %v1916 = vld [vmem:[%s697 + $0x7] sm:$0xff]
      %v1917 = vld [vmem:[%s697 + $0x1f] sm:$0xff]
      %v1918 = vld [vmem:[%s697 + $0x37] sm:$0xff]
      %v1919 = vld [vmem:[%s697 + $0x4f] sm:$0xff]
      %v1920 = vld [vmem:[%s697 + $0x67] sm:$0xff]
      %v1921 = vld [vmem:[%s697 + $0x7f] sm:$0xff]
      %v1922 = vld [vmem:[%s697 + $0x97] sm:$0xff]
      %v1923 = vld [vmem:[%s697 + $0xaf] sm:$0xff]
      %1932 = vrot.lane.b32.xlu0 %v1916, 48
      %v1933 = vpop.permute.xlu0 %1932
      %1934 = vrot.lane.b32.xlu0 %v1917, 48
      %v1935 = vpop.permute.xlu0 %1934
      %1936 = vrot.lane.b32.xlu0 %v1918, 48
      %v1937 = vpop.permute.xlu0 %1936
      %1938 = vrot.lane.b32.xlu0 %v1919, 48
      %v1939 = vpop.permute.xlu0 %1938
      %1940 = vrot.lane.b32.xlu0 %v1920, 48
      %v1941 = vpop.permute.xlu0 %1940
      %1942 = vrot.lane.b32.xlu0 %v1921, 48
      %v1943 = vpop.permute.xlu0 %1942
      %1944 = vrot.lane.b32.xlu0 %v1922, 48
      %v1945 = vpop.permute.xlu0 %1944
      %1946 = vrot.lane.b32.xlu0 %v1923, 48
      %v1947 = vpop.permute.xlu0 %1946
      %1956 = vst.msk [vmem:[#allocation3] sm:$0xff] %vm738, %v1933
      %1957 = vst.msk [vmem:[#allocation3 + $0x8] sm:$0xff] %vm738, %v1935
      %1958 = vst.msk [vmem:[#allocation3 + $0x10] sm:$0xff] %vm738, %v1937
      %1959 = vst.msk [vmem:[#allocation3 + $0x18] sm:$0xff] %vm738, %v1939
      %1960 = vst.msk [vmem:[#allocation3 + $0x20] sm:$0xff] %vm738, %v1941
      %1961 = vst.msk [vmem:[#allocation3 + $0x28] sm:$0xff] %vm738, %v1943
      %1962 = vst.msk [vmem:[#allocation3 + $0x30] sm:$0xff] %vm738, %v1945
      %1963 = vst.msk [vmem:[#allocation3 + $0x38] sm:$0xff] %vm738, %v1947
      %v1964 = vld [vmem:[%s697 + $0x8] sm:$0xff]
      %v1965 = vld [vmem:[%s697 + $0x20] sm:$0xff]
      %v1966 = vld [vmem:[%s697 + $0x38] sm:$0xff]
      %v1967 = vld [vmem:[%s697 + $0x50] sm:$0xff]
      %v1968 = vld [vmem:[%s697 + $0x68] sm:$0xff]
      %v1969 = vld [vmem:[%s697 + $0x80] sm:$0xff]
      %v1970 = vld [vmem:[%s697 + $0x98] sm:$0xff]
      %v1971 = vld [vmem:[%s697 + $0xb0] sm:$0xff]
      %1980 = vrot.lane.b32.xlu0 %v1964, 56
      %v1981 = vpop.permute.xlu0 %1980
      %1982 = vrot.lane.b32.xlu0 %v1965, 56
      %v1983 = vpop.permute.xlu0 %1982
      %1984 = vrot.lane.b32.xlu0 %v1966, 56
      %v1985 = vpop.permute.xlu0 %1984
      %1986 = vrot.lane.b32.xlu0 %v1967, 56
      %v1987 = vpop.permute.xlu0 %1986
      %1988 = vrot.lane.b32.xlu0 %v1968, 56
      %v1989 = vpop.permute.xlu0 %1988
      %1990 = vrot.lane.b32.xlu0 %v1969, 56
      %v1991 = vpop.permute.xlu0 %1990
      %1992 = vrot.lane.b32.xlu0 %v1970, 56
      %v1993 = vpop.permute.xlu0 %1992
      %1994 = vrot.lane.b32.xlu0 %v1971, 56
      %v1995 = vpop.permute.xlu0 %1994
      %2004 = vst.msk [vmem:[#allocation3] sm:$0xff] %vm787, %v1981
      %2005 = vst.msk [vmem:[#allocation3 + $0x8] sm:$0xff] %vm787, %v1983
      %2006 = vst.msk [vmem:[#allocation3 + $0x10] sm:$0xff] %vm787, %v1985
      %2007 = vst.msk [vmem:[#allocation3 + $0x18] sm:$0xff] %vm787, %v1987
      %2008 = vst.msk [vmem:[#allocation3 + $0x20] sm:$0xff] %vm787, %v1989
      %2009 = vst.msk [vmem:[#allocation3 + $0x28] sm:$0xff] %vm787, %v1991
      %2010 = vst.msk [vmem:[#allocation3 + $0x30] sm:$0xff] %vm787, %v1993
      %2011 = vst.msk [vmem:[#allocation3 + $0x38] sm:$0xff] %vm787, %v1995
      %v2012 = vld [vmem:[%s697 + $0x9] sm:$0xff]
      %v2013 = vld [vmem:[%s697 + $0x21] sm:$0xff]
      %v2014 = vld [vmem:[%s697 + $0x39] sm:$0xff]
      %v2015 = vld [vmem:[%s697 + $0x51] sm:$0xff]
      %v2016 = vld [vmem:[%s697 + $0x69] sm:$0xff]
      %v2017 = vld [vmem:[%s697 + $0x81] sm:$0xff]
      %v2018 = vld [vmem:[%s697 + $0x99] sm:$0xff]
      %v2019 = vld [vmem:[%s697 + $0xb1] sm:$0xff]
      %2028 = vrot.lane.b32.xlu0 %v2012, 64
      %v2029 = vpop.permute.xlu0 %2028
      %2030 = vrot.lane.b32.xlu0 %v2013, 64
      %v2031 = vpop.permute.xlu0 %2030
      %2032 = vrot.lane.b32.xlu0 %v2014, 64
      %v2033 = vpop.permute.xlu0 %2032
      %2034 = vrot.lane.b32.xlu0 %v2015, 64
      %v2035 = vpop.permute.xlu0 %2034
      %2036 = vrot.lane.b32.xlu0 %v2016, 64
      %v2037 = vpop.permute.xlu0 %2036
      %2038 = vrot.lane.b32.xlu0 %v2017, 64
      %v2039 = vpop.permute.xlu0 %2038
      %2040 = vrot.lane.b32.xlu0 %v2018, 64
      %v2041 = vpop.permute.xlu0 %2040
      %2042 = vrot.lane.b32.xlu0 %v2019, 64
      %v2043 = vpop.permute.xlu0 %2042
      %2052 = vst.msk [vmem:[#allocation3] sm:$0xff] %vm836, %v2029
      %2053 = vst.msk [vmem:[#allocation3 + $0x8] sm:$0xff] %vm836, %v2031
      %2054 = vst.msk [vmem:[#allocation3 + $0x10] sm:$0xff] %vm836, %v2033
      %2055 = vst.msk [vmem:[#allocation3 + $0x18] sm:$0xff] %vm836, %v2035
      %2056 = vst.msk [vmem:[#allocation3 + $0x20] sm:$0xff] %vm836, %v2037
      %2057 = vst.msk [vmem:[#allocation3 + $0x28] sm:$0xff] %vm836, %v2039
      %2058 = vst.msk [vmem:[#allocation3 + $0x30] sm:$0xff] %vm836, %v2041
      %2059 = vst.msk [vmem:[#allocation3 + $0x38] sm:$0xff] %vm836, %v2043
      %v2060 = vld [vmem:[#allocation3] sm:$0xff]
      %v2061 = vld [vmem:[#allocation3 + $0x8] sm:$0xff]
      %v2062 = vld [vmem:[#allocation3 + $0x10] sm:$0xff]
      %v2063 = vld [vmem:[#allocation3 + $0x18] sm:$0xff]
      %v2064 = vld [vmem:[#allocation3 + $0x20] sm:$0xff]
      %v2065 = vld [vmem:[#allocation3 + $0x28] sm:$0xff]
      %v2066 = vld [vmem:[#allocation3 + $0x30] sm:$0xff]
      %v2067 = vld [vmem:[#allocation3 + $0x38] sm:$0xff]
      %s2068 = scalar_lea.vmem %s3, 144
      %v2069 = vld [vmem:[%s2068] sm:$0xff]
      %v2070 = vld [vmem:[%s2068 + $0x8] sm:$0xff]
      %v2071 = vld [vmem:[%s2068 + $0x10] sm:$0xff]
      %v2072 = vld [vmem:[%s2068 + $0x18] sm:$0xff]
      %v2073 = vld [vmem:[%s2068 + $0x20] sm:$0xff]
      %v2074 = vld [vmem:[%s2068 + $0x28] sm:$0xff]
      %v2075 = vld [vmem:[%s2068 + $0x30] sm:$0xff]
      %v2076 = vld [vmem:[%s2068 + $0x38] sm:$0xff]
      %v2077 = vld [vmem:[%s2068 + $0x40] sm:$0xff]
      %s2078 = scalar_lea.vmem %s4, 2
      %v2079 = vld [vmem:[%s2078] sm:$0x1]
      %v2081 = vperm.slane %v2079, 0
      %v2084 = vsel %vm866, %v2060, 0
      %v2087 = vsel %vm866, %v2061, 0
      %v2090 = vsel %vm866, %v2062, 0
      %v2093 = vsel %vm866, %v2063, 0
      %v2096 = vsel %vm866, %v2064, 0
      %v2099 = vsel %vm866, %v2065, 0
      %v2102 = vsel %vm866, %v2066, 0
      %v2105 = vsel %vm866, %v2067, 0
      %2107 = vmatpush.msra.mxu0 0.0
      %2108 = vmatpush.msra.mxu0 0.0
      %2109 = vmatpush.msra.mxu0 0.0
      %2110 = vmatpush.msra.mxu0 0.0
      %2111 = vmatpush.msra.mxu0 0.0
      %2112 = vmatpush.msra.mxu0 0.0
      %2113 = vmatpush.msra.mxu0 0.0
      %2114 = vmatpush.msra.mxu0 %v2077
      %2115 = vmatpush.msra.mxu0 %v2076
      %2116 = vmatpush.msra.mxu0 %v2075
      %2117 = vmatpush.msra.mxu0 %v2074
      %2118 = vmatpush.msra.mxu0 %v2073
      %2119 = vmatpush.msra.mxu0 %v2072
      %2120 = vmatpush.msra.mxu0 %v2071
      %2121 = vmatpush.msra.mxu0 %v2070
      %2122 = vmatpush.msra.mxu0 %v2069
      %2123 = vmatmul.f32.gmra.mxu0 %v2084
      %v2124 = vpop.f32.mrf.mxu0
      %v2125 = vadd.f32 %v2081, %v2124
      %2126 = vmatmul.f32.gmra.mxu0 %v2087
      %v2127 = vpop.f32.mrf.mxu0
      %v2128 = vadd.f32 %v2081, %v2127
      %2129 = vmatmul.f32.gmra.mxu0 %v2090
      %v2130 = vpop.f32.mrf.mxu0
      %v2131 = vadd.f32 %v2081, %v2130
      %2132 = vmatmul.f32.gmra.mxu0 %v2093
      %v2133 = vpop.f32.mrf.mxu0
      %v2134 = vadd.f32 %v2081, %v2133
      %2135 = vmatmul.f32.gmra.mxu0 %v2096
      %v2136 = vpop.f32.mrf.mxu0
      %v2137 = vadd.f32 %v2081, %v2136
      %2138 = vmatmul.f32.gmra.mxu0 %v2099
      %v2139 = vpop.f32.mrf.mxu0
      %v2140 = vadd.f32 %v2081, %v2139
      %2141 = vmatmul.f32.gmra.mxu0 %v2102
      %v2142 = vpop.f32.mrf.mxu0
      %v2143 = vadd.f32 %v2081, %v2142
      %2144 = vmatmul.f32.gmra.mxu0 %v2105
      %v2145 = vpop.f32.mrf.mxu0
      %v2146 = vadd.f32 %v2081, %v2145
      %2147 = vdwg.mxu0
      %v2148 = vmax.f32 %v2125, 0.0
      %v2149 = vmax.f32 %v2128, 0.0
      %v2150 = vmax.f32 %v2131, 0.0
      %v2151 = vmax.f32 %v2134, 0.0
      %v2152 = vmax.f32 %v2137, 0.0
      %v2153 = vmax.f32 %v2140, 0.0
      %v2154 = vmax.f32 %v2143, 0.0
      %v2155 = vmax.f32 %v2146, 0.0
      %2164 = vrot.lane.b32.xlu0 %v2148, 24
      %v2165 = vpop.permute.xlu0 %2164
      %2166 = vrot.lane.b32.xlu0 %v2149, 24
      %v2167 = vpop.permute.xlu0 %2166
      %2168 = vrot.lane.b32.xlu0 %v2150, 24
      %v2169 = vpop.permute.xlu0 %2168
      %2170 = vrot.lane.b32.xlu0 %v2151, 24
      %v2171 = vpop.permute.xlu0 %2170
      %2172 = vrot.lane.b32.xlu0 %v2152, 24
      %v2173 = vpop.permute.xlu0 %2172
      %2174 = vrot.lane.b32.xlu0 %v2153, 24
      %v2175 = vpop.permute.xlu0 %2174
      %2176 = vrot.lane.b32.xlu0 %v2154, 24
      %v2177 = vpop.permute.xlu0 %2176
      %2178 = vrot.lane.b32.xlu0 %v2155, 24
      %v2179 = vpop.permute.xlu0 %2178
      %2188 = vst.msk [vmem:[#allocation4] sm:$0xff] %vm590, %v2165
      %2189 = vst.msk [vmem:[#allocation4 + $0x8] sm:$0xff] %vm590, %v2167
      %2190 = vst.msk [vmem:[#allocation4 + $0x10] sm:$0xff] %vm590, %v2169
      %2191 = vst.msk [vmem:[#allocation4 + $0x18] sm:$0xff] %vm590, %v2171
      %2192 = vst.msk [vmem:[#allocation4 + $0x20] sm:$0xff] %vm590, %v2173
      %2193 = vst.msk [vmem:[#allocation4 + $0x28] sm:$0xff] %vm590, %v2175
      %2194 = vst.msk [vmem:[#allocation4 + $0x30] sm:$0xff] %vm590, %v2177
      %2195 = vst.msk [vmem:[#allocation4 + $0x38] sm:$0xff] %vm590, %v2179
      %v2196 = vld [vmem:[#allocation4] sm:$0xff]
      %v2197 = vld [vmem:[#allocation4 + $0x8] sm:$0xff]
      %v2198 = vld [vmem:[#allocation4 + $0x10] sm:$0xff]
      %v2199 = vld [vmem:[#allocation4 + $0x18] sm:$0xff]
      %v2200 = vld [vmem:[#allocation4 + $0x20] sm:$0xff]
      %v2201 = vld [vmem:[#allocation4 + $0x28] sm:$0xff]
      %v2202 = vld [vmem:[#allocation4 + $0x30] sm:$0xff]
      %v2203 = vld [vmem:[#allocation4 + $0x38] sm:$0xff]
      %v2204 = vld [vmem:[%s5] sm:$0xff]
      %v2205 = vld [vmem:[%s5 + $0x8] sm:$0xff]
      %v2206 = vld [vmem:[%s5 + $0x10] sm:$0xff]
      %v2207 = vld [vmem:[%s5 + $0x18] sm:$0xff]
      %v2208 = vld [vmem:[%s6] sm:$0x1]
      %v2210 = vperm.slane %v2208, 0
      %vm2212 = vcmask 261120
      %v2214 = vsel %vm2212, %v2196, 0
      %v2217 = vsel %vm2212, %v2197, 0
      %v2220 = vsel %vm2212, %v2198, 0
      %v2223 = vsel %vm2212, %v2199, 0
      %v2226 = vsel %vm2212, %v2200, 0
      %v2229 = vsel %vm2212, %v2201, 0
      %v2232 = vsel %vm2212, %v2202, 0
      %v2235 = vsel %vm2212, %v2203, 0
      %2237 = vmatpush.msra.mxu0 0.0
      %2238 = vmatpush.msra.mxu0 0.0
      %2239 = vmatpush.msra.mxu0 0.0
      %2240 = vmatpush.msra.mxu0 0.0
      %2241 = vmatpush.msra.mxu0 0.0
      %2242 = vmatpush.msra.mxu0 0.0
      %2243 = vmatpush.msra.mxu0 0.0
      %2244 = vmatpush.msra.mxu0 0.0
      %2245 = vmatpush.msra.mxu0 0.0
      %2246 = vmatpush.msra.mxu0 0.0
      %2247 = vmatpush.msra.mxu0 0.0
      %2248 = vmatpush.msra.mxu0 0.0
      %2249 = vmatpush.msra.mxu0 %v2207
      %2250 = vmatpush.msra.mxu0 %v2206
      %2251 = vmatpush.msra.mxu0 %v2205
      %2252 = vmatpush.msra.mxu0 %v2204
      %2253 = vmatmul.f32.gmra.mxu0 %v2214
      %v2254 = vpop.f32.mrf.mxu0
      %v2255 = vadd.f32 %v2210, %v2254
      %2256 = vmatmul.f32.gmra.mxu0 %v2217
      %v2257 = vpop.f32.mrf.mxu0
      %v2258 = vadd.f32 %v2210, %v2257
      %2259 = vmatmul.f32.gmra.mxu0 %v2220
      %v2260 = vpop.f32.mrf.mxu0
      %v2261 = vadd.f32 %v2210, %v2260
      %2262 = vmatmul.f32.gmra.mxu0 %v2223
      %v2263 = vpop.f32.mrf.mxu0
      %v2264 = vadd.f32 %v2210, %v2263
      %2265 = vmatmul.f32.gmra.mxu0 %v2226
      %v2266 = vpop.f32.mrf.mxu0
      %v2267 = vadd.f32 %v2210, %v2266
      %2268 = vmatmul.f32.gmra.mxu0 %v2229
      %v2269 = vpop.f32.mrf.mxu0
      %v2270 = vadd.f32 %v2210, %v2269
      %2271 = vmatmul.f32.gmra.mxu0 %v2232
      %v2272 = vpop.f32.mrf.mxu0
      %v2273 = vadd.f32 %v2210, %v2272
      %2274 = vmatmul.f32.gmra.mxu0 %v2235
      %v2275 = vpop.f32.mrf.mxu0
      %v2276 = vadd.f32 %v2210, %v2275
      %2277 = vdwg.mxu0
      %v2278 = vadd.f32 %v2255, %v279
      %v2279 = vadd.f32 %v2258, %v280
      %v2280 = vadd.f32 %v2261, %v281
      %v2281 = vadd.f32 %v2264, %v282
      %v2282 = vadd.f32 %v2267, %v283
      %v2283 = vadd.f32 %v2270, %v284
      %v2284 = vadd.f32 %v2273, %v285
      %v2285 = vadd.f32 %v2276, %v286
      %v2286 = vmax.f32 %v2278, 0.0
      %v2287 = vmax.f32 %v2279, 0.0
      %v2288 = vmax.f32 %v2280, 0.0
      %v2289 = vmax.f32 %v2281, 0.0
      %v2290 = vmax.f32 %v2282, 0.0
      %v2291 = vmax.f32 %v2283, 0.0
      %v2292 = vmax.f32 %v2284, 0.0
      %v2293 = vmax.f32 %v2285, 0.0
      %2294 = vst [vmem:[%s278] sm:$0xff] %v2286
      %2295 = vst [vmem:[%s278 + $0x8] sm:$0xff] %v2287
      %2296 = vst [vmem:[%s278 + $0x10] sm:$0xff] %v2288
      %2297 = vst [vmem:[%s278 + $0x18] sm:$0xff] %v2289
      %2298 = vst [vmem:[%s278 + $0x20] sm:$0xff] %v2290
      %2299 = vst [vmem:[%s278 + $0x28] sm:$0xff] %v2291
      %2300 = vst [vmem:[%s278 + $0x30] sm:$0xff] %v2292
      %2301 = vst [vmem:[%s278 + $0x38] sm:$0xff] %v2293
      %p2302 = scmp.lt.s32.totalorder %s18, 1
      %s2303 = scalar_select %p2302, %s18, 1
      %s2304 = smul.addr %s2303, 8
      %s2305 = smul.addr %s2304, 8
      %s2306 = scalar_lea.vmem %s7, %s2305
      // Predicated region
      $region49: #{fwd.4} parent=47 // pred_check
        %p2307 = pneg %p188
      $region50: #{fwd.4} parent=47 // pred_check_branch
        %2309 = sbr.rel (%p2307) target = $region52
      $region51: #{fwd.4} parent=47 // pred_region
        _
      $region52: #{fwd.4} parent=47 // pred_fallthru
        _
    $region48: #{fwd.4} parent=5 // pred_fallthru
      _
    %p2310 = scmp.le.s32.totalorder 2, %s13
    // Predicated region
    $region53: #{fwd.4} parent=5 // pred_check
      %p2311 = pneg %p2310
    $region54: #{fwd.4} parent=5 // pred_check_branch
      %2313 = sbr.rel (%p2311) target = $region56
    $region55: #{fwd.4} parent=5 // pred_region
      %s2314 = ssub.s32 %s13, 2
      // Predicated region
      $region57: #{fwd.4} parent=55 // pred_check
        %p2315 = pneg %p194
      $region58: #{fwd.4} parent=55 // pred_check_branch
        %2317 = sbr.rel (%p2315) target = $region60
      $region59: #{fwd.4} parent=55 // pred_region
        %p2318 = scmp.lt.s32.totalorder %s19, 1
        %s2319 = scalar_select %p2318, %s19, 1
        %s2320 = smul.addr %s2319, 8
        %s2321 = smul.addr %s2320, 8
        %s2322 = scalar_lea.vmem %s7, %s2321
      $region60: #{fwd.4} parent=55 // pred_fallthru
        _
    $region56: #{fwd.4} parent=5 // pred_fallthru
      _
  $region6: #{fwd.4} parent=0 // loop_footer
    %s17 = sadd.s32 1, %s13
  $region7: #{fwd.4} parent=0 // loop_footer_branch
    %12 = sbr.rel target = $region3
  $region8: #{fwd.4} parent=0 // loop_exit
    _

// kernel: fwd.3
$region0: #{fwd.3}
  #allocation0 [shape = 'u32[]', space=smem, size = 0x4, offset = 0x4, fixed_abs, tag = 'smem constant byte address 0x4 - core index']
  #allocation1 [shape = 'u32[72,128]{1,0:T(1,128)}', space=vmem, size = 0x9000, scoped, tag = 'internal scratch']
  #allocation2 [shape = 'f32[10,24,8]{2,1,0:T(8,128)}', space=vmem, size = 0x1e000, scoped, tag = 'scratch operand']
  #allocation3 [shape = 'f32[64,72]{1,0:T(8,128)}', space=vmem, size = 0x8000, scoped, tag = 'scratch operand']
  #allocation4 [shape = 'f32[64,32]{1,0:T(8,128)}', space=vmem, size = 0x8000, scoped, tag = 'scratch operand']
  %s0 = inlined_call_operand.vmem [shape: f32[2,64,128], index: 0, kind: input, shape index: {}]
  %s1 = inlined_call_operand.vmem [shape: f32[128,256], index: 1, kind: input, shape index: {}]
  %s2 = inlined_call_operand.vmem [shape: f32[1,256], index: 2, kind: input, shape index: {}]
  %s3 = inlined_call_operand.vmem [shape: f32[3,72,8], index: 3, kind: input, shape index: {}]
  %s4 = inlined_call_operand.vmem [shape: f32[3,1,8], index: 4, kind: input, shape index: {}]
  %s5 = inlined_call_operand.vmem [shape: f32[32,128], index: 5, kind: input, shape index: {}]
  %s6 = inlined_call_operand.vmem [shape: f32[1,128], index: 6, kind: input, shape index: {}]
  %s7 = inlined_call_operand.vmem [shape: f32[2,64,128], index: 7, kind: output, shape index: {}]
  %s8 = sld [smem:[#allocation0]]
  $region61: #{fwd.3} parent=0
    _
  %s10 = ssub.s32 1, %s8
  %s11 = scalar_select 0, %s10, %s8
  loop: start=0, step=1, limit=4
  $region2: #{fwd.3} parent=0 // loop_pre_header
    _
  $region3: #{fwd.3} parent=0 // loop_header
    %s13 = sphi 0, %s17
    %p14 = scmp.ge.s32.totalorder %s13, 4
    %s23 = sphi 0, %s25
    %s26 = sphi 0, %s23
    %s27 = sphi 0, %s26
    %s43 = sphi 0, %s27
    %s47 = sphi 0, %s47
    %s49 = sphi 0, %s47
    %s50 = sphi 0, %s49
    %s64 = sphi 0, %s50
    %s68 = sphi 0, %s68
    %s70 = sphi 0, %s68
    %s71 = sphi 0, %s70
    %s85 = sphi 0, %s71
    %s89 = sphi 0, %s89
    %s91 = sphi 0, %s89
    %s92 = sphi 0, %s91
    %s106 = sphi 0, %s92
    %s110 = sphi 0, %s110
    %s112 = sphi 0, %s110
    %s113 = sphi 0, %s112
    %s127 = sphi 0, %s113
    %s131 = sphi 0, %s131
    %s133 = sphi 0, %s131
    %s134 = sphi 0, %s133
    %s148 = sphi 0, %s134
    %s152 = sphi 0, %s152
    %s154 = sphi 0, %s152
    %s155 = sphi 0, %s154
    %s169 = sphi 0, %s155
    %s175 = sphi 0, %s177
    %s178 = sphi 0, %s175
    %s179 = sphi 0, %s178
    %s195 = sphi 0, %s179
  $region4: #{fwd.3} parent=0 // loop_header_branch
    %16 = sbr.rel (%p14) target = $region8
  $region5: #{fwd.3} parent=0 // loop_body
    %s18 = ssub.s32 %s13, 1
    %s19 = ssub.s32 %s13, 2
    %s20 = sadd.s32 %s13, 1
    %s21 = ssub.s32 %s13, %s20
    %p22 = scmp.eq.s32.totalorder %s21, 0
    %s24 = sadd.s32 %s23, 1
    %s25 = scalar_select %p22, %s23, %s24
    %p28 = pneg %p22
    %p29 = scmp.eq.s32.totalorder %s13, 1
    %p30 = por %p28, %p29
    %p31 = scmp.ne.s32.totalorder %s23, %s26
    %p32 = scmp.eq.s32.totalorder %s13, 0
    %p33 = por %p31, %p32
    %p34 = scmp.ne.s32.totalorder %s23, %s26
    %p35 = scmp.eq.s32.totalorder %s18, 1
    %p36 = por %p34, %p35
    %p37 = scmp.ne.s32.totalorder %s26, %s27
    %p38 = scmp.eq.s32.totalorder %s18, 0
    %p39 = por %p37, %p38
    %p40 = scmp.ne.s32.totalorder %s26, %s27
    %p41 = scmp.eq.s32.totalorder %s19, 1
    %p42 = por %p40, %p41
    %p44 = scmp.ne.s32.totalorder %s27, %s43
    %p45 = scmp.eq.s32.totalorder %s19, 0
    %p46 = por %p44, %p45
    %s48 = sadd.s32 %s47, 1
    %p51 = scmp.eq.s32.totalorder %s13, 1
    %p52 = scmp.ne.s32.totalorder %s47, %s49
    %p53 = scmp.eq.s32.totalorder %s13, 0
    %p54 = por %p52, %p53
    %p55 = scmp.ne.s32.totalorder %s47, %s49
    %p56 = scmp.eq.s32.totalorder %s18, 1
    %p57 = por %p55, %p56
    %p58 = scmp.ne.s32.totalorder %s49, %s50
    %p59 = scmp.eq.s32.totalorder %s18, 0
    %p60 = por %p58, %p59
    %p61 = scmp.ne.s32.totalorder %s49, %s50
    %p62 = scmp.eq.s32.totalorder %s19, 1
    %p63 = por %p61, %p62
    %p65 = scmp.ne.s32.totalorder %s50, %s64
    %p66 = scmp.eq.s32.totalorder %s19, 0
    %p67 = por %p65, %p66
    %s69 = sadd.s32 %s68, 1
    %p72 = scmp.eq.s32.totalorder %s13, 1
    %p73 = scmp.ne.s32.totalorder %s68, %s70
    %p74 = scmp.eq.s32.totalorder %s13, 0
    %p75 = por %p73, %p74
    %p76 = scmp.ne.s32.totalorder %s68, %s70
    %p77 = scmp.eq.s32.totalorder %s18, 1
    %p78 = por %p76, %p77
    %p79 = scmp.ne.s32.totalorder %s70, %s71
    %p80 = scmp.eq.s32.totalorder %s18, 0
    %p81 = por %p79, %p80
    %p82 = scmp.ne.s32.totalorder %s70, %s71
    %p83 = scmp.eq.s32.totalorder %s19, 1
    %p84 = por %p82, %p83
    %p86 = scmp.ne.s32.totalorder %s71, %s85
    %p87 = scmp.eq.s32.totalorder %s19, 0
    %p88 = por %p86, %p87
    %s90 = sadd.s32 %s89, 1
    %p93 = scmp.eq.s32.totalorder %s13, 1
    %p94 = scmp.ne.s32.totalorder %s89, %s91
    %p95 = scmp.eq.s32.totalorder %s13, 0
    %p96 = por %p94, %p95
    %p97 = scmp.ne.s32.totalorder %s89, %s91
    %p98 = scmp.eq.s32.totalorder %s18, 1
    %p99 = por %p97, %p98
    %p100 = scmp.ne.s32.totalorder %s91, %s92
    %p101 = scmp.eq.s32.totalorder %s18, 0
    %p102 = por %p100, %p101
    %p103 = scmp.ne.s32.totalorder %s91, %s92
    %p104 = scmp.eq.s32.totalorder %s19, 1
    %p105 = por %p103, %p104
    %p107 = scmp.ne.s32.totalorder %s92, %s106
    %p108 = scmp.eq.s32.totalorder %s19, 0
    %p109 = por %p107, %p108
    %s111 = sadd.s32 %s110, 1
    %p114 = scmp.eq.s32.totalorder %s13, 1
    %p115 = scmp.ne.s32.totalorder %s110, %s112
    %p116 = scmp.eq.s32.totalorder %s13, 0
    %p117 = por %p115, %p116
    %p118 = scmp.ne.s32.totalorder %s110, %s112
    %p119 = scmp.eq.s32.totalorder %s18, 1
    %p120 = por %p118, %p119
    %p121 = scmp.ne.s32.totalorder %s112, %s113
    %p122 = scmp.eq.s32.totalorder %s18, 0
    %p123 = por %p121, %p122
    %p124 = scmp.ne.s32.totalorder %s112, %s113
    %p125 = scmp.eq.s32.totalorder %s19, 1
    %p126 = por %p124, %p125
    %p128 = scmp.ne.s32.totalorder %s113, %s127
    %p129 = scmp.eq.s32.totalorder %s19, 0
    %p130 = por %p128, %p129
    %s132 = sadd.s32 %s131, 1
    %p135 = scmp.eq.s32.totalorder %s13, 1
    %p136 = scmp.ne.s32.totalorder %s131, %s133
    %p137 = scmp.eq.s32.totalorder %s13, 0
    %p138 = por %p136, %p137
    %p139 = scmp.ne.s32.totalorder %s131, %s133
    %p140 = scmp.eq.s32.totalorder %s18, 1
    %p141 = por %p139, %p140
    %p142 = scmp.ne.s32.totalorder %s133, %s134
    %p143 = scmp.eq.s32.totalorder %s18, 0
    %p144 = por %p142, %p143
    %p145 = scmp.ne.s32.totalorder %s133, %s134
    %p146 = scmp.eq.s32.totalorder %s19, 1
    %p147 = por %p145, %p146
    %p149 = scmp.ne.s32.totalorder %s134, %s148
    %p150 = scmp.eq.s32.totalorder %s19, 0
    %p151 = por %p149, %p150
    %s153 = sadd.s32 %s152, 1
    %p156 = scmp.eq.s32.totalorder %s13, 1
    %p157 = scmp.ne.s32.totalorder %s152, %s154
    %p158 = scmp.eq.s32.totalorder %s13, 0
    %p159 = por %p157, %p158
    %p160 = scmp.ne.s32.totalorder %s152, %s154
    %p161 = scmp.eq.s32.totalorder %s18, 1
    %p162 = por %p160, %p161
    %p163 = scmp.ne.s32.totalorder %s154, %s155
    %p164 = scmp.eq.s32.totalorder %s18, 0
    %p165 = por %p163, %p164
    %p166 = scmp.ne.s32.totalorder %s154, %s155
    %p167 = scmp.eq.s32.totalorder %s19, 1
    %p168 = por %p166, %p167
    %p170 = scmp.ne.s32.totalorder %s155, %s169
    %p171 = scmp.eq.s32.totalorder %s19, 0
    %p172 = por %p170, %p171
    %s173 = ssub.s32 %s13, %s20
    %p174 = scmp.eq.s32.totalorder %s173, 0
    %s176 = sadd.s32 %s175, 1
    %s177 = scalar_select %p174, %s175, %s176
    %p180 = pneg %p174
    %p181 = scmp.eq.s32.totalorder %s13, 1
    %p182 = por %p180, %p181
    %p183 = scmp.ne.s32.totalorder %s175, %s178
    %p184 = scmp.eq.s32.totalorder %s13, 0
    %p185 = por %p183, %p184
    %p186 = scmp.ne.s32.totalorder %s175, %s178
    %p187 = scmp.eq.s32.totalorder %s18, 1
    %p188 = por %p186, %p187
    %p189 = scmp.ne.s32.totalorder %s178, %s179
    %p190 = scmp.eq.s32.totalorder %s18, 0
    %p191 = por %p189, %p190
    %p192 = scmp.ne.s32.totalorder %s178, %s179
    %p193 = scmp.eq.s32.totalorder %s19, 1
    %p194 = por %p192, %p193
    %p196 = scmp.ne.s32.totalorder %s179, %s195
    %p197 = scmp.eq.s32.totalorder %s19, 0
    %p198 = por %p196, %p197
    %p199 = scmp.le.s32.totalorder 1, %s13
    %p200 = scmp.lt.s32.totalorder %s13, 3
    %p201 = pnand %p199, %p200
    %p202 = pneg %p201
    // Predicated region
    $region9: #{fwd.3} parent=5 // pred_check
      _
    $region10: #{fwd.3} parent=5 // pred_check_branch
      %204 = sbr.rel (%p201) target = $region12
    $region11: #{fwd.3} parent=5 // pred_region
      %s205 = ssub.s32 %s13, 1
      // Predicated region
      $region13: #{fwd.3} parent=11 // pred_check
        %p206 = pneg %p60
      $region14: #{fwd.3} parent=11 // pred_check_branch
        %208 = sbr.rel (%p206) target = $region16
      $region15: #{fwd.3} parent=11 // pred_region
        _
      $region16: #{fwd.3} parent=11 // pred_fallthru
        _
      // Predicated region
      $region17: #{fwd.3} parent=11 // pred_check
        %p209 = pneg %p81
      $region18: #{fwd.3} parent=11 // pred_check_branch
        %211 = sbr.rel (%p209) target = $region20
      $region19: #{fwd.3} parent=11 // pred_region
        _
      $region20: #{fwd.3} parent=11 // pred_fallthru
        _
      // Predicated region
      $region21: #{fwd.3} parent=11 // pred_check
        %p212 = pneg %p102
      $region22: #{fwd.3} parent=11 // pred_check_branch
        %214 = sbr.rel (%p212) target = $region24
      $region23: #{fwd.3} parent=11 // pred_region
        _
      $region24: #{fwd.3} parent=11 // pred_fallthru
        _
      // Predicated region
      $region25: #{fwd.3} parent=11 // pred_check
        %p215 = pneg %p123
      $region26: #{fwd.3} parent=11 // pred_check_branch
        %217 = sbr.rel (%p215) target = $region28
      $region27: #{fwd.3} parent=11 // pred_region
        _
      $region28: #{fwd.3} parent=11 // pred_fallthru
        _
      // Predicated region
      $region29: #{fwd.3} parent=11 // pred_check
        %p218 = pneg %p144
      $region30: #{fwd.3} parent=11 // pred_check_branch
        %220 = sbr.rel (%p218) target = $region32
      $region31: #{fwd.3} parent=11 // pred_region
        _
      $region32: #{fwd.3} parent=11 // pred_fallthru
        _
      // Predicated region
      $region33: #{fwd.3} parent=11 // pred_check
        %p221 = pneg %p165
      $region34: #{fwd.3} parent=11 // pred_check_branch
        %223 = sbr.rel (%p221) target = $region36
      $region35: #{fwd.3} parent=11 // pred_region
        _
      $region36: #{fwd.3} parent=11 // pred_fallthru
        _
    $region12: #{fwd.3} parent=5 // pred_fallthru
      _
    %p224 = scmp.lt.s32.totalorder %s13, 2
    // Predicated region
    $region37: #{fwd.3} parent=5 // pred_check
      %p225 = pneg %p224
    $region38: #{fwd.3} parent=5 // pred_check_branch
      %227 = sbr.rel (%p225) target = $region40
    $region39: #{fwd.3} parent=5 // pred_region
      // Predicated region
      $region41: #{fwd.3} parent=39 // pred_check
        %p228 = pneg %p33
      $region42: #{fwd.3} parent=39 // pred_check_branch
        %230 = sbr.rel (%p228) target = $region44
      $region43: #{fwd.3} parent=39 // pred_region
        %p231 = scmp.lt.s32.totalorder %s13, 1
        %s232 = scalar_select %p231, %s13, 1
        %s233 = smul.addr %s232, 8
        %s234 = smul.addr %s233, 8
        %s235 = scalar_lea.vmem %s0, %s234
      $region44: #{fwd.3} parent=39 // pred_fallthru
        _
    $region40: #{fwd.3} parent=5 // pred_fallthru
      _
    %p236 = scmp.le.s32.totalorder 1, %s13
    %p237 = scmp.lt.s32.totalorder %s13, 3
    %p238 = pnand %p236, %p237
    %p239 = pneg %p238
    // Predicated region
    $region45: #{fwd.3} parent=5 // pred_check
      _
    $region46: #{fwd.3} parent=5 // pred_check_branch
      %241 = sbr.rel (%p238) target = $region48
    $region47: #{fwd.3} parent=5 // pred_region
      %s242 = ssub.s32 %s13, 1
      %p243 = scmp.lt.s32.totalorder %s18, 1
      %s244 = scalar_select %p243, %s18, 1
      %s245 = smul.addr %s244, 8
      %s246 = smul.addr %s245, 8
      %s247 = scalar_lea.vmem %s0, %s246
      %p248 = pneg %p39
      %p249 = pneg %p36
      %p250 = pneg %p60
      %p251 = pneg %p57
      %p252 = pneg %p81
      %p253 = pneg %p78
      %p254 = pneg %p102
      %p255 = pneg %p99
      %p256 = pneg %p123
      %p257 = pneg %p120
      %p258 = pneg %p144
      %p259 = pneg %p141
      %p260 = pneg %p165
      %p261 = pneg %p162
      %p262 = pneg %p191
      %p263 = pneg %p188
      %p264 = scmp.lt.s32.totalorder %s18, 1
      %s265 = scalar_select %p264, %s18, 1
      %s266 = smul.addr %s265, 8
      %s267 = smul.addr %s266, 8
      %s268 = scalar_lea.vmem %s7, %s267
      %p269 = scmp.lt.s32.totalorder %s18, 1
      %s270 = scalar_select %p269, %s18, 1
      %s271 = smul.addr %s270, 8
      %s272 = smul.addr %s271, 8
      %s273 = scalar_lea.vmem %s0, %s272
      %p274 = scmp.lt.s32.totalorder %s18, 1
      %s275 = scalar_select %p274, %s18, 1
      %s276 = smul.addr %s275, 8
      %s277 = smul.addr %s276, 8
      %s278 = scalar_lea.vmem %s7, %s277
      %v279 = vld [vmem:[%s273] sm:$0xff]
      %v280 = vld [vmem:[%s273 + $0x8] sm:$0xff]
      %v281 = vld [vmem:[%s273 + $0x10] sm:$0xff]
      %v282 = vld [vmem:[%s273 + $0x18] sm:$0xff]
      %v283 = vld [vmem:[%s273 + $0x20] sm:$0xff]
      %v284 = vld [vmem:[%s273 + $0x28] sm:$0xff]
      %v285 = vld [vmem:[%s273 + $0x30] sm:$0xff]
      %v286 = vld [vmem:[%s273 + $0x38] sm:$0xff]
      %v287 = vld [vmem:[%s1] sm:$0xff]
      %v288 = vld [vmem:[%s1 + $0x8] sm:$0xff]
      %v289 = vld [vmem:[%s1 + $0x10] sm:$0xff]
      %v290 = vld [vmem:[%s1 + $0x18] sm:$0xff]
      %v291 = vld [vmem:[%s1 + $0x20] sm:$0xff]
      %v292 = vld [vmem:[%s1 + $0x28] sm:$0xff]
      %v293 = vld [vmem:[%s1 + $0x30] sm:$0xff]
      %v294 = vld [vmem:[%s1 + $0x38] sm:$0xff]
      %v295 = vld [vmem:[%s1 + $0x40] sm:$0xff]
      %v296 = vld [vmem:[%s1 + $0x48] sm:$0xff]
      %v297 = vld [vmem:[%s1 + $0x50] sm:$0xff]
      %v298 = vld [vmem:[%s1 + $0x58] sm:$0xff]
      %v299 = vld [vmem:[%s1 + $0x60] sm:$0xff]
      %v300 = vld [vmem:[%s1 + $0x68] sm:$0xff]
      %v301 = vld [vmem:[%s1 + $0x70] sm:$0xff]
      %v302 = vld [vmem:[%s1 + $0x78] sm:$0xff]
      %v303 = vld [vmem:[%s1 + $0x80] sm:$0xff]
      %v304 = vld [vmem:[%s1 + $0x88] sm:$0xff]
      %v305 = vld [vmem:[%s1 + $0x90] sm:$0xff]
      %v306 = vld [vmem:[%s1 + $0x98] sm:$0xff]
      %v307 = vld [vmem:[%s1 + $0xa0] sm:$0xff]
      %v308 = vld [vmem:[%s1 + $0xa8] sm:$0xff]
      %v309 = vld [vmem:[%s1 + $0xb0] sm:$0xff]
      %v310 = vld [vmem:[%s1 + $0xb8] sm:$0xff]
      %v311 = vld [vmem:[%s1 + $0xc0] sm:$0xff]
      %v312 = vld [vmem:[%s1 + $0xc8] sm:$0xff]
      %v313 = vld [vmem:[%s1 + $0xd0] sm:$0xff]
      %v314 = vld [vmem:[%s1 + $0xd8] sm:$0xff]
      %v315 = vld [vmem:[%s1 + $0xe0] sm:$0xff]
      %v316 = vld [vmem:[%s1 + $0xe8] sm:$0xff]
      %v317 = vld [vmem:[%s1 + $0xf0] sm:$0xff]
      %v318 = vld [vmem:[%s1 + $0xf8] sm:$0xff]
      %v319 = vld [vmem:[%s2] sm:$0x3]
      %v321 = vperm.slane %v319, 0
      %v322 = vperm.slane %v319, 1
      %325 = vmatpush.msra.mxu0 %v317
      %326 = vmatpush.msra.mxu0 %v315
      %327 = vmatpush.msra.mxu0 %v313
      %328 = vmatpush.msra.mxu0 %v311
      %329 = vmatpush.msra.mxu0 %v309
      %330 = vmatpush.msra.mxu0 %v307
      %331 = vmatpush.msra.mxu0 %v305
      %332 = vmatpush.msra.mxu0 %v303
      %333 = vmatpush.msra.mxu0 %v301
      %334 = vmatpush.msra.mxu0 %v299
      %335 = vmatpush.msra.mxu0 %v297
      %336 = vmatpush.msra.mxu0 %v295
      %337 = vmatpush.msra.mxu0 %v293
      %338 = vmatpush.msra.mxu0 %v291
      %339 = vmatpush.msra.mxu0 %v289
      %340 = vmatpush.msra.mxu0 %v287
      %341 = vmatmul.f32.gmra.mxu0 %v279
      %v342 = vpop.f32.mrf.mxu0
      %v343 = vadd.f32 %v321, %v342
      %344 = vmatmul.f32.gmra.mxu0 %v280
      %v345 = vpop.f32.mrf.mxu0
      %v346 = vadd.f32 %v321, %v345
      %347 = vmatmul.f32.gmra.mxu0 %v281
      %v348 = vpop.f32.mrf.mxu0
      %v349 = vadd.f32 %v321, %v348
      %350 = vmatmul.f32.gmra.mxu0 %v282
      %v351 = vpop.f32.mrf.mxu0
      %v352 = vadd.f32 %v321, %v351
      %353 = vmatmul.f32.gmra.mxu0 %v283
      %v354 = vpop.f32.mrf.mxu0
      %v355 = vadd.f32 %v321, %v354
      %356 = vmatmul.f32.gmra.mxu0 %v284
      %v357 = vpop.f32.mrf.mxu0
      %v358 = vadd.f32 %v321, %v357
      %359 = vmatmul.f32.gmra.mxu0 %v285
      %v360 = vpop.f32.mrf.mxu0
      %v361 = vadd.f32 %v321, %v360
      %362 = vmatmul.f32.gmra.mxu0 %v286
      %v363 = vpop.f32.mrf.mxu0
      %v364 = vadd.f32 %v321, %v363
      %365 = vdwg.mxu0
      %366 = vmatpush.msra.mxu0 %v318
      %367 = vmatpush.msra.mxu0 %v316
      %368 = vmatpush.msra.mxu0 %v314
      %369 = vmatpush.msra.mxu0 %v312
      %370 = vmatpush.msra.mxu0 %v310
      %371 = vmatpush.msra.mxu0 %v308
      %372 = vmatpush.msra.mxu0 %v306
      %373 = vmatpush.msra.mxu0 %v304
      %374 = vmatpush.msra.mxu0 %v302
      %375 = vmatpush.msra.mxu0 %v300
      %376 = vmatpush.msra.mxu0 %v298
      %377 = vmatpush.msra.mxu0 %v296
      %378 = vmatpush.msra.mxu0 %v294
      %379 = vmatpush.msra.mxu0 %v292
      %380 = vmatpush.msra.mxu0 %v290
      %381 = vmatpush.msra.mxu0 %v288
      %382 = vmatmul.f32.gmra.mxu0 %v279
      %v383 = vpop.f32.mrf.mxu0
      %v384 = vadd.f32 %v322, %v383
      %385 = vmatmul.f32.gmra.mxu0 %v280
      %v386 = vpop.f32.mrf.mxu0
      %v387 = vadd.f32 %v322, %v386
      %388 = vmatmul.f32.gmra.mxu0 %v281
      %v389 = vpop.f32.mrf.mxu0
      %v390 = vadd.f32 %v322, %v389
      %391 = vmatmul.f32.gmra.mxu0 %v282
      %v392 = vpop.f32.mrf.mxu0
      %v393 = vadd.f32 %v322, %v392
      %394 = vmatmul.f32.gmra.mxu0 %v283
      %v395 = vpop.f32.mrf.mxu0
      %v396 = vadd.f32 %v322, %v395
      %397 = vmatmul.f32.gmra.mxu0 %v284
      %v398 = vpop.f32.mrf.mxu0
      %v399 = vadd.f32 %v322, %v398
      %400 = vmatmul.f32.gmra.mxu0 %v285
      %v401 = vpop.f32.mrf.mxu0
      %v402 = vadd.f32 %v322, %v401
      %403 = vmatmul.f32.gmra.mxu0 %v286
      %v404 = vpop.f32.mrf.mxu0
      %v405 = vadd.f32 %v322, %v404
      %406 = vdwg.mxu0
      %v407 = vmax.f32 %v343, 0.0
      %v408 = vmax.f32 %v346, 0.0
      %v409 = vmax.f32 %v349, 0.0
      %v410 = vmax.f32 %v352, 0.0
      %v411 = vmax.f32 %v355, 0.0
      %v412 = vmax.f32 %v358, 0.0
      %v413 = vmax.f32 %v361, 0.0
      %v414 = vmax.f32 %v364, 0.0
      %vm415 = vcmask 64512
      %416 = vst.msk [vmem:[#allocation4] sm:$0xff] %vm415, %v407
      %417 = vst.msk [vmem:[#allocation4 + $0x8] sm:$0xff] %vm415, %v408
      %418 = vst.msk [vmem:[#allocation4 + $0x10] sm:$0xff] %vm415, %v409
      %419 = vst.msk [vmem:[#allocation4 + $0x18] sm:$0xff] %vm415, %v410
      %420 = vst.msk [vmem:[#allocation4 + $0x20] sm:$0xff] %vm415, %v411
      %421 = vst.msk [vmem:[#allocation4 + $0x28] sm:$0xff] %vm415, %v412
      %422 = vst.msk [vmem:[#allocation4 + $0x30] sm:$0xff] %vm415, %v413
      %423 = vst.msk [vmem:[#allocation4 + $0x38] sm:$0xff] %vm415, %v414
      %424 = vst.msk [vmem:[#allocation2] sm:$0xff] %vm415, 0.0
      %425 = vst.msk [vmem:[#allocation2 + $0x8] sm:$0xff] %vm415, 0.0
      %426 = vst.msk [vmem:[#allocation2 + $0x10] sm:$0xff] %vm415, 0.0
      %427 = vst.msk [vmem:[#allocation2 + $0x18] sm:$0xff] %vm415, 0.0
      %428 = vst.msk [vmem:[#allocation2 + $0x20] sm:$0xff] %vm415, 0.0
      %429 = vst.msk [vmem:[#allocation2 + $0x28] sm:$0xff] %vm415, 0.0
      %430 = vst.msk [vmem:[#allocation2 + $0x30] sm:$0xff] %vm415, 0.0
      %431 = vst.msk [vmem:[#allocation2 + $0x38] sm:$0xff] %vm415, 0.0
      %432 = vst.msk [vmem:[#allocation2 + $0x40] sm:$0xff] %vm415, 0.0
      %433 = vst.msk [vmem:[#allocation2 + $0x48] sm:$0xff] %vm415, 0.0
      %434 = vst.msk [vmem:[#allocation2 + $0x50] sm:$0xff] %vm415, 0.0
      %435 = vst.msk [vmem:[#allocation2 + $0x58] sm:$0xff] %vm415, 0.0
      %436 = vst.msk [vmem:[#allocation2 + $0x60] sm:$0xff] %vm415, 0.0
      %437 = vst.msk [vmem:[#allocation2 + $0x68] sm:$0xff] %vm415, 0.0
      %438 = vst.msk [vmem:[#allocation2 + $0x70] sm:$0xff] %vm415, 0.0
      %439 = vst.msk [vmem:[#allocation2 + $0x78] sm:$0xff] %vm415, 0.0
      %440 = vst.msk [vmem:[#allocation2 + $0x80] sm:$0xff] %vm415, 0.0
      %441 = vst.msk [vmem:[#allocation2 + $0x88] sm:$0xff] %vm415, 0.0
      %442 = vst.msk [vmem:[#allocation2 + $0x90] sm:$0xff] %vm415, 0.0
      %443 = vst.msk [vmem:[#allocation2 + $0x98] sm:$0xff] %vm415, 0.0
      %444 = vst.msk [vmem:[#allocation2 + $0xa0] sm:$0xff] %vm415, 0.0
      %445 = vst.msk [vmem:[#allocation2 + $0xa8] sm:$0xff] %vm415, 0.0
      %446 = vst.msk [vmem:[#allocation2 + $0xb0] sm:$0xff] %vm415, 0.0
      %447 = vst.msk [vmem:[#allocation2 + $0xb8] sm:$0xff] %vm415, 0.0
      %448 = vst.msk [vmem:[#allocation2 + $0xc0] sm:$0xff] %vm415, 0.0
      %449 = vst.msk [vmem:[#allocation2 + $0xc8] sm:$0xff] %vm415, 0.0
      %450 = vst.msk [vmem:[#allocation2 + $0xd0] sm:$0xff] %vm415, 0.0
      %451 = vst.msk [vmem:[#allocation2 + $0xd8] sm:$0xff] %vm415, 0.0
      %452 = vst.msk [vmem:[#allocation2 + $0xe0] sm:$0xff] %vm415, 0.0
      %453 = vst.msk [vmem:[#allocation2 + $0xe8] sm:$0xff] %vm415, 0.0
      %462 = vrot.lane.b32.xlu0 %v407, 120
      %v463 = vpop.permute.xlu0 %462
      %464 = vrot.lane.b32.xlu0 %v408, 120
      %v465 = vpop.permute.xlu0 %464
      %466 = vrot.lane.b32.xlu0 %v409, 120
      %v467 = vpop.permute.xlu0 %466
      %468 = vrot.lane.b32.xlu0 %v410, 120
      %v469 = vpop.permute.xlu0 %468
      %470 = vrot.lane.b32.xlu0 %v411, 120
      %v471 = vpop.permute.xlu0 %470
      %472 = vrot.lane.b32.xlu0 %v412, 120
      %v473 = vpop.permute.xlu0 %472
      %474 = vrot.lane.b32.xlu0 %v413, 120
      %v475 = vpop.permute.xlu0 %474
      %476 = vrot.lane.b32.xlu0 %v414, 120
      %v477 = vpop.permute.xlu0 %476
      %s486 = scalar_lea.vmem [#allocation2], 24
      %487 = vst.msk [vmem:[%s486 + $0x8] sm:$0xff] %vm415, %v463
      %488 = vst.msk [vmem:[%s486 + $0x20] sm:$0xff] %vm415, %v465
      %489 = vst.msk [vmem:[%s486 + $0x38] sm:$0xff] %vm415, %v467
      %490 = vst.msk [vmem:[%s486 + $0x50] sm:$0xff] %vm415, %v469
      %491 = vst.msk [vmem:[%s486 + $0x68] sm:$0xff] %vm415, %v471
      %492 = vst.msk [vmem:[%s486 + $0x80] sm:$0xff] %vm415, %v473
      %493 = vst.msk [vmem:[%s486 + $0x98] sm:$0xff] %vm415, %v475
      %494 = vst.msk [vmem:[%s486 + $0xb0] sm:$0xff] %vm415, %v477
      %v495 = vld [vmem:[#allocation2 + $0x7] sm:$0xff]
      %v496 = vld [vmem:[#allocation2 + $0x1f] sm:$0xff]
      %v497 = vld [vmem:[#allocation2 + $0x37] sm:$0xff]
      %v498 = vld [vmem:[#allocation2 + $0x4f] sm:$0xff]
      %v499 = vld [vmem:[#allocation2 + $0x67] sm:$0xff]
      %v500 = vld [vmem:[#allocation2 + $0x7f] sm:$0xff]
      %v501 = vld [vmem:[#allocation2 + $0x97] sm:$0xff]
      %v502 = vld [vmem:[#allocation2 + $0xaf] sm:$0xff]
      %503 = vst.msk [vmem:[#allocation3] sm:$0xff] %vm415, %v495
      %504 = vst.msk [vmem:[#allocation3 + $0x8] sm:$0xff] %vm415, %v496
      %505 = vst.msk [vmem:[#allocation3 + $0x10] sm:$0xff] %vm415, %v497
      %506 = vst.msk [vmem:[#allocation3 + $0x18] sm:$0xff] %vm415, %v498
      %507 = vst.msk [vmem:[#allocation3 + $0x20] sm:$0xff] %vm415, %v499
      %508 = vst.msk [vmem:[#allocation3 + $0x28] sm:$0xff] %vm415, %v500
      %509 = vst.msk [vmem:[#allocation3 + $0x30] sm:$0xff] %vm415, %v501
      %510 = vst.msk [vmem:[#allocation3 + $0x38] sm:$0xff] %vm415, %v502
      %v511 = vld [vmem:[#allocation2 + $0x8] sm:$0xff]
      %v512 = vld [vmem:[#allocation2 + $0x20] sm:$0xff]
      %v513 = vld [vmem:[#allocation2 + $0x38] sm:$0xff]
      %v514 = vld [vmem:[#allocation2 + $0x50] sm:$0xff]
      %v515 = vld [vmem:[#allocation2 + $0x68] sm:$0xff]
      %v516 = vld [vmem:[#allocation2 + $0x80] sm:$0xff]
      %v517 = vld [vmem:[#allocation2 + $0x98] sm:$0xff]
      %v518 = vld [vmem:[#allocation2 + $0xb0] sm:$0xff]
      %527 = vrot.lane.b32.xlu0 %v511, 8
      %v528 = vpop.permute.xlu0 %527
      %529 = vrot.lane.b32.xlu0 %v512, 8
      %v530 = vpop.permute.xlu0 %529
      %531 = vrot.lane.b32.xlu0 %v513, 8
      %v532 = vpop.permute.xlu0 %531
      %533 = vrot.lane.b32.xlu0 %v514, 8
      %v534 = vpop.permute.xlu0 %533
      %535 = vrot.lane.b32.xlu0 %v515, 8
      %v536 = vpop.permute.xlu0 %535
      %537 = vrot.lane.b32.xlu0 %v516, 8
      %v538 = vpop.permute.xlu0 %537
      %539 = vrot.lane.b32.xlu0 %v517, 8
      %v540 = vpop.permute.xlu0 %539
      %541 = vrot.lane.b32.xlu0 %v518, 8
      %v542 = vpop.permute.xlu0 %541
      %vm551 = vcmask 130112
      %552 = vst.msk [vmem:[#allocation3] sm:$0xff] %vm551, %v528
      %553 = vst.msk [vmem:[#allocation3 + $0x8] sm:$0xff] %vm551, %v530
      %554 = vst.msk [vmem:[#allocation3 + $0x10] sm:$0xff] %vm551, %v532
      %555 = vst.msk [vmem:[#allocation3 + $0x18] sm:$0xff] %vm551, %v534
      %556 = vst.msk [vmem:[#allocation3 + $0x20] sm:$0xff] %vm551, %v536
      %557 = vst.msk [vmem:[#allocation3 + $0x28] sm:$0xff] %vm551, %v538
      %558 = vst.msk [vmem:[#allocation3 + $0x30] sm:$0xff] %vm551, %v540
      %559 = vst.msk [vmem:[#allocation3 + $0x38] sm:$0xff] %vm551, %v542
      %v560 = vld [vmem:[#allocation2 + $0x9] sm:$0xff]
      %v561 = vld [vmem:[#allocation2 + $0x21] sm:$0xff]
      %v562 = vld [vmem:[#allocation2 + $0x39] sm:$0xff]
      %v563 = vld [vmem:[#allocation2 + $0x51] sm:$0xff]
      %v564 = vld [vmem:[#allocation2 + $0x69] sm:$0xff]
      %v565 = vld [vmem:[#allocation2 + $0x81] sm:$0xff]
      %v566 = vld [vmem:[#allocation2 + $0x99] sm:$0xff]
      %v567 = vld [vmem:[#allocation2 + $0xb1] sm:$0xff]
      %576 = vrot.lane.b32.xlu0 %v560, 16
      %v577 = vpop.permute.xlu0 %576
      %578 = vrot.lane.b32.xlu0 %v561, 16
      %v579 = vpop.permute.xlu0 %578
      %580 = vrot.lane.b32.xlu0 %v562, 16
      %v581 = vpop.permute.xlu0 %580
      %582 = vrot.lane.b32.xlu0 %v563, 16
      %v583 = vpop.permute.xlu0 %582
      %584 = vrot.lane.b32.xlu0 %v564, 16
      %v585 = vpop.permute.xlu0 %584
      %586 = vrot.lane.b32.xlu0 %v565, 16
      %v587 = vpop.permute.xlu0 %586
      %588 = vrot.lane.b32.xlu0 %v566, 16
      %v589 = vpop.permute.xlu0 %588
      %590 = vrot.lane.b32.xlu0 %v567, 16
      %v591 = vpop.permute.xlu0 %590
      %vm600 = vcmask 195712
      %601 = vst.msk [vmem:[#allocation3] sm:$0xff] %vm600, %v577
      %602 = vst.msk [vmem:[#allocation3 + $0x8] sm:$0xff] %vm600, %v579
      %603 = vst.msk [vmem:[#allocation3 + $0x10] sm:$0xff] %vm600, %v581
      %604 = vst.msk [vmem:[#allocation3 + $0x18] sm:$0xff] %vm600, %v583
      %605 = vst.msk [vmem:[#allocation3 + $0x20] sm:$0xff] %vm600, %v585
      %606 = vst.msk [vmem:[#allocation3 + $0x28] sm:$0xff] %vm600, %v587
      %607 = vst.msk [vmem:[#allocation3 + $0x30] sm:$0xff] %vm600, %v589
      %608 = vst.msk [vmem:[#allocation3 + $0x38] sm:$0xff] %vm600, %v591
      %v609 = vld [vmem:[%s486 + $0x7] sm:$0xff]
      %v610 = vld [vmem:[%s486 + $0x1f] sm:$0xff]
      %v611 = vld [vmem:[%s486 + $0x37] sm:$0xff]
      %v612 = vld [vmem:[%s486 + $0x4f] sm:$0xff]
      %v613 = vld [vmem:[%s486 + $0x67] sm:$0xff]
      %v614 = vld [vmem:[%s486 + $0x7f] sm:$0xff]
      %v615 = vld [vmem:[%s486 + $0x97] sm:$0xff]
      %v616 = vld [vmem:[%s486 + $0xaf] sm:$0xff]
      %625 = vrot.lane.b32.xlu0 %v609, 24
      %v626 = vpop.permute.xlu0 %625
      %627 = vrot.lane.b32.xlu0 %v610, 24
      %v628 = vpop.permute.xlu0 %627
      %629 = vrot.lane.b32.xlu0 %v611, 24
      %v630 = vpop.permute.xlu0 %629
      %631 = vrot.lane.b32.xlu0 %v612, 24
      %v632 = vpop.permute.xlu0 %631
      %633 = vrot.lane.b32.xlu0 %v613, 24
      %v634 = vpop.permute.xlu0 %633
      %635 = vrot.lane.b32.xlu0 %v614, 24
      %v636 = vpop.permute.xlu0 %635
      %637 = vrot.lane.b32.xlu0 %v615, 24
      %v638 = vpop.permute.xlu0 %637
      %639 = vrot.lane.b32.xlu0 %v616, 24
      %v640 = vpop.permute.xlu0 %639
      %vm649 = vcmask 261312
      %650 = vst.msk [vmem:[#allocation3] sm:$0xff] %vm649, %v626
      %651 = vst.msk [vmem:[#allocation3 + $0x8] sm:$0xff] %vm649, %v628
      %652 = vst.msk [vmem:[#allocation3 + $0x10] sm:$0xff] %vm649, %v630
      %653 = vst.msk [vmem:[#allocation3 + $0x18] sm:$0xff] %vm649, %v632
      %654 = vst.msk [vmem:[#allocation3 + $0x20] sm:$0xff] %vm649, %v634
      %655 = vst.msk [vmem:[#allocation3 + $0x28] sm:$0xff] %vm649, %v636
      %656 = vst.msk [vmem:[#allocation3 + $0x30] sm:$0xff] %vm649, %v638
      %657 = vst.msk [vmem:[#allocation3 + $0x38] sm:$0xff] %vm649, %v640
      %v658 = vld [vmem:[%s486 + $0x8] sm:$0xff]
      %v659 = vld [vmem:[%s486 + $0x20] sm:$0xff]
      %v660 = vld [vmem:[%s486 + $0x38] sm:$0xff]
      %v661 = vld [vmem:[%s486 + $0x50] sm:$0xff]
      %v662 = vld [vmem:[%s486 + $0x68] sm:$0xff]
      %v663 = vld [vmem:[%s486 + $0x80] sm:$0xff]
      %v664 = vld [vmem:[%s486 + $0x98] sm:$0xff]
      %v665 = vld [vmem:[%s486 + $0xb0] sm:$0xff]
      %674 = vrot.lane.b32.xlu0 %v658, 32
      %v675 = vpop.permute.xlu0 %674
      %676 = vrot.lane.b32.xlu0 %v659, 32
      %v677 = vpop.permute.xlu0 %676
      %678 = vrot.lane.b32.xlu0 %v660, 32
      %v679 = vpop.permute.xlu0 %678
      %680 = vrot.lane.b32.xlu0 %v661, 32
      %v681 = vpop.permute.xlu0 %680
      %682 = vrot.lane.b32.xlu0 %v662, 32
      %v683 = vpop.permute.xlu0 %682
      %684 = vrot.lane.b32.xlu0 %v663, 32
      %v685 = vpop.permute.xlu0 %684
      %686 = vrot.lane.b32.xlu0 %v664, 32
      %v687 = vpop.permute.xlu0 %686
      %688 = vrot.lane.b32.xlu0 %v665, 32
      %v689 = vpop.permute.xlu0 %688
      %vm698 = vcmask 326912
      %699 = vst.msk [vmem:[#allocation3] sm:$0xff] %vm698, %v675
      %700 = vst.msk [vmem:[#allocation3 + $0x8] sm:$0xff] %vm698, %v677
      %701 = vst.msk [vmem:[#allocation3 + $0x10] sm:$0xff] %vm698, %v679
      %702 = vst.msk [vmem:[#allocation3 + $0x18] sm:$0xff] %vm698, %v681
      %703 = vst.msk [vmem:[#allocation3 + $0x20] sm:$0xff] %vm698, %v683
      %704 = vst.msk [vmem:[#allocation3 + $0x28] sm:$0xff] %vm698, %v685
      %705 = vst.msk [vmem:[#allocation3 + $0x30] sm:$0xff] %vm698, %v687
      %706 = vst.msk [vmem:[#allocation3 + $0x38] sm:$0xff] %vm698, %v689
      %v707 = vld [vmem:[%s486 + $0x9] sm:$0xff]
      %v708 = vld [vmem:[%s486 + $0x21] sm:$0xff]
      %v709 = vld [vmem:[%s486 + $0x39] sm:$0xff]
      %v710 = vld [vmem:[%s486 + $0x51] sm:$0xff]
      %v711 = vld [vmem:[%s486 + $0x69] sm:$0xff]
      %v712 = vld [vmem:[%s486 + $0x81] sm:$0xff]
      %v713 = vld [vmem:[%s486 + $0x99] sm:$0xff]
      %v714 = vld [vmem:[%s486 + $0xb1] sm:$0xff]
      %723 = vrot.lane.b32.xlu0 %v707, 40
      %v724 = vpop.permute.xlu0 %723
      %725 = vrot.lane.b32.xlu0 %v708, 40
      %v726 = vpop.permute.xlu0 %725
      %727 = vrot.lane.b32.xlu0 %v709, 40
      %v728 = vpop.permute.xlu0 %727
      %729 = vrot.lane.b32.xlu0 %v710, 40
      %v730 = vpop.permute.xlu0 %729
      %731 = vrot.lane.b32.xlu0 %v711, 40
      %v732 = vpop.permute.xlu0 %731
      %733 = vrot.lane.b32.xlu0 %v712, 40
      %v734 = vpop.permute.xlu0 %733
      %735 = vrot.lane.b32.xlu0 %v713, 40
      %v736 = vpop.permute.xlu0 %735
      %737 = vrot.lane.b32.xlu0 %v714, 40
      %v738 = vpop.permute.xlu0 %737
      %vm747 = vcmask 392512
      %748 = vst.msk [vmem:[#allocation3] sm:$0xff] %vm747, %v724
      %749 = vst.msk [vmem:[#allocation3 + $0x8] sm:$0xff] %vm747, %v726
      %750 = vst.msk [vmem:[#allocation3 + $0x10] sm:$0xff] %vm747, %v728
      %751 = vst.msk [vmem:[#allocation3 + $0x18] sm:$0xff] %vm747, %v730
      %752 = vst.msk [vmem:[#allocation3 + $0x20] sm:$0xff] %vm747, %v732
      %753 = vst.msk [vmem:[#allocation3 + $0x28] sm:$0xff] %vm747, %v734
      %754 = vst.msk [vmem:[#allocation3 + $0x30] sm:$0xff] %vm747, %v736
      %755 = vst.msk [vmem:[#allocation3 + $0x38] sm:$0xff] %vm747, %v738
      %s756 = scalar_lea.vmem [#allocation2], 48
      %v757 = vld [vmem:[%s756 + $0x7] sm:$0xff]
      %v758 = vld [vmem:[%s756 + $0x1f] sm:$0xff]
      %v759 = vld [vmem:[%s756 + $0x37] sm:$0xff]
      %v760 = vld [vmem:[%s756 + $0x4f] sm:$0xff]
      %v761 = vld [vmem:[%s756 + $0x67] sm:$0xff]
      %v762 = vld [vmem:[%s756 + $0x7f] sm:$0xff]
      %v763 = vld [vmem:[%s756 + $0x97] sm:$0xff]
      %v764 = vld [vmem:[%s756 + $0xaf] sm:$0xff]
      %773 = vrot.lane.b32.xlu0 %v757, 48
      %v774 = vpop.permute.xlu0 %773
      %775 = vrot.lane.b32.xlu0 %v758, 48
      %v776 = vpop.permute.xlu0 %775
      %777 = vrot.lane.b32.xlu0 %v759, 48
      %v778 = vpop.permute.xlu0 %777
      %779 = vrot.lane.b32.xlu0 %v760, 48
      %v780 = vpop.permute.xlu0 %779
      %781 = vrot.lane.b32.xlu0 %v761, 48
      %v782 = vpop.permute.xlu0 %781
      %783 = vrot.lane.b32.xlu0 %v762, 48
      %v784 = vpop.permute.xlu0 %783
      %785 = vrot.lane.b32.xlu0 %v763, 48
      %v786 = vpop.permute.xlu0 %785
      %787 = vrot.lane.b32.xlu0 %v764, 48
      %v788 = vpop.permute.xlu0 %787
      %vm797 = vcmask 458112
      %798 = vst.msk [vmem:[#allocation3] sm:$0xff] %vm797, %v774
      %799 = vst.msk [vmem:[#allocation3 + $0x8] sm:$0xff] %vm797, %v776
      %800 = vst.msk [vmem:[#allocation3 + $0x10] sm:$0xff] %vm797, %v778
      %801 = vst.msk [vmem:[#allocation3 + $0x18] sm:$0xff] %vm797, %v780
      %802 = vst.msk [vmem:[#allocation3 + $0x20] sm:$0xff] %vm797, %v782
      %803 = vst.msk [vmem:[#allocation3 + $0x28] sm:$0xff] %vm797, %v784
      %804 = vst.msk [vmem:[#allocation3 + $0x30] sm:$0xff] %vm797, %v786
      %805 = vst.msk [vmem:[#allocation3 + $0x38] sm:$0xff] %vm797, %v788
      %v806 = vld [vmem:[%s756 + $0x8] sm:$0xff]
      %v807 = vld [vmem:[%s756 + $0x20] sm:$0xff]
      %v808 = vld [vmem:[%s756 + $0x38] sm:$0xff]
      %v809 = vld [vmem:[%s756 + $0x50] sm:$0xff]
      %v810 = vld [vmem:[%s756 + $0x68] sm:$0xff]
      %v811 = vld [vmem:[%s756 + $0x80] sm:$0xff]
      %v812 = vld [vmem:[%s756 + $0x98] sm:$0xff]
      %v813 = vld [vmem:[%s756 + $0xb0] sm:$0xff]
      %822 = vrot.lane.b32.xlu0 %v806, 56
      %v823 = vpop.permute.xlu0 %822
      %824 = vrot.lane.b32.xlu0 %v807, 56
      %v825 = vpop.permute.xlu0 %824
      %826 = vrot.lane.b32.xlu0 %v808, 56
      %v827 = vpop.permute.xlu0 %826
      %828 = vrot.lane.b32.xlu0 %v809, 56
      %v829 = vpop.permute.xlu0 %828
      %830 = vrot.lane.b32.xlu0 %v810, 56
      %v831 = vpop.permute.xlu0 %830
      %832 = vrot.lane.b32.xlu0 %v811, 56
      %v833 = vpop.permute.xlu0 %832
      %834 = vrot.lane.b32.xlu0 %v812, 56
      %v835 = vpop.permute.xlu0 %834
      %836 = vrot.lane.b32.xlu0 %v813, 56
      %v837 = vpop.permute.xlu0 %836
      %vm846 = vcmask 523712
      %847 = vst.msk [vmem:[#allocation3] sm:$0xff] %vm846, %v823
      %848 = vst.msk [vmem:[#allocation3 + $0x8] sm:$0xff] %vm846, %v825
      %849 = vst.msk [vmem:[#allocation3 + $0x10] sm:$0xff] %vm846, %v827
      %850 = vst.msk [vmem:[#allocation3 + $0x18] sm:$0xff] %vm846, %v829
      %851 = vst.msk [vmem:[#allocation3 + $0x20] sm:$0xff] %vm846, %v831
      %852 = vst.msk [vmem:[#allocation3 + $0x28] sm:$0xff] %vm846, %v833
      %853 = vst.msk [vmem:[#allocation3 + $0x30] sm:$0xff] %vm846, %v835
      %854 = vst.msk [vmem:[#allocation3 + $0x38] sm:$0xff] %vm846, %v837
      %v855 = vld [vmem:[%s756 + $0x9] sm:$0xff]
      %v856 = vld [vmem:[%s756 + $0x21] sm:$0xff]
      %v857 = vld [vmem:[%s756 + $0x39] sm:$0xff]
      %v858 = vld [vmem:[%s756 + $0x51] sm:$0xff]
      %v859 = vld [vmem:[%s756 + $0x69] sm:$0xff]
      %v860 = vld [vmem:[%s756 + $0x81] sm:$0xff]
      %v861 = vld [vmem:[%s756 + $0x99] sm:$0xff]
      %v862 = vld [vmem:[%s756 + $0xb1] sm:$0xff]
      %871 = vrot.lane.b32.xlu0 %v855, 64
      %v872 = vpop.permute.xlu0 %871
      %873 = vrot.lane.b32.xlu0 %v856, 64
      %v874 = vpop.permute.xlu0 %873
      %875 = vrot.lane.b32.xlu0 %v857, 64
      %v876 = vpop.permute.xlu0 %875
      %877 = vrot.lane.b32.xlu0 %v858, 64
      %v878 = vpop.permute.xlu0 %877
      %879 = vrot.lane.b32.xlu0 %v859, 64
      %v880 = vpop.permute.xlu0 %879
      %881 = vrot.lane.b32.xlu0 %v860, 64
      %v882 = vpop.permute.xlu0 %881
      %883 = vrot.lane.b32.xlu0 %v861, 64
      %v884 = vpop.permute.xlu0 %883
      %885 = vrot.lane.b32.xlu0 %v862, 64
      %v886 = vpop.permute.xlu0 %885
      %vm895 = vcmask 589312
      %896 = vst.msk [vmem:[#allocation3] sm:$0xff] %vm895, %v872
      %897 = vst.msk [vmem:[#allocation3 + $0x8] sm:$0xff] %vm895, %v874
      %898 = vst.msk [vmem:[#allocation3 + $0x10] sm:$0xff] %vm895, %v876
      %899 = vst.msk [vmem:[#allocation3 + $0x18] sm:$0xff] %vm895, %v878
      %900 = vst.msk [vmem:[#allocation3 + $0x20] sm:$0xff] %vm895, %v880
      %901 = vst.msk [vmem:[#allocation3 + $0x28] sm:$0xff] %vm895, %v882
      %902 = vst.msk [vmem:[#allocation3 + $0x30] sm:$0xff] %vm895, %v884
      %903 = vst.msk [vmem:[#allocation3 + $0x38] sm:$0xff] %vm895, %v886
      %v904 = vld [vmem:[#allocation3] sm:$0xff]
      %v905 = vld [vmem:[#allocation3 + $0x8] sm:$0xff]
      %v906 = vld [vmem:[#allocation3 + $0x10] sm:$0xff]
      %v907 = vld [vmem:[#allocation3 + $0x18] sm:$0xff]
      %v908 = vld [vmem:[#allocation3 + $0x20] sm:$0xff]
      %v909 = vld [vmem:[#allocation3 + $0x28] sm:$0xff]
      %v910 = vld [vmem:[#allocation3 + $0x30] sm:$0xff]
      %v911 = vld [vmem:[#allocation3 + $0x38] sm:$0xff]
      %v912 = vld [vmem:[%s3] sm:$0xff]
      %v913 = vld [vmem:[%s3 + $0x8] sm:$0xff]
      %v914 = vld [vmem:[%s3 + $0x10] sm:$0xff]
      %v915 = vld [vmem:[%s3 + $0x18] sm:$0xff]
      %v916 = vld [vmem:[%s3 + $0x20] sm:$0xff]
      %v917 = vld [vmem:[%s3 + $0x28] sm:$0xff]
      %v918 = vld [vmem:[%s3 + $0x30] sm:$0xff]
      %v919 = vld [vmem:[%s3 + $0x38] sm:$0xff]
      %v920 = vld [vmem:[%s3 + $0x40] sm:$0xff]
      %v921 = vld [vmem:[%s4] sm:$0x1]
      %v923 = vperm.slane %v921, 0
      %vm925 = vcmask 588800
      %v927 = vsel %vm925, %v904, 0
      %v930 = vsel %vm925, %v905, 0
      %v933 = vsel %vm925, %v906, 0
      %v936 = vsel %vm925, %v907, 0
      %v939 = vsel %vm925, %v908, 0
      %v942 = vsel %vm925, %v909, 0
      %v945 = vsel %vm925, %v910, 0
      %v948 = vsel %vm925, %v911, 0
      %950 = vmatpush.msra.mxu0 0.0
      %951 = vmatpush.msra.mxu0 0.0
      %952 = vmatpush.msra.mxu0 0.0
      %953 = vmatpush.msra.mxu0 0.0
      %954 = vmatpush.msra.mxu0 0.0
      %955 = vmatpush.msra.mxu0 0.0
      %956 = vmatpush.msra.mxu0 0.0
      %957 = vmatpush.msra.mxu0 %v920
      %958 = vmatpush.msra.mxu0 %v919
      %959 = vmatpush.msra.mxu0 %v918
      %960 = vmatpush.msra.mxu0 %v917
      %961 = vmatpush.msra.mxu0 %v916
      %962 = vmatpush.msra.mxu0 %v915
      %963 = vmatpush.msra.mxu0 %v914
      %964 = vmatpush.msra.mxu0 %v913
      %965 = vmatpush.msra.mxu0 %v912
      %966 = vmatmul.f32.gmra.mxu0 %v927
      %v967 = vpop.f32.mrf.mxu0
      %v968 = vadd.f32 %v923, %v967
      %969 = vmatmul.f32.gmra.mxu0 %v930
      %v970 = vpop.f32.mrf.mxu0
      %v971 = vadd.f32 %v923, %v970
      %972 = vmatmul.f32.gmra.mxu0 %v933
      %v973 = vpop.f32.mrf.mxu0
      %v974 = vadd.f32 %v923, %v973
      %975 = vmatmul.f32.gmra.mxu0 %v936
      %v976 = vpop.f32.mrf.mxu0
      %v977 = vadd.f32 %v923, %v976
      %978 = vmatmul.f32.gmra.mxu0 %v939
      %v979 = vpop.f32.mrf.mxu0
      %v980 = vadd.f32 %v923, %v979
      %981 = vmatmul.f32.gmra.mxu0 %v942
      %v982 = vpop.f32.mrf.mxu0
      %v983 = vadd.f32 %v923, %v982
      %984 = vmatmul.f32.gmra.mxu0 %v945
      %v985 = vpop.f32.mrf.mxu0
      %v986 = vadd.f32 %v923, %v985
      %987 = vmatmul.f32.gmra.mxu0 %v948
      %v988 = vpop.f32.mrf.mxu0
      %v989 = vadd.f32 %v923, %v988
      %990 = vdwg.mxu0
      %v991 = vmax.f32 %v968, 0.0
      %v992 = vmax.f32 %v971, 0.0
      %v993 = vmax.f32 %v974, 0.0
      %v994 = vmax.f32 %v977, 0.0
      %v995 = vmax.f32 %v980, 0.0
      %v996 = vmax.f32 %v983, 0.0
      %v997 = vmax.f32 %v986, 0.0
      %v998 = vmax.f32 %v989, 0.0
      %1007 = vrot.lane.b32.xlu0 %v991, 8
      %v1008 = vpop.permute.xlu0 %1007
      %1009 = vrot.lane.b32.xlu0 %v992, 8
      %v1010 = vpop.permute.xlu0 %1009
      %1011 = vrot.lane.b32.xlu0 %v993, 8
      %v1012 = vpop.permute.xlu0 %1011
      %1013 = vrot.lane.b32.xlu0 %v994, 8
      %v1014 = vpop.permute.xlu0 %1013
      %1015 = vrot.lane.b32.xlu0 %v995, 8
      %v1016 = vpop.permute.xlu0 %1015
      %1017 = vrot.lane.b32.xlu0 %v996, 8
      %v1018 = vpop.permute.xlu0 %1017
      %1019 = vrot.lane.b32.xlu0 %v997, 8
      %v1020 = vpop.permute.xlu0 %1019
      %1021 = vrot.lane.b32.xlu0 %v998, 8
      %v1022 = vpop.permute.xlu0 %1021
      %1031 = vst.msk [vmem:[#allocation4] sm:$0xff] %vm551, %v1008
      %1032 = vst.msk [vmem:[#allocation4 + $0x8] sm:$0xff] %vm551, %v1010
      %1033 = vst.msk [vmem:[#allocation4 + $0x10] sm:$0xff] %vm551, %v1012
      %1034 = vst.msk [vmem:[#allocation4 + $0x18] sm:$0xff] %vm551, %v1014
      %1035 = vst.msk [vmem:[#allocation4 + $0x20] sm:$0xff] %vm551, %v1016
      %1036 = vst.msk [vmem:[#allocation4 + $0x28] sm:$0xff] %vm551, %v1018
      %1037 = vst.msk [vmem:[#allocation4 + $0x30] sm:$0xff] %vm551, %v1020
      %1038 = vst.msk [vmem:[#allocation4 + $0x38] sm:$0xff] %vm551, %v1022
      %1039 = vrot.lane.b32.xlu0 %v991, 16
      %v1040 = vpop.permute.xlu0 %1039
      %1041 = vrot.lane.b32.xlu0 %v992, 16
      %v1042 = vpop.permute.xlu0 %1041
      %1043 = vrot.lane.b32.xlu0 %v993, 16
      %v1044 = vpop.permute.xlu0 %1043
      %1045 = vrot.lane.b32.xlu0 %v994, 16
      %v1046 = vpop.permute.xlu0 %1045
      %1047 = vrot.lane.b32.xlu0 %v995, 16
      %v1048 = vpop.permute.xlu0 %1047
      %1049 = vrot.lane.b32.xlu0 %v996, 16
      %v1050 = vpop.permute.xlu0 %1049
      %1051 = vrot.lane.b32.xlu0 %v997, 16
      %v1052 = vpop.permute.xlu0 %1051
      %1053 = vrot.lane.b32.xlu0 %v998, 16
      %v1054 = vpop.permute.xlu0 %1053
      %v1063 = vadd.f32 %v407, %v1040
      %v1064 = vadd.f32 %v408, %v1042
      %v1065 = vadd.f32 %v409, %v1044
      %v1066 = vadd.f32 %v410, %v1046
      %v1067 = vadd.f32 %v411, %v1048
      %v1068 = vadd.f32 %v412, %v1050
      %v1069 = vadd.f32 %v413, %v1052
      %v1070 = vadd.f32 %v414, %v1054
      %1079 = vrot.lane.b32.xlu0 %v1063, 112
      %v1080 = vpop.permute.xlu0 %1079
      %1081 = vrot.lane.b32.xlu0 %v1064, 112
      %v1082 = vpop.permute.xlu0 %1081
      %1083 = vrot.lane.b32.xlu0 %v1065, 112
      %v1084 = vpop.permute.xlu0 %1083
      %1085 = vrot.lane.b32.xlu0 %v1066, 112
      %v1086 = vpop.permute.xlu0 %1085
      %1087 = vrot.lane.b32.xlu0 %v1067, 112
      %v1088 = vpop.permute.xlu0 %1087
      %1089 = vrot.lane.b32.xlu0 %v1068, 112
      %v1090 = vpop.permute.xlu0 %1089
      %1091 = vrot.lane.b32.xlu0 %v1069, 112
      %v1092 = vpop.permute.xlu0 %1091
      %1093 = vrot.lane.b32.xlu0 %v1070, 112
      %v1094 = vpop.permute.xlu0 %1093
      %1103 = vst.msk [vmem:[%s486 + $0x8] sm:$0xff] %vm415, %v1080
      %1104 = vst.msk [vmem:[%s486 + $0x20] sm:$0xff] %vm415, %v1082
      %1105 = vst.msk [vmem:[%s486 + $0x38] sm:$0xff] %vm415, %v1084
      %1106 = vst.msk [vmem:[%s486 + $0x50] sm:$0xff] %vm415, %v1086
      %1107 = vst.msk [vmem:[%s486 + $0x68] sm:$0xff] %vm415, %v1088
      %1108 = vst.msk [vmem:[%s486 + $0x80] sm:$0xff] %vm415, %v1090
      %1109 = vst.msk [vmem:[%s486 + $0x98] sm:$0xff] %vm415, %v1092
      %1110 = vst.msk [vmem:[%s486 + $0xb0] sm:$0xff] %vm415, %v1094
      %v1111 = vld [vmem:[#allocation2 + $0x7] sm:$0xff]
      %v1112 = vld [vmem:[#allocation2 + $0x1f] sm:$0xff]
      %v1113 = vld [vmem:[#allocation2 + $0x37] sm:$0xff]
      %v1114 = vld [vmem:[#allocation2 + $0x4f] sm:$0xff]
      %v1115 = vld [vmem:[#allocation2 + $0x67] sm:$0xff]
      %v1116 = vld [vmem:[#allocation2 + $0x7f] sm:$0xff]
      %v1117 = vld [vmem:[#allocation2 + $0x97] sm:$0xff]
      %v1118 = vld [vmem:[#allocation2 + $0xaf] sm:$0xff]
      %1119 = vst.msk [vmem:[#allocation3] sm:$0xff] %vm415, %v1111
      %1120 = vst.msk [vmem:[#allocation3 + $0x8] sm:$0xff] %vm415, %v1112
      %1121 = vst.msk [vmem:[#allocation3 + $0x10] sm:$0xff] %vm415, %v1113
      %1122 = vst.msk [vmem:[#allocation3 + $0x18] sm:$0xff] %vm415, %v1114
      %1123 = vst.msk [vmem:[#allocation3 + $0x20] sm:$0xff] %vm415, %v1115
      %1124 = vst.msk [vmem:[#allocation3 + $0x28] sm:$0xff] %vm415, %v1116
      %1125 = vst.msk [vmem:[#allocation3 + $0x30] sm:$0xff] %vm415, %v1117
      %1126 = vst.msk [vmem:[#allocation3 + $0x38] sm:$0xff] %vm415, %v1118
      %v1127 = vld [vmem:[#allocation2 + $0x8] sm:$0xff]
      %v1128 = vld [vmem:[#allocation2 + $0x20] sm:$0xff]
      %v1129 = vld [vmem:[#allocation2 + $0x38] sm:$0xff]
      %v1130 = vld [vmem:[#allocation2 + $0x50] sm:$0xff]
      %v1131 = vld [vmem:[#allocation2 + $0x68] sm:$0xff]
      %v1132 = vld [vmem:[#allocation2 + $0x80] sm:$0xff]
      %v1133 = vld [vmem:[#allocation2 + $0x98] sm:$0xff]
      %v1134 = vld [vmem:[#allocation2 + $0xb0] sm:$0xff]
      %1143 = vrot.lane.b32.xlu0 %v1127, 8
      %v1144 = vpop.permute.xlu0 %1143
      %1145 = vrot.lane.b32.xlu0 %v1128, 8
      %v1146 = vpop.permute.xlu0 %1145
      %1147 = vrot.lane.b32.xlu0 %v1129, 8
      %v1148 = vpop.permute.xlu0 %1147
      %1149 = vrot.lane.b32.xlu0 %v1130, 8
      %v1150 = vpop.permute.xlu0 %1149
      %1151 = vrot.lane.b32.xlu0 %v1131, 8
      %v1152 = vpop.permute.xlu0 %1151
      %1153 = vrot.lane.b32.xlu0 %v1132, 8
      %v1154 = vpop.permute.xlu0 %1153
      %1155 = vrot.lane.b32.xlu0 %v1133, 8
      %v1156 = vpop.permute.xlu0 %1155
      %1157 = vrot.lane.b32.xlu0 %v1134, 8
      %v1158 = vpop.permute.xlu0 %1157
      %1167 = vst.msk [vmem:[#allocation3] sm:$0xff] %vm551, %v1144
      %1168 = vst.msk [vmem:[#allocation3 + $0x8] sm:$0xff] %vm551, %v1146
      %1169 = vst.msk [vmem:[#allocation3 + $0x10] sm:$0xff] %vm551, %v1148
      %1170 = vst.msk [vmem:[#allocation3 + $0x18] sm:$0xff] %vm551, %v1150
      %1171 = vst.msk [vmem:[#allocation3 + $0x20] sm:$0xff] %vm551, %v1152
      %1172 = vst.msk [vmem:[#allocation3 + $0x28] sm:$0xff] %vm551, %v1154
      %1173 = vst.msk [vmem:[#allocation3 + $0x30] sm:$0xff] %vm551, %v1156
      %1174 = vst.msk [vmem:[#allocation3 + $0x38] sm:$0xff] %vm551, %v1158
      %v1175 = vld [vmem:[#allocation2 + $0x9] sm:$0xff]
      %v1176 = vld [vmem:[#allocation2 + $0x21] sm:$0xff]
      %v1177 = vld [vmem:[#allocation2 + $0x39] sm:$0xff]
      %v1178 = vld [vmem:[#allocation2 + $0x51] sm:$0xff]
      %v1179 = vld [vmem:[#allocation2 + $0x69] sm:$0xff]
      %v1180 = vld [vmem:[#allocation2 + $0x81] sm:$0xff]
      %v1181 = vld [vmem:[#allocation2 + $0x99] sm:$0xff]
      %v1182 = vld [vmem:[#allocation2 + $0xb1] sm:$0xff]
      %1191 = vrot.lane.b32.xlu0 %v1175, 16
      %v1192 = vpop.permute.xlu0 %1191
      %1193 = vrot.lane.b32.xlu0 %v1176, 16
      %v1194 = vpop.permute.xlu0 %1193
      %1195 = vrot.lane.b32.xlu0 %v1177, 16
      %v1196 = vpop.permute.xlu0 %1195
      %1197 = vrot.lane.b32.xlu0 %v1178, 16
      %v1198 = vpop.permute.xlu0 %1197
      %1199 = vrot.lane.b32.xlu0 %v1179, 16
      %v1200 = vpop.permute.xlu0 %1199
      %1201 = vrot.lane.b32.xlu0 %v1180, 16
      %v1202 = vpop.permute.xlu0 %1201
      %1203 = vrot.lane.b32.xlu0 %v1181, 16
      %v1204 = vpop.permute.xlu0 %1203
      %1205 = vrot.lane.b32.xlu0 %v1182, 16
      %v1206 = vpop.permute.xlu0 %1205
      %1215 = vst.msk [vmem:[#allocation3] sm:$0xff] %vm600, %v1192
      %1216 = vst.msk [vmem:[#allocation3 + $0x8] sm:$0xff] %vm600, %v1194
      %1217 = vst.msk [vmem:[#allocation3 + $0x10] sm:$0xff] %vm600, %v1196
      %1218 = vst.msk [vmem:[#allocation3 + $0x18] sm:$0xff] %vm600, %v1198
      %1219 = vst.msk [vmem:[#allocation3 + $0x20] sm:$0xff] %vm600, %v1200
      %1220 = vst.msk [vmem:[#allocation3 + $0x28] sm:$0xff] %vm600, %v1202
      %1221 = vst.msk [vmem:[#allocation3 + $0x30] sm:$0xff] %vm600, %v1204
      %1222 = vst.msk [vmem:[#allocation3 + $0x38] sm:$0xff] %vm600, %v1206
      %v1223 = vld [vmem:[%s486 + $0x7] sm:$0xff]
      %v1224 = vld [vmem:[%s486 + $0x1f] sm:$0xff]
      %v1225 = vld [vmem:[%s486 + $0x37] sm:$0xff]
      %v1226 = vld [vmem:[%s486 + $0x4f] sm:$0xff]
      %v1227 = vld [vmem:[%s486 + $0x67] sm:$0xff]
      %v1228 = vld [vmem:[%s486 + $0x7f] sm:$0xff]
      %v1229 = vld [vmem:[%s486 + $0x97] sm:$0xff]
      %v1230 = vld [vmem:[%s486 + $0xaf] sm:$0xff]
      %1239 = vrot.lane.b32.xlu0 %v1223, 24
      %v1240 = vpop.permute.xlu0 %1239
      %1241 = vrot.lane.b32.xlu0 %v1224, 24
      %v1242 = vpop.permute.xlu0 %1241
      %1243 = vrot.lane.b32.xlu0 %v1225, 24
      %v1244 = vpop.permute.xlu0 %1243
      %1245 = vrot.lane.b32.xlu0 %v1226, 24
      %v1246 = vpop.permute.xlu0 %1245
      %1247 = vrot.lane.b32.xlu0 %v1227, 24
      %v1248 = vpop.permute.xlu0 %1247
      %1249 = vrot.lane.b32.xlu0 %v1228, 24
      %v1250 = vpop.permute.xlu0 %1249
      %1251 = vrot.lane.b32.xlu0 %v1229, 24
      %v1252 = vpop.permute.xlu0 %1251
      %1253 = vrot.lane.b32.xlu0 %v1230, 24
      %v1254 = vpop.permute.xlu0 %1253
      %1263 = vst.msk [vmem:[#allocation3] sm:$0xff] %vm649, %v1240
      %1264 = vst.msk [vmem:[#allocation3 + $0x8] sm:$0xff] %vm649, %v1242
      %1265 = vst.msk [vmem:[#allocation3 + $0x10] sm:$0xff] %vm649, %v1244
      %1266 = vst.msk [vmem:[#allocation3 + $0x18] sm:$0xff] %vm649, %v1246
      %1267 = vst.msk [vmem:[#allocation3 + $0x20] sm:$0xff] %vm649, %v1248
      %1268 = vst.msk [vmem:[#allocation3 + $0x28] sm:$0xff] %vm649, %v1250
      %1269 = vst.msk [vmem:[#allocation3 + $0x30] sm:$0xff] %vm649, %v1252
      %1270 = vst.msk [vmem:[#allocation3 + $0x38] sm:$0xff] %vm649, %v1254
      %v1271 = vld [vmem:[%s486 + $0x8] sm:$0xff]
      %v1272 = vld [vmem:[%s486 + $0x20] sm:$0xff]
      %v1273 = vld [vmem:[%s486 + $0x38] sm:$0xff]
      %v1274 = vld [vmem:[%s486 + $0x50] sm:$0xff]
      %v1275 = vld [vmem:[%s486 + $0x68] sm:$0xff]
      %v1276 = vld [vmem:[%s486 + $0x80] sm:$0xff]
      %v1277 = vld [vmem:[%s486 + $0x98] sm:$0xff]
      %v1278 = vld [vmem:[%s486 + $0xb0] sm:$0xff]
      %1287 = vrot.lane.b32.xlu0 %v1271, 32
      %v1288 = vpop.permute.xlu0 %1287
      %1289 = vrot.lane.b32.xlu0 %v1272, 32
      %v1290 = vpop.permute.xlu0 %1289
      %1291 = vrot.lane.b32.xlu0 %v1273, 32
      %v1292 = vpop.permute.xlu0 %1291
      %1293 = vrot.lane.b32.xlu0 %v1274, 32
      %v1294 = vpop.permute.xlu0 %1293
      %1295 = vrot.lane.b32.xlu0 %v1275, 32
      %v1296 = vpop.permute.xlu0 %1295
      %1297 = vrot.lane.b32.xlu0 %v1276, 32
      %v1298 = vpop.permute.xlu0 %1297
      %1299 = vrot.lane.b32.xlu0 %v1277, 32
      %v1300 = vpop.permute.xlu0 %1299
      %1301 = vrot.lane.b32.xlu0 %v1278, 32
      %v1302 = vpop.permute.xlu0 %1301
      %1311 = vst.msk [vmem:[#allocation3] sm:$0xff] %vm698, %v1288
      %1312 = vst.msk [vmem:[#allocation3 + $0x8] sm:$0xff] %vm698, %v1290
      %1313 = vst.msk [vmem:[#allocation3 + $0x10] sm:$0xff] %vm698, %v1292
      %1314 = vst.msk [vmem:[#allocation3 + $0x18] sm:$0xff] %vm698, %v1294
      %1315 = vst.msk [vmem:[#allocation3 + $0x20] sm:$0xff] %vm698, %v1296
      %1316 = vst.msk [vmem:[#allocation3 + $0x28] sm:$0xff] %vm698, %v1298
      %1317 = vst.msk [vmem:[#allocation3 + $0x30] sm:$0xff] %vm698, %v1300
      %1318 = vst.msk [vmem:[#allocation3 + $0x38] sm:$0xff] %vm698, %v1302
      %v1319 = vld [vmem:[%s486 + $0x9] sm:$0xff]
      %v1320 = vld [vmem:[%s486 + $0x21] sm:$0xff]
      %v1321 = vld [vmem:[%s486 + $0x39] sm:$0xff]
      %v1322 = vld [vmem:[%s486 + $0x51] sm:$0xff]
      %v1323 = vld [vmem:[%s486 + $0x69] sm:$0xff]
      %v1324 = vld [vmem:[%s486 + $0x81] sm:$0xff]
      %v1325 = vld [vmem:[%s486 + $0x99] sm:$0xff]
      %v1326 = vld [vmem:[%s486 + $0xb1] sm:$0xff]
      %1335 = vrot.lane.b32.xlu0 %v1319, 40
      %v1336 = vpop.permute.xlu0 %1335
      %1337 = vrot.lane.b32.xlu0 %v1320, 40
      %v1338 = vpop.permute.xlu0 %1337
      %1339 = vrot.lane.b32.xlu0 %v1321, 40
      %v1340 = vpop.permute.xlu0 %1339
      %1341 = vrot.lane.b32.xlu0 %v1322, 40
      %v1342 = vpop.permute.xlu0 %1341
      %1343 = vrot.lane.b32.xlu0 %v1323, 40
      %v1344 = vpop.permute.xlu0 %1343
      %1345 = vrot.lane.b32.xlu0 %v1324, 40
      %v1346 = vpop.permute.xlu0 %1345
      %1347 = vrot.lane.b32.xlu0 %v1325, 40
      %v1348 = vpop.permute.xlu0 %1347
      %1349 = vrot.lane.b32.xlu0 %v1326, 40
      %v1350 = vpop.permute.xlu0 %1349
      %1359 = vst.msk [vmem:[#allocation3] sm:$0xff] %vm747, %v1336
      %1360 = vst.msk [vmem:[#allocation3 + $0x8] sm:$0xff] %vm747, %v1338
      %1361 = vst.msk [vmem:[#allocation3 + $0x10] sm:$0xff] %vm747, %v1340
      %1362 = vst.msk [vmem:[#allocation3 + $0x18] sm:$0xff] %vm747, %v1342
      %1363 = vst.msk [vmem:[#allocation3 + $0x20] sm:$0xff] %vm747, %v1344
      %1364 = vst.msk [vmem:[#allocation3 + $0x28] sm:$0xff] %vm747, %v1346
      %1365 = vst.msk [vmem:[#allocation3 + $0x30] sm:$0xff] %vm747, %v1348
      %1366 = vst.msk [vmem:[#allocation3 + $0x38] sm:$0xff] %vm747, %v1350
      %v1367 = vld [vmem:[%s756 + $0x7] sm:$0xff]
      %v1368 = vld [vmem:[%s756 + $0x1f] sm:$0xff]
      %v1369 = vld [vmem:[%s756 + $0x37] sm:$0xff]
      %v1370 = vld [vmem:[%s756 + $0x4f] sm:$0xff]
      %v1371 = vld [vmem:[%s756 + $0x67] sm:$0xff]
      %v1372 = vld [vmem:[%s756 + $0x7f] sm:$0xff]
      %v1373 = vld [vmem:[%s756 + $0x97] sm:$0xff]
      %v1374 = vld [vmem:[%s756 + $0xaf] sm:$0xff]
      %1383 = vrot.lane.b32.xlu0 %v1367, 48
      %v1384 = vpop.permute.xlu0 %1383
      %1385 = vrot.lane.b32.xlu0 %v1368, 48
      %v1386 = vpop.permute.xlu0 %1385
      %1387 = vrot.lane.b32.xlu0 %v1369, 48
      %v1388 = vpop.permute.xlu0 %1387
      %1389 = vrot.lane.b32.xlu0 %v1370, 48
      %v1390 = vpop.permute.xlu0 %1389
      %1391 = vrot.lane.b32.xlu0 %v1371, 48
      %v1392 = vpop.permute.xlu0 %1391
      %1393 = vrot.lane.b32.xlu0 %v1372, 48
      %v1394 = vpop.permute.xlu0 %1393
      %1395 = vrot.lane.b32.xlu0 %v1373, 48
      %v1396 = vpop.permute.xlu0 %1395
      %1397 = vrot.lane.b32.xlu0 %v1374, 48
      %v1398 = vpop.permute.xlu0 %1397
      %1407 = vst.msk [vmem:[#allocation3] sm:$0xff] %vm797, %v1384
      %1408 = vst.msk [vmem:[#allocation3 + $0x8] sm:$0xff] %vm797, %v1386
      %1409 = vst.msk [vmem:[#allocation3 + $0x10] sm:$0xff] %vm797, %v1388
      %1410 = vst.msk [vmem:[#allocation3 + $0x18] sm:$0xff] %vm797, %v1390
      %1411 = vst.msk [vmem:[#allocation3 + $0x20] sm:$0xff] %vm797, %v1392
      %1412 = vst.msk [vmem:[#allocation3 + $0x28] sm:$0xff] %vm797, %v1394
      %1413 = vst.msk [vmem:[#allocation3 + $0x30] sm:$0xff] %vm797, %v1396
      %1414 = vst.msk [vmem:[#allocation3 + $0x38] sm:$0xff] %vm797, %v1398
      %v1415 = vld [vmem:[%s756 + $0x8] sm:$0xff]
      %v1416 = vld [vmem:[%s756 + $0x20] sm:$0xff]
      %v1417 = vld [vmem:[%s756 + $0x38] sm:$0xff]
      %v1418 = vld [vmem:[%s756 + $0x50] sm:$0xff]
      %v1419 = vld [vmem:[%s756 + $0x68] sm:$0xff]
      %v1420 = vld [vmem:[%s756 + $0x80] sm:$0xff]
      %v1421 = vld [vmem:[%s756 + $0x98] sm:$0xff]
      %v1422 = vld [vmem:[%s756 + $0xb0] sm:$0xff]
      %1431 = vrot.lane.b32.xlu0 %v1415, 56
      %v1432 = vpop.permute.xlu0 %1431
      %1433 = vrot.lane.b32.xlu0 %v1416, 56
      %v1434 = vpop.permute.xlu0 %1433
      %1435 = vrot.lane.b32.xlu0 %v1417, 56
      %v1436 = vpop.permute.xlu0 %1435
      %1437 = vrot.lane.b32.xlu0 %v1418, 56
      %v1438 = vpop.permute.xlu0 %1437
      %1439 = vrot.lane.b32.xlu0 %v1419, 56
      %v1440 = vpop.permute.xlu0 %1439
      %1441 = vrot.lane.b32.xlu0 %v1420, 56
      %v1442 = vpop.permute.xlu0 %1441
      %1443 = vrot.lane.b32.xlu0 %v1421, 56
      %v1444 = vpop.permute.xlu0 %1443
      %1445 = vrot.lane.b32.xlu0 %v1422, 56
      %v1446 = vpop.permute.xlu0 %1445
      %1455 = vst.msk [vmem:[#allocation3] sm:$0xff] %vm846, %v1432
      %1456 = vst.msk [vmem:[#allocation3 + $0x8] sm:$0xff] %vm846, %v1434
      %1457 = vst.msk [vmem:[#allocation3 + $0x10] sm:$0xff] %vm846, %v1436
      %1458 = vst.msk [vmem:[#allocation3 + $0x18] sm:$0xff] %vm846, %v1438
      %1459 = vst.msk [vmem:[#allocation3 + $0x20] sm:$0xff] %vm846, %v1440
      %1460 = vst.msk [vmem:[#allocation3 + $0x28] sm:$0xff] %vm846, %v1442
      %1461 = vst.msk [vmem:[#allocation3 + $0x30] sm:$0xff] %vm846, %v1444
      %1462 = vst.msk [vmem:[#allocation3 + $0x38] sm:$0xff] %vm846, %v1446
      %v1463 = vld [vmem:[%s756 + $0x9] sm:$0xff]
      %v1464 = vld [vmem:[%s756 + $0x21] sm:$0xff]
      %v1465 = vld [vmem:[%s756 + $0x39] sm:$0xff]
      %v1466 = vld [vmem:[%s756 + $0x51] sm:$0xff]
      %v1467 = vld [vmem:[%s756 + $0x69] sm:$0xff]
      %v1468 = vld [vmem:[%s756 + $0x81] sm:$0xff]
      %v1469 = vld [vmem:[%s756 + $0x99] sm:$0xff]
      %v1470 = vld [vmem:[%s756 + $0xb1] sm:$0xff]
      %1479 = vrot.lane.b32.xlu0 %v1463, 64
      %v1480 = vpop.permute.xlu0 %1479
      %1481 = vrot.lane.b32.xlu0 %v1464, 64
      %v1482 = vpop.permute.xlu0 %1481
      %1483 = vrot.lane.b32.xlu0 %v1465, 64
      %v1484 = vpop.permute.xlu0 %1483
      %1485 = vrot.lane.b32.xlu0 %v1466, 64
      %v1486 = vpop.permute.xlu0 %1485
      %1487 = vrot.lane.b32.xlu0 %v1467, 64
      %v1488 = vpop.permute.xlu0 %1487
      %1489 = vrot.lane.b32.xlu0 %v1468, 64
      %v1490 = vpop.permute.xlu0 %1489
      %1491 = vrot.lane.b32.xlu0 %v1469, 64
      %v1492 = vpop.permute.xlu0 %1491
      %1493 = vrot.lane.b32.xlu0 %v1470, 64
      %v1494 = vpop.permute.xlu0 %1493
      %1503 = vst.msk [vmem:[#allocation3] sm:$0xff] %vm895, %v1480
      %1504 = vst.msk [vmem:[#allocation3 + $0x8] sm:$0xff] %vm895, %v1482
      %1505 = vst.msk [vmem:[#allocation3 + $0x10] sm:$0xff] %vm895, %v1484
      %1506 = vst.msk [vmem:[#allocation3 + $0x18] sm:$0xff] %vm895, %v1486
      %1507 = vst.msk [vmem:[#allocation3 + $0x20] sm:$0xff] %vm895, %v1488
      %1508 = vst.msk [vmem:[#allocation3 + $0x28] sm:$0xff] %vm895, %v1490
      %1509 = vst.msk [vmem:[#allocation3 + $0x30] sm:$0xff] %vm895, %v1492
      %1510 = vst.msk [vmem:[#allocation3 + $0x38] sm:$0xff] %vm895, %v1494
      %v1511 = vld [vmem:[#allocation3] sm:$0xff]
      %v1512 = vld [vmem:[#allocation3 + $0x8] sm:$0xff]
      %v1513 = vld [vmem:[#allocation3 + $0x10] sm:$0xff]
      %v1514 = vld [vmem:[#allocation3 + $0x18] sm:$0xff]
      %v1515 = vld [vmem:[#allocation3 + $0x20] sm:$0xff]
      %v1516 = vld [vmem:[#allocation3 + $0x28] sm:$0xff]
      %v1517 = vld [vmem:[#allocation3 + $0x30] sm:$0xff]
      %v1518 = vld [vmem:[#allocation3 + $0x38] sm:$0xff]
      %s1519 = scalar_lea.vmem %s3, 72
      %v1520 = vld [vmem:[%s1519] sm:$0xff]
      %v1521 = vld [vmem:[%s1519 + $0x8] sm:$0xff]
      %v1522 = vld [vmem:[%s1519 + $0x10] sm:$0xff]
      %v1523 = vld [vmem:[%s1519 + $0x18] sm:$0xff]
      %v1524 = vld [vmem:[%s1519 + $0x20] sm:$0xff]
      %v1525 = vld [vmem:[%s1519 + $0x28] sm:$0xff]
      %v1526 = vld [vmem:[%s1519 + $0x30] sm:$0xff]
      %v1527 = vld [vmem:[%s1519 + $0x38] sm:$0xff]
      %v1528 = vld [vmem:[%s1519 + $0x40] sm:$0xff]
      %s1529 = scalar_lea.vmem %s4, 1
      %v1530 = vld [vmem:[%s1529] sm:$0x1]
      %v1532 = vperm.slane %v1530, 0
      %v1535 = vsel %vm925, %v1511, 0
      %v1538 = vsel %vm925, %v1512, 0
      %v1541 = vsel %vm925, %v1513, 0
      %v1544 = vsel %vm925, %v1514, 0
      %v1547 = vsel %vm925, %v1515, 0
      %v1550 = vsel %vm925, %v1516, 0
      %v1553 = vsel %vm925, %v1517, 0
      %v1556 = vsel %vm925, %v1518, 0
      %1558 = vmatpush.msra.mxu0 0.0
      %1559 = vmatpush.msra.mxu0 0.0
      %1560 = vmatpush.msra.mxu0 0.0
      %1561 = vmatpush.msra.mxu0 0.0
      %1562 = vmatpush.msra.mxu0 0.0
      %1563 = vmatpush.msra.mxu0 0.0
      %1564 = vmatpush.msra.mxu0 0.0
      %1565 = vmatpush.msra.mxu0 %v1528
      %1566 = vmatpush.msra.mxu0 %v1527
      %1567 = vmatpush.msra.mxu0 %v1526
      %1568 = vmatpush.msra.mxu0 %v1525
      %1569 = vmatpush.msra.mxu0 %v1524
      %1570 = vmatpush.msra.mxu0 %v1523
      %1571 = vmatpush.msra.mxu0 %v1522
      %1572 = vmatpush.msra.mxu0 %v1521
      %1573 = vmatpush.msra.mxu0 %v1520
      %1574 = vmatmul.f32.gmra.mxu0 %v1535
      %v1575 = vpop.f32.mrf.mxu0
      %v1576 = vadd.f32 %v1532, %v1575
      %1577 = vmatmul.f32.gmra.mxu0 %v1538
      %v1578 = vpop.f32.mrf.mxu0
      %v1579 = vadd.f32 %v1532, %v1578
      %1580 = vmatmul.f32.gmra.mxu0 %v1541
      %v1581 = vpop.f32.mrf.mxu0
      %v1582 = vadd.f32 %v1532, %v1581
      %1583 = vmatmul.f32.gmra.mxu0 %v1544
      %v1584 = vpop.f32.mrf.mxu0
      %v1585 = vadd.f32 %v1532, %v1584
      %1586 = vmatmul.f32.gmra.mxu0 %v1547
      %v1587 = vpop.f32.mrf.mxu0
      %v1588 = vadd.f32 %v1532, %v1587
      %1589 = vmatmul.f32.gmra.mxu0 %v1550
      %v1590 = vpop.f32.mrf.mxu0
      %v1591 = vadd.f32 %v1532, %v1590
      %1592 = vmatmul.f32.gmra.mxu0 %v1553
      %v1593 = vpop.f32.mrf.mxu0
      %v1594 = vadd.f32 %v1532, %v1593
      %1595 = vmatmul.f32.gmra.mxu0 %v1556
      %v1596 = vpop.f32.mrf.mxu0
      %v1597 = vadd.f32 %v1532, %v1596
      %1598 = vdwg.mxu0
      %v1599 = vmax.f32 %v1576, 0.0
      %v1600 = vmax.f32 %v1579, 0.0
      %v1601 = vmax.f32 %v1582, 0.0
      %v1602 = vmax.f32 %v1585, 0.0
      %v1603 = vmax.f32 %v1588, 0.0
      %v1604 = vmax.f32 %v1591, 0.0
      %v1605 = vmax.f32 %v1594, 0.0
      %v1606 = vmax.f32 %v1597, 0.0
      %1615 = vrot.lane.b32.xlu0 %v1599, 16
      %v1616 = vpop.permute.xlu0 %1615
      %1617 = vrot.lane.b32.xlu0 %v1600, 16
      %v1618 = vpop.permute.xlu0 %1617
      %1619 = vrot.lane.b32.xlu0 %v1601, 16
      %v1620 = vpop.permute.xlu0 %1619
      %1621 = vrot.lane.b32.xlu0 %v1602, 16
      %v1622 = vpop.permute.xlu0 %1621
      %1623 = vrot.lane.b32.xlu0 %v1603, 16
      %v1624 = vpop.permute.xlu0 %1623
      %1625 = vrot.lane.b32.xlu0 %v1604, 16
      %v1626 = vpop.permute.xlu0 %1625
      %1627 = vrot.lane.b32.xlu0 %v1605, 16
      %v1628 = vpop.permute.xlu0 %1627
      %1629 = vrot.lane.b32.xlu0 %v1606, 16
      %v1630 = vpop.permute.xlu0 %1629
      %1639 = vst.msk [vmem:[#allocation4] sm:$0xff] %vm600, %v1616
      %1640 = vst.msk [vmem:[#allocation4 + $0x8] sm:$0xff] %vm600, %v1618
      %1641 = vst.msk [vmem:[#allocation4 + $0x10] sm:$0xff] %vm600, %v1620
      %1642 = vst.msk [vmem:[#allocation4 + $0x18] sm:$0xff] %vm600, %v1622
      %1643 = vst.msk [vmem:[#allocation4 + $0x20] sm:$0xff] %vm600, %v1624
      %1644 = vst.msk [vmem:[#allocation4 + $0x28] sm:$0xff] %vm600, %v1626
      %1645 = vst.msk [vmem:[#allocation4 + $0x30] sm:$0xff] %vm600, %v1628
      %1646 = vst.msk [vmem:[#allocation4 + $0x38] sm:$0xff] %vm600, %v1630
      %1647 = vrot.lane.b32.xlu0 %v1599, 24
      %v1648 = vpop.permute.xlu0 %1647
      %1649 = vrot.lane.b32.xlu0 %v1600, 24
      %v1650 = vpop.permute.xlu0 %1649
      %1651 = vrot.lane.b32.xlu0 %v1601, 24
      %v1652 = vpop.permute.xlu0 %1651
      %1653 = vrot.lane.b32.xlu0 %v1602, 24
      %v1654 = vpop.permute.xlu0 %1653
      %1655 = vrot.lane.b32.xlu0 %v1603, 24
      %v1656 = vpop.permute.xlu0 %1655
      %1657 = vrot.lane.b32.xlu0 %v1604, 24
      %v1658 = vpop.permute.xlu0 %1657
      %1659 = vrot.lane.b32.xlu0 %v1605, 24
      %v1660 = vpop.permute.xlu0 %1659
      %1661 = vrot.lane.b32.xlu0 %v1606, 24
      %v1662 = vpop.permute.xlu0 %1661
      %v1671 = vadd.f32 %v407, %v1648
      %v1672 = vadd.f32 %v408, %v1650
      %v1673 = vadd.f32 %v409, %v1652
      %v1674 = vadd.f32 %v410, %v1654
      %v1675 = vadd.f32 %v411, %v1656
      %v1676 = vadd.f32 %v412, %v1658
      %v1677 = vadd.f32 %v413, %v1660
      %v1678 = vadd.f32 %v414, %v1662
      %1687 = vrot.lane.b32.xlu0 %v1671, 104
      %v1688 = vpop.permute.xlu0 %1687
      %1689 = vrot.lane.b32.xlu0 %v1672, 104
      %v1690 = vpop.permute.xlu0 %1689
      %1691 = vrot.lane.b32.xlu0 %v1673, 104
      %v1692 = vpop.permute.xlu0 %1691
      %1693 = vrot.lane.b32.xlu0 %v1674, 104
      %v1694 = vpop.permute.xlu0 %1693
      %1695 = vrot.lane.b32.xlu0 %v1675, 104
      %v1696 = vpop.permute.xlu0 %1695
      %1697 = vrot.lane.b32.xlu0 %v1676, 104
      %v1698 = vpop.permute.xlu0 %1697
      %1699 = vrot.lane.b32.xlu0 %v1677, 104
      %v1700 = vpop.permute.xlu0 %1699
      %1701 = vrot.lane.b32.xlu0 %v1678, 104
      %v1702 = vpop.permute.xlu0 %1701
      %1711 = vst.msk [vmem:[%s486 + $0x8] sm:$0xff] %vm415, %v1688
      %1712 = vst.msk [vmem:[%s486 + $0x20] sm:$0xff] %vm415, %v1690
      %1713 = vst.msk [vmem:[%s486 + $0x38] sm:$0xff] %vm415, %v1692
      %1714 = vst.msk [vmem:[%s486 + $0x50] sm:$0xff] %vm415, %v1694
      %1715 = vst.msk [vmem:[%s486 + $0x68] sm:$0xff] %vm415, %v1696
      %1716 = vst.msk [vmem:[%s486 + $0x80] sm:$0xff] %vm415, %v1698
      %1717 = vst.msk [vmem:[%s486 + $0x98] sm:$0xff] %vm415, %v1700
      %1718 = vst.msk [vmem:[%s486 + $0xb0] sm:$0xff] %vm415, %v1702
      %v1719 = vld [vmem:[#allocation2 + $0x7] sm:$0xff]
      %v1720 = vld [vmem:[#allocation2 + $0x1f] sm:$0xff]
      %v1721 = vld [vmem:[#allocation2 + $0x37] sm:$0xff]
      %v1722 = vld [vmem:[#allocation2 + $0x4f] sm:$0xff]
      %v1723 = vld [vmem:[#allocation2 + $0x67] sm:$0xff]
      %v1724 = vld [vmem:[#allocation2 + $0x7f] sm:$0xff]
      %v1725 = vld [vmem:[#allocation2 + $0x97] sm:$0xff]
      %v1726 = vld [vmem:[#allocation2 + $0xaf] sm:$0xff]
      %1727 = vst.msk [vmem:[#allocation3] sm:$0xff] %vm415, %v1719
      %1728 = vst.msk [vmem:[#allocation3 + $0x8] sm:$0xff] %vm415, %v1720
      %1729 = vst.msk [vmem:[#allocation3 + $0x10] sm:$0xff] %vm415, %v1721
      %1730 = vst.msk [vmem:[#allocation3 + $0x18] sm:$0xff] %vm415, %v1722
      %1731 = vst.msk [vmem:[#allocation3 + $0x20] sm:$0xff] %vm415, %v1723
      %1732 = vst.msk [vmem:[#allocation3 + $0x28] sm:$0xff] %vm415, %v1724
      %1733 = vst.msk [vmem:[#allocation3 + $0x30] sm:$0xff] %vm415, %v1725
      %1734 = vst.msk [vmem:[#allocation3 + $0x38] sm:$0xff] %vm415, %v1726
      %v1735 = vld [vmem:[#allocation2 + $0x8] sm:$0xff]
      %v1736 = vld [vmem:[#allocation2 + $0x20] sm:$0xff]
      %v1737 = vld [vmem:[#allocation2 + $0x38] sm:$0xff]
      %v1738 = vld [vmem:[#allocation2 + $0x50] sm:$0xff]
      %v1739 = vld [vmem:[#allocation2 + $0x68] sm:$0xff]
      %v1740 = vld [vmem:[#allocation2 + $0x80] sm:$0xff]
      %v1741 = vld [vmem:[#allocation2 + $0x98] sm:$0xff]
      %v1742 = vld [vmem:[#allocation2 + $0xb0] sm:$0xff]
      %1751 = vrot.lane.b32.xlu0 %v1735, 8
      %v1752 = vpop.permute.xlu0 %1751
      %1753 = vrot.lane.b32.xlu0 %v1736, 8
      %v1754 = vpop.permute.xlu0 %1753
      %1755 = vrot.lane.b32.xlu0 %v1737, 8
      %v1756 = vpop.permute.xlu0 %1755
      %1757 = vrot.lane.b32.xlu0 %v1738, 8
      %v1758 = vpop.permute.xlu0 %1757
      %1759 = vrot.lane.b32.xlu0 %v1739, 8
      %v1760 = vpop.permute.xlu0 %1759
      %1761 = vrot.lane.b32.xlu0 %v1740, 8
      %v1762 = vpop.permute.xlu0 %1761
      %1763 = vrot.lane.b32.xlu0 %v1741, 8
      %v1764 = vpop.permute.xlu0 %1763
      %1765 = vrot.lane.b32.xlu0 %v1742, 8
      %v1766 = vpop.permute.xlu0 %1765
      %1775 = vst.msk [vmem:[#allocation3] sm:$0xff] %vm551, %v1752
      %1776 = vst.msk [vmem:[#allocation3 + $0x8] sm:$0xff] %vm551, %v1754
      %1777 = vst.msk [vmem:[#allocation3 + $0x10] sm:$0xff] %vm551, %v1756
      %1778 = vst.msk [vmem:[#allocation3 + $0x18] sm:$0xff] %vm551, %v1758
      %1779 = vst.msk [vmem:[#allocation3 + $0x20] sm:$0xff] %vm551, %v1760
      %1780 = vst.msk [vmem:[#allocation3 + $0x28] sm:$0xff] %vm551, %v1762
      %1781 = vst.msk [vmem:[#allocation3 + $0x30] sm:$0xff] %vm551, %v1764
      %1782 = vst.msk [vmem:[#allocation3 + $0x38] sm:$0xff] %vm551, %v1766
      %v1783 = vld [vmem:[#allocation2 + $0x9] sm:$0xff]
      %v1784 = vld [vmem:[#allocation2 + $0x21] sm:$0xff]
      %v1785 = vld [vmem:[#allocation2 + $0x39] sm:$0xff]
      %v1786 = vld [vmem:[#allocation2 + $0x51] sm:$0xff]
      %v1787 = vld [vmem:[#allocation2 + $0x69] sm:$0xff]
      %v1788 = vld [vmem:[#allocation2 + $0x81] sm:$0xff]
      %v1789 = vld [vmem:[#allocation2 + $0x99] sm:$0xff]
      %v1790 = vld [vmem:[#allocation2 + $0xb1] sm:$0xff]
      %1799 = vrot.lane.b32.xlu0 %v1783, 16
      %v1800 = vpop.permute.xlu0 %1799
      %1801 = vrot.lane.b32.xlu0 %v1784, 16
      %v1802 = vpop.permute.xlu0 %1801
      %1803 = vrot.lane.b32.xlu0 %v1785, 16
      %v1804 = vpop.permute.xlu0 %1803
      %1805 = vrot.lane.b32.xlu0 %v1786, 16
      %v1806 = vpop.permute.xlu0 %1805
      %1807 = vrot.lane.b32.xlu0 %v1787, 16
      %v1808 = vpop.permute.xlu0 %1807
      %1809 = vrot.lane.b32.xlu0 %v1788, 16
      %v1810 = vpop.permute.xlu0 %1809
      %1811 = vrot.lane.b32.xlu0 %v1789, 16
      %v1812 = vpop.permute.xlu0 %1811
      %1813 = vrot.lane.b32.xlu0 %v1790, 16
      %v1814 = vpop.permute.xlu0 %1813
      %1823 = vst.msk [vmem:[#allocation3] sm:$0xff] %vm600, %v1800
      %1824 = vst.msk [vmem:[#allocation3 + $0x8] sm:$0xff] %vm600, %v1802
      %1825 = vst.msk [vmem:[#allocation3 + $0x10] sm:$0xff] %vm600, %v1804
      %1826 = vst.msk [vmem:[#allocation3 + $0x18] sm:$0xff] %vm600, %v1806
      %1827 = vst.msk [vmem:[#allocation3 + $0x20] sm:$0xff] %vm600, %v1808
      %1828 = vst.msk [vmem:[#allocation3 + $0x28] sm:$0xff] %vm600, %v1810
      %1829 = vst.msk [vmem:[#allocation3 + $0x30] sm:$0xff] %vm600, %v1812
      %1830 = vst.msk [vmem:[#allocation3 + $0x38] sm:$0xff] %vm600, %v1814
      %v1831 = vld [vmem:[%s486 + $0x7] sm:$0xff]
      %v1832 = vld [vmem:[%s486 + $0x1f] sm:$0xff]
      %v1833 = vld [vmem:[%s486 + $0x37] sm:$0xff]
      %v1834 = vld [vmem:[%s486 + $0x4f] sm:$0xff]
      %v1835 = vld [vmem:[%s486 + $0x67] sm:$0xff]
      %v1836 = vld [vmem:[%s486 + $0x7f] sm:$0xff]
      %v1837 = vld [vmem:[%s486 + $0x97] sm:$0xff]
      %v1838 = vld [vmem:[%s486 + $0xaf] sm:$0xff]
      %1847 = vrot.lane.b32.xlu0 %v1831, 24
      %v1848 = vpop.permute.xlu0 %1847
      %1849 = vrot.lane.b32.xlu0 %v1832, 24
      %v1850 = vpop.permute.xlu0 %1849
      %1851 = vrot.lane.b32.xlu0 %v1833, 24
      %v1852 = vpop.permute.xlu0 %1851
      %1853 = vrot.lane.b32.xlu0 %v1834, 24
      %v1854 = vpop.permute.xlu0 %1853
      %1855 = vrot.lane.b32.xlu0 %v1835, 24
      %v1856 = vpop.permute.xlu0 %1855
      %1857 = vrot.lane.b32.xlu0 %v1836, 24
      %v1858 = vpop.permute.xlu0 %1857
      %1859 = vrot.lane.b32.xlu0 %v1837, 24
      %v1860 = vpop.permute.xlu0 %1859
      %1861 = vrot.lane.b32.xlu0 %v1838, 24
      %v1862 = vpop.permute.xlu0 %1861
      %1871 = vst.msk [vmem:[#allocation3] sm:$0xff] %vm649, %v1848
      %1872 = vst.msk [vmem:[#allocation3 + $0x8] sm:$0xff] %vm649, %v1850
      %1873 = vst.msk [vmem:[#allocation3 + $0x10] sm:$0xff] %vm649, %v1852
      %1874 = vst.msk [vmem:[#allocation3 + $0x18] sm:$0xff] %vm649, %v1854
      %1875 = vst.msk [vmem:[#allocation3 + $0x20] sm:$0xff] %vm649, %v1856
      %1876 = vst.msk [vmem:[#allocation3 + $0x28] sm:$0xff] %vm649, %v1858
      %1877 = vst.msk [vmem:[#allocation3 + $0x30] sm:$0xff] %vm649, %v1860
      %1878 = vst.msk [vmem:[#allocation3 + $0x38] sm:$0xff] %vm649, %v1862
      %v1879 = vld [vmem:[%s486 + $0x8] sm:$0xff]
      %v1880 = vld [vmem:[%s486 + $0x20] sm:$0xff]
      %v1881 = vld [vmem:[%s486 + $0x38] sm:$0xff]
      %v1882 = vld [vmem:[%s486 + $0x50] sm:$0xff]
      %v1883 = vld [vmem:[%s486 + $0x68] sm:$0xff]
      %v1884 = vld [vmem:[%s486 + $0x80] sm:$0xff]
      %v1885 = vld [vmem:[%s486 + $0x98] sm:$0xff]
      %v1886 = vld [vmem:[%s486 + $0xb0] sm:$0xff]
      %1895 = vrot.lane.b32.xlu0 %v1879, 32
      %v1896 = vpop.permute.xlu0 %1895
      %1897 = vrot.lane.b32.xlu0 %v1880, 32
      %v1898 = vpop.permute.xlu0 %1897
      %1899 = vrot.lane.b32.xlu0 %v1881, 32
      %v1900 = vpop.permute.xlu0 %1899
      %1901 = vrot.lane.b32.xlu0 %v1882, 32
      %v1902 = vpop.permute.xlu0 %1901
      %1903 = vrot.lane.b32.xlu0 %v1883, 32
      %v1904 = vpop.permute.xlu0 %1903
      %1905 = vrot.lane.b32.xlu0 %v1884, 32
      %v1906 = vpop.permute.xlu0 %1905
      %1907 = vrot.lane.b32.xlu0 %v1885, 32
      %v1908 = vpop.permute.xlu0 %1907
      %1909 = vrot.lane.b32.xlu0 %v1886, 32
      %v1910 = vpop.permute.xlu0 %1909
      %1919 = vst.msk [vmem:[#allocation3] sm:$0xff] %vm698, %v1896
      %1920 = vst.msk [vmem:[#allocation3 + $0x8] sm:$0xff] %vm698, %v1898
      %1921 = vst.msk [vmem:[#allocation3 + $0x10] sm:$0xff] %vm698, %v1900
      %1922 = vst.msk [vmem:[#allocation3 + $0x18] sm:$0xff] %vm698, %v1902
      %1923 = vst.msk [vmem:[#allocation3 + $0x20] sm:$0xff] %vm698, %v1904
      %1924 = vst.msk [vmem:[#allocation3 + $0x28] sm:$0xff] %vm698, %v1906
      %1925 = vst.msk [vmem:[#allocation3 + $0x30] sm:$0xff] %vm698, %v1908
      %1926 = vst.msk [vmem:[#allocation3 + $0x38] sm:$0xff] %vm698, %v1910
      %v1927 = vld [vmem:[%s486 + $0x9] sm:$0xff]
      %v1928 = vld [vmem:[%s486 + $0x21] sm:$0xff]
      %v1929 = vld [vmem:[%s486 + $0x39] sm:$0xff]
      %v1930 = vld [vmem:[%s486 + $0x51] sm:$0xff]
      %v1931 = vld [vmem:[%s486 + $0x69] sm:$0xff]
      %v1932 = vld [vmem:[%s486 + $0x81] sm:$0xff]
      %v1933 = vld [vmem:[%s486 + $0x99] sm:$0xff]
      %v1934 = vld [vmem:[%s486 + $0xb1] sm:$0xff]
      %1943 = vrot.lane.b32.xlu0 %v1927, 40
      %v1944 = vpop.permute.xlu0 %1943
      %1945 = vrot.lane.b32.xlu0 %v1928, 40
      %v1946 = vpop.permute.xlu0 %1945
      %1947 = vrot.lane.b32.xlu0 %v1929, 40
      %v1948 = vpop.permute.xlu0 %1947
      %1949 = vrot.lane.b32.xlu0 %v1930, 40
      %v1950 = vpop.permute.xlu0 %1949
      %1951 = vrot.lane.b32.xlu0 %v1931, 40
      %v1952 = vpop.permute.xlu0 %1951
      %1953 = vrot.lane.b32.xlu0 %v1932, 40
      %v1954 = vpop.permute.xlu0 %1953
      %1955 = vrot.lane.b32.xlu0 %v1933, 40
      %v1956 = vpop.permute.xlu0 %1955
      %1957 = vrot.lane.b32.xlu0 %v1934, 40
      %v1958 = vpop.permute.xlu0 %1957
      %1967 = vst.msk [vmem:[#allocation3] sm:$0xff] %vm747, %v1944
      %1968 = vst.msk [vmem:[#allocation3 + $0x8] sm:$0xff] %vm747, %v1946
      %1969 = vst.msk [vmem:[#allocation3 + $0x10] sm:$0xff] %vm747, %v1948
      %1970 = vst.msk [vmem:[#allocation3 + $0x18] sm:$0xff] %vm747, %v1950
      %1971 = vst.msk [vmem:[#allocation3 + $0x20] sm:$0xff] %vm747, %v1952
      %1972 = vst.msk [vmem:[#allocation3 + $0x28] sm:$0xff] %vm747, %v1954
      %1973 = vst.msk [vmem:[#allocation3 + $0x30] sm:$0xff] %vm747, %v1956
      %1974 = vst.msk [vmem:[#allocation3 + $0x38] sm:$0xff] %vm747, %v1958
      %v1975 = vld [vmem:[%s756 + $0x7] sm:$0xff]
      %v1976 = vld [vmem:[%s756 + $0x1f] sm:$0xff]
      %v1977 = vld [vmem:[%s756 + $0x37] sm:$0xff]
      %v1978 = vld [vmem:[%s756 + $0x4f] sm:$0xff]
      %v1979 = vld [vmem:[%s756 + $0x67] sm:$0xff]
      %v1980 = vld [vmem:[%s756 + $0x7f] sm:$0xff]
      %v1981 = vld [vmem:[%s756 + $0x97] sm:$0xff]
      %v1982 = vld [vmem:[%s756 + $0xaf] sm:$0xff]
      %1991 = vrot.lane.b32.xlu0 %v1975, 48
      %v1992 = vpop.permute.xlu0 %1991
      %1993 = vrot.lane.b32.xlu0 %v1976, 48
      %v1994 = vpop.permute.xlu0 %1993
      %1995 = vrot.lane.b32.xlu0 %v1977, 48
      %v1996 = vpop.permute.xlu0 %1995
      %1997 = vrot.lane.b32.xlu0 %v1978, 48
      %v1998 = vpop.permute.xlu0 %1997
      %1999 = vrot.lane.b32.xlu0 %v1979, 48
      %v2000 = vpop.permute.xlu0 %1999
      %2001 = vrot.lane.b32.xlu0 %v1980, 48
      %v2002 = vpop.permute.xlu0 %2001
      %2003 = vrot.lane.b32.xlu0 %v1981, 48
      %v2004 = vpop.permute.xlu0 %2003
      %2005 = vrot.lane.b32.xlu0 %v1982, 48
      %v2006 = vpop.permute.xlu0 %2005
      %2015 = vst.msk [vmem:[#allocation3] sm:$0xff] %vm797, %v1992
      %2016 = vst.msk [vmem:[#allocation3 + $0x8] sm:$0xff] %vm797, %v1994
      %2017 = vst.msk [vmem:[#allocation3 + $0x10] sm:$0xff] %vm797, %v1996
      %2018 = vst.msk [vmem:[#allocation3 + $0x18] sm:$0xff] %vm797, %v1998
      %2019 = vst.msk [vmem:[#allocation3 + $0x20] sm:$0xff] %vm797, %v2000
      %2020 = vst.msk [vmem:[#allocation3 + $0x28] sm:$0xff] %vm797, %v2002
      %2021 = vst.msk [vmem:[#allocation3 + $0x30] sm:$0xff] %vm797, %v2004
      %2022 = vst.msk [vmem:[#allocation3 + $0x38] sm:$0xff] %vm797, %v2006
      %v2023 = vld [vmem:[%s756 + $0x8] sm:$0xff]
      %v2024 = vld [vmem:[%s756 + $0x20] sm:$0xff]
      %v2025 = vld [vmem:[%s756 + $0x38] sm:$0xff]
      %v2026 = vld [vmem:[%s756 + $0x50] sm:$0xff]
      %v2027 = vld [vmem:[%s756 + $0x68] sm:$0xff]
      %v2028 = vld [vmem:[%s756 + $0x80] sm:$0xff]
      %v2029 = vld [vmem:[%s756 + $0x98] sm:$0xff]
      %v2030 = vld [vmem:[%s756 + $0xb0] sm:$0xff]
      %2039 = vrot.lane.b32.xlu0 %v2023, 56
      %v2040 = vpop.permute.xlu0 %2039
      %2041 = vrot.lane.b32.xlu0 %v2024, 56
      %v2042 = vpop.permute.xlu0 %2041
      %2043 = vrot.lane.b32.xlu0 %v2025, 56
      %v2044 = vpop.permute.xlu0 %2043
      %2045 = vrot.lane.b32.xlu0 %v2026, 56
      %v2046 = vpop.permute.xlu0 %2045
      %2047 = vrot.lane.b32.xlu0 %v2027, 56
      %v2048 = vpop.permute.xlu0 %2047
      %2049 = vrot.lane.b32.xlu0 %v2028, 56
      %v2050 = vpop.permute.xlu0 %2049
      %2051 = vrot.lane.b32.xlu0 %v2029, 56
      %v2052 = vpop.permute.xlu0 %2051
      %2053 = vrot.lane.b32.xlu0 %v2030, 56
      %v2054 = vpop.permute.xlu0 %2053
      %2063 = vst.msk [vmem:[#allocation3] sm:$0xff] %vm846, %v2040
      %2064 = vst.msk [vmem:[#allocation3 + $0x8] sm:$0xff] %vm846, %v2042
      %2065 = vst.msk [vmem:[#allocation3 + $0x10] sm:$0xff] %vm846, %v2044
      %2066 = vst.msk [vmem:[#allocation3 + $0x18] sm:$0xff] %vm846, %v2046
      %2067 = vst.msk [vmem:[#allocation3 + $0x20] sm:$0xff] %vm846, %v2048
      %2068 = vst.msk [vmem:[#allocation3 + $0x28] sm:$0xff] %vm846, %v2050
      %2069 = vst.msk [vmem:[#allocation3 + $0x30] sm:$0xff] %vm846, %v2052
      %2070 = vst.msk [vmem:[#allocation3 + $0x38] sm:$0xff] %vm846, %v2054
      %v2071 = vld [vmem:[%s756 + $0x9] sm:$0xff]
      %v2072 = vld [vmem:[%s756 + $0x21] sm:$0xff]
      %v2073 = vld [vmem:[%s756 + $0x39] sm:$0xff]
      %v2074 = vld [vmem:[%s756 + $0x51] sm:$0xff]
      %v2075 = vld [vmem:[%s756 + $0x69] sm:$0xff]
      %v2076 = vld [vmem:[%s756 + $0x81] sm:$0xff]
      %v2077 = vld [vmem:[%s756 + $0x99] sm:$0xff]
      %v2078 = vld [vmem:[%s756 + $0xb1] sm:$0xff]
      %2087 = vrot.lane.b32.xlu0 %v2071, 64
      %v2088 = vpop.permute.xlu0 %2087
      %2089 = vrot.lane.b32.xlu0 %v2072, 64
      %v2090 = vpop.permute.xlu0 %2089
      %2091 = vrot.lane.b32.xlu0 %v2073, 64
      %v2092 = vpop.permute.xlu0 %2091
      %2093 = vrot.lane.b32.xlu0 %v2074, 64
      %v2094 = vpop.permute.xlu0 %2093
      %2095 = vrot.lane.b32.xlu0 %v2075, 64
      %v2096 = vpop.permute.xlu0 %2095
      %2097 = vrot.lane.b32.xlu0 %v2076, 64
      %v2098 = vpop.permute.xlu0 %2097
      %2099 = vrot.lane.b32.xlu0 %v2077, 64
      %v2100 = vpop.permute.xlu0 %2099
      %2101 = vrot.lane.b32.xlu0 %v2078, 64
      %v2102 = vpop.permute.xlu0 %2101
      %2111 = vst.msk [vmem:[#allocation3] sm:$0xff] %vm895, %v2088
      %2112 = vst.msk [vmem:[#allocation3 + $0x8] sm:$0xff] %vm895, %v2090
      %2113 = vst.msk [vmem:[#allocation3 + $0x10] sm:$0xff] %vm895, %v2092
      %2114 = vst.msk [vmem:[#allocation3 + $0x18] sm:$0xff] %vm895, %v2094
      %2115 = vst.msk [vmem:[#allocation3 + $0x20] sm:$0xff] %vm895, %v2096
      %2116 = vst.msk [vmem:[#allocation3 + $0x28] sm:$0xff] %vm895, %v2098
      %2117 = vst.msk [vmem:[#allocation3 + $0x30] sm:$0xff] %vm895, %v2100
      %2118 = vst.msk [vmem:[#allocation3 + $0x38] sm:$0xff] %vm895, %v2102
      %v2119 = vld [vmem:[#allocation3] sm:$0xff]
      %v2120 = vld [vmem:[#allocation3 + $0x8] sm:$0xff]
      %v2121 = vld [vmem:[#allocation3 + $0x10] sm:$0xff]
      %v2122 = vld [vmem:[#allocation3 + $0x18] sm:$0xff]
      %v2123 = vld [vmem:[#allocation3 + $0x20] sm:$0xff]
      %v2124 = vld [vmem:[#allocation3 + $0x28] sm:$0xff]
      %v2125 = vld [vmem:[#allocation3 + $0x30] sm:$0xff]
      %v2126 = vld [vmem:[#allocation3 + $0x38] sm:$0xff]
      %s2127 = scalar_lea.vmem %s3, 144
      %v2128 = vld [vmem:[%s2127] sm:$0xff]
      %v2129 = vld [vmem:[%s2127 + $0x8] sm:$0xff]
      %v2130 = vld [vmem:[%s2127 + $0x10] sm:$0xff]
      %v2131 = vld [vmem:[%s2127 + $0x18] sm:$0xff]
      %v2132 = vld [vmem:[%s2127 + $0x20] sm:$0xff]
      %v2133 = vld [vmem:[%s2127 + $0x28] sm:$0xff]
      %v2134 = vld [vmem:[%s2127 + $0x30] sm:$0xff]
      %v2135 = vld [vmem:[%s2127 + $0x38] sm:$0xff]
      %v2136 = vld [vmem:[%s2127 + $0x40] sm:$0xff]
      %s2137 = scalar_lea.vmem %s4, 2
      %v2138 = vld [vmem:[%s2137] sm:$0x1]
      %v2140 = vperm.slane %v2138, 0
      %v2143 = vsel %vm925, %v2119, 0
      %v2146 = vsel %vm925, %v2120, 0
      %v2149 = vsel %vm925, %v2121, 0
      %v2152 = vsel %vm925, %v2122, 0
      %v2155 = vsel %vm925, %v2123, 0
      %v2158 = vsel %vm925, %v2124, 0
      %v2161 = vsel %vm925, %v2125, 0
      %v2164 = vsel %vm925, %v2126, 0
      %2166 = vmatpush.msra.mxu0 0.0
      %2167 = vmatpush.msra.mxu0 0.0
      %2168 = vmatpush.msra.mxu0 0.0
      %2169 = vmatpush.msra.mxu0 0.0
      %2170 = vmatpush.msra.mxu0 0.0
      %2171 = vmatpush.msra.mxu0 0.0
      %2172 = vmatpush.msra.mxu0 0.0
      %2173 = vmatpush.msra.mxu0 %v2136
      %2174 = vmatpush.msra.mxu0 %v2135
      %2175 = vmatpush.msra.mxu0 %v2134
      %2176 = vmatpush.msra.mxu0 %v2133
      %2177 = vmatpush.msra.mxu0 %v2132
      %2178 = vmatpush.msra.mxu0 %v2131
      %2179 = vmatpush.msra.mxu0 %v2130
      %2180 = vmatpush.msra.mxu0 %v2129
      %2181 = vmatpush.msra.mxu0 %v2128
      %2182 = vmatmul.f32.gmra.mxu0 %v2143
      %v2183 = vpop.f32.mrf.mxu0
      %v2184 = vadd.f32 %v2140, %v2183
      %2185 = vmatmul.f32.gmra.mxu0 %v2146
      %v2186 = vpop.f32.mrf.mxu0
      %v2187 = vadd.f32 %v2140, %v2186
      %2188 = vmatmul.f32.gmra.mxu0 %v2149
      %v2189 = vpop.f32.mrf.mxu0
      %v2190 = vadd.f32 %v2140, %v2189
      %2191 = vmatmul.f32.gmra.mxu0 %v2152
      %v2192 = vpop.f32.mrf.mxu0
      %v2193 = vadd.f32 %v2140, %v2192
      %2194 = vmatmul.f32.gmra.mxu0 %v2155
      %v2195 = vpop.f32.mrf.mxu0
      %v2196 = vadd.f32 %v2140, %v2195
      %2197 = vmatmul.f32.gmra.mxu0 %v2158
      %v2198 = vpop.f32.mrf.mxu0
      %v2199 = vadd.f32 %v2140, %v2198
      %2200 = vmatmul.f32.gmra.mxu0 %v2161
      %v2201 = vpop.f32.mrf.mxu0
      %v2202 = vadd.f32 %v2140, %v2201
      %2203 = vmatmul.f32.gmra.mxu0 %v2164
      %v2204 = vpop.f32.mrf.mxu0
      %v2205 = vadd.f32 %v2140, %v2204
      %2206 = vdwg.mxu0
      %v2207 = vmax.f32 %v2184, 0.0
      %v2208 = vmax.f32 %v2187, 0.0
      %v2209 = vmax.f32 %v2190, 0.0
      %v2210 = vmax.f32 %v2193, 0.0
      %v2211 = vmax.f32 %v2196, 0.0
      %v2212 = vmax.f32 %v2199, 0.0
      %v2213 = vmax.f32 %v2202, 0.0
      %v2214 = vmax.f32 %v2205, 0.0
      %2223 = vrot.lane.b32.xlu0 %v2207, 24
      %v2224 = vpop.permute.xlu0 %2223
      %2225 = vrot.lane.b32.xlu0 %v2208, 24
      %v2226 = vpop.permute.xlu0 %2225
      %2227 = vrot.lane.b32.xlu0 %v2209, 24
      %v2228 = vpop.permute.xlu0 %2227
      %2229 = vrot.lane.b32.xlu0 %v2210, 24
      %v2230 = vpop.permute.xlu0 %2229
      %2231 = vrot.lane.b32.xlu0 %v2211, 24
      %v2232 = vpop.permute.xlu0 %2231
      %2233 = vrot.lane.b32.xlu0 %v2212, 24
      %v2234 = vpop.permute.xlu0 %2233
      %2235 = vrot.lane.b32.xlu0 %v2213, 24
      %v2236 = vpop.permute.xlu0 %2235
      %2237 = vrot.lane.b32.xlu0 %v2214, 24
      %v2238 = vpop.permute.xlu0 %2237
      %2247 = vst.msk [vmem:[#allocation4] sm:$0xff] %vm649, %v2224
      %2248 = vst.msk [vmem:[#allocation4 + $0x8] sm:$0xff] %vm649, %v2226
      %2249 = vst.msk [vmem:[#allocation4 + $0x10] sm:$0xff] %vm649, %v2228
      %2250 = vst.msk [vmem:[#allocation4 + $0x18] sm:$0xff] %vm649, %v2230
      %2251 = vst.msk [vmem:[#allocation4 + $0x20] sm:$0xff] %vm649, %v2232
      %2252 = vst.msk [vmem:[#allocation4 + $0x28] sm:$0xff] %vm649, %v2234
      %2253 = vst.msk [vmem:[#allocation4 + $0x30] sm:$0xff] %vm649, %v2236
      %2254 = vst.msk [vmem:[#allocation4 + $0x38] sm:$0xff] %vm649, %v2238
      %v2255 = vld [vmem:[#allocation4] sm:$0xff]
      %v2256 = vld [vmem:[#allocation4 + $0x8] sm:$0xff]
      %v2257 = vld [vmem:[#allocation4 + $0x10] sm:$0xff]
      %v2258 = vld [vmem:[#allocation4 + $0x18] sm:$0xff]
      %v2259 = vld [vmem:[#allocation4 + $0x20] sm:$0xff]
      %v2260 = vld [vmem:[#allocation4 + $0x28] sm:$0xff]
      %v2261 = vld [vmem:[#allocation4 + $0x30] sm:$0xff]
      %v2262 = vld [vmem:[#allocation4 + $0x38] sm:$0xff]
      %v2263 = vld [vmem:[%s5] sm:$0xff]
      %v2264 = vld [vmem:[%s5 + $0x8] sm:$0xff]
      %v2265 = vld [vmem:[%s5 + $0x10] sm:$0xff]
      %v2266 = vld [vmem:[%s5 + $0x18] sm:$0xff]
      %v2267 = vld [vmem:[%s6] sm:$0x1]
      %v2269 = vperm.slane %v2267, 0
      %vm2271 = vcmask 261120
      %v2273 = vsel %vm2271, %v2255, 0
      %v2276 = vsel %vm2271, %v2256, 0
      %v2279 = vsel %vm2271, %v2257, 0
      %v2282 = vsel %vm2271, %v2258, 0
      %v2285 = vsel %vm2271, %v2259, 0
      %v2288 = vsel %vm2271, %v2260, 0
      %v2291 = vsel %vm2271, %v2261, 0
      %v2294 = vsel %vm2271, %v2262, 0
      %2296 = vmatpush.msra.mxu0 0.0
      %2297 = vmatpush.msra.mxu0 0.0
      %2298 = vmatpush.msra.mxu0 0.0
      %2299 = vmatpush.msra.mxu0 0.0
      %2300 = vmatpush.msra.mxu0 0.0
      %2301 = vmatpush.msra.mxu0 0.0
      %2302 = vmatpush.msra.mxu0 0.0
      %2303 = vmatpush.msra.mxu0 0.0
      %2304 = vmatpush.msra.mxu0 0.0
      %2305 = vmatpush.msra.mxu0 0.0
      %2306 = vmatpush.msra.mxu0 0.0
      %2307 = vmatpush.msra.mxu0 0.0
      %2308 = vmatpush.msra.mxu0 %v2266
      %2309 = vmatpush.msra.mxu0 %v2265
      %2310 = vmatpush.msra.mxu0 %v2264
      %2311 = vmatpush.msra.mxu0 %v2263
      %2312 = vmatmul.f32.gmra.mxu0 %v2273
      %v2313 = vpop.f32.mrf.mxu0
      %v2314 = vadd.f32 %v2269, %v2313
      %2315 = vmatmul.f32.gmra.mxu0 %v2276
      %v2316 = vpop.f32.mrf.mxu0
      %v2317 = vadd.f32 %v2269, %v2316
      %2318 = vmatmul.f32.gmra.mxu0 %v2279
      %v2319 = vpop.f32.mrf.mxu0
      %v2320 = vadd.f32 %v2269, %v2319
      %2321 = vmatmul.f32.gmra.mxu0 %v2282
      %v2322 = vpop.f32.mrf.mxu0
      %v2323 = vadd.f32 %v2269, %v2322
      %2324 = vmatmul.f32.gmra.mxu0 %v2285
      %v2325 = vpop.f32.mrf.mxu0
      %v2326 = vadd.f32 %v2269, %v2325
      %2327 = vmatmul.f32.gmra.mxu0 %v2288
      %v2328 = vpop.f32.mrf.mxu0
      %v2329 = vadd.f32 %v2269, %v2328
      %2330 = vmatmul.f32.gmra.mxu0 %v2291
      %v2331 = vpop.f32.mrf.mxu0
      %v2332 = vadd.f32 %v2269, %v2331
      %2333 = vmatmul.f32.gmra.mxu0 %v2294
      %v2334 = vpop.f32.mrf.mxu0
      %v2335 = vadd.f32 %v2269, %v2334
      %2336 = vdwg.mxu0
      %v2337 = vadd.f32 %v2314, %v384
      %v2338 = vadd.f32 %v2317, %v387
      %v2339 = vadd.f32 %v2320, %v390
      %v2340 = vadd.f32 %v2323, %v393
      %v2341 = vadd.f32 %v2326, %v396
      %v2342 = vadd.f32 %v2329, %v399
      %v2343 = vadd.f32 %v2332, %v402
      %v2344 = vadd.f32 %v2335, %v405
      %v2345 = vmax.f32 %v2337, 0.0
      %v2346 = vmax.f32 %v2338, 0.0
      %v2347 = vmax.f32 %v2339, 0.0
      %v2348 = vmax.f32 %v2340, 0.0
      %v2349 = vmax.f32 %v2341, 0.0
      %v2350 = vmax.f32 %v2342, 0.0
      %v2351 = vmax.f32 %v2343, 0.0
      %v2352 = vmax.f32 %v2344, 0.0
      %2353 = vst [vmem:[%s278] sm:$0xff] %v2345
      %2354 = vst [vmem:[%s278 + $0x8] sm:$0xff] %v2346
      %2355 = vst [vmem:[%s278 + $0x10] sm:$0xff] %v2347
      %2356 = vst [vmem:[%s278 + $0x18] sm:$0xff] %v2348
      %2357 = vst [vmem:[%s278 + $0x20] sm:$0xff] %v2349
      %2358 = vst [vmem:[%s278 + $0x28] sm:$0xff] %v2350
      %2359 = vst [vmem:[%s278 + $0x30] sm:$0xff] %v2351
      %2360 = vst [vmem:[%s278 + $0x38] sm:$0xff] %v2352
      %p2361 = scmp.lt.s32.totalorder %s18, 1
      %s2362 = scalar_select %p2361, %s18, 1
      %s2363 = smul.addr %s2362, 8
      %s2364 = smul.addr %s2363, 8
      %s2365 = scalar_lea.vmem %s7, %s2364
      // Predicated region
      $region49: #{fwd.3} parent=47 // pred_check
        %p2366 = pneg %p188
      $region50: #{fwd.3} parent=47 // pred_check_branch
        %2368 = sbr.rel (%p2366) target = $region52
      $region51: #{fwd.3} parent=47 // pred_region
        _
      $region52: #{fwd.3} parent=47 // pred_fallthru
        _
    $region48: #{fwd.3} parent=5 // pred_fallthru
      _
    %p2369 = scmp.le.s32.totalorder 2, %s13
    // Predicated region
    $region53: #{fwd.3} parent=5 // pred_check
      %p2370 = pneg %p2369
    $region54: #{fwd.3} parent=5 // pred_check_branch
      %2372 = sbr.rel (%p2370) target = $region56
    $region55: #{fwd.3} parent=5 // pred_region
      %s2373 = ssub.s32 %s13, 2
      // Predicated region
      $region57: #{fwd.3} parent=55 // pred_check
        %p2374 = pneg %p194
      $region58: #{fwd.3} parent=55 // pred_check_branch
        %2376 = sbr.rel (%p2374) target = $region60
      $region59: #{fwd.3} parent=55 // pred_region
        %p2377 = scmp.lt.s32.totalorder %s19, 1
        %s2378 = scalar_select %p2377, %s19, 1
        %s2379 = smul.addr %s2378, 8
        %s2380 = smul.addr %s2379, 8
        %s2381 = scalar_lea.vmem %s7, %s2380
      $region60: #{fwd.3} parent=55 // pred_fallthru
        _
    $region56: #{fwd.3} parent=5 // pred_fallthru
      _
  $region6: #{fwd.3} parent=0 // loop_footer
    %s17 = sadd.s32 1, %s13
  $region7: #{fwd.3} parent=0 // loop_footer_branch
    %12 = sbr.rel target = $region3
  $region8: #{fwd.3} parent=0 // loop_exit
    _

</llo_original>
